<compile_context>
chip_gen: v7x
topology: tpu7x:2x2x1
jax: 0.10.0
libtpu: 0.0.40
codegen_flags: <defaults>
</compile_context>

<pallas_src>
import jax
import jax.numpy as jnp
from jax.experimental import pallas as pl
from jax.experimental.pallas import tpu as pltpu


def _round_up(x, m):
    return (x + m - 1) // m * m


def _make_kernel(taps, m_out):
    def kernel(x_ref, w_ref, b_ref, a_ref, o_ref, xs_ref):
        # x_ref : (M_in_pad, C_pad)    bf16  flattened zero-padded NHWC image
        # w_ref : (9, C_pad, O_pad)    bf16  per-tap weight matrices
        # b_ref : (1, O_pad)           f32   bias row (lane-padded)
        # a_ref : (1,)                 f32   PReLU alpha (SMEM)
        # o_ref : (M_out, O_pad)       f32   "wide" output rows (H * (W+2))
        # xs_ref: (M_in_pad, C_pad)    f32   VMEM scratch (staged activations)

        # Stage once (aligned full-block copy, bf16 -> f32 unpack).
        xs_ref[...] = x_ref[...].astype(jnp.float32)

        # 9 row-shifted matmuls accumulated in f32 on the MXU (bf16 operands).
        acc = jnp.dot(
            xs_ref[pl.ds(taps[0], m_out), :].astype(jnp.bfloat16),
            w_ref[0],
            preferred_element_type=jnp.float32,
        )
        for t in range(1, len(taps)):
            acc = acc + jnp.dot(
                xs_ref[pl.ds(taps[t], m_out), :].astype(jnp.bfloat16),
                w_ref[t],
                preferred_element_type=jnp.float32,
            )

        acc = acc + b_ref[...]
        alpha = a_ref[0]
        o_ref[...] = jnp.where(acc > 0, acc, alpha * acc).astype(o_ref.dtype)

    return kernel


def conv_block_forward(x, weight, bias, alpha):
    """PReLU(Conv2d(x; 3x3, stride 1, pad 1) + bias).  NCHW in / NCHW out."""
    N, C, H, W = x.shape
    O, C_in, KH, KW = weight.shape
    assert (KH, KW) == (3, 3) and C_in == C

    Wp = W + 2
    m_out = H * Wp                      # output rows per image (incl. 2 junk cols/row)
    taps = tuple(dh * Wp + dw for dh in range(KH) for dw in range(KW))
    m_in = (H + 2) * Wp
    # Extra zero rows so the largest shifted read stays in-bounds; multiple of 16.
    m_in_pad = _round_up(m_out + taps[-1], 16)
    c_pad = _round_up(C, 16)            # bf16 sublane packing
    o_pad = _round_up(O, 128)           # lane-dense output / full MXU result lanes

    # ---- wrapper-side layout plumbing (no 9x patch blowup) ----
    x_nhwc = jnp.transpose(x, (0, 2, 3, 1))                          # (N,H,W,C)
    xp = jnp.pad(x_nhwc, ((0, 0), (1, 1), (1, 1), (0, c_pad - C)))   # (N,H+2,W+2,Cp)
    xf = xp.reshape(N, m_in, c_pad)
    xf = jnp.pad(xf, ((0, 0), (0, m_in_pad - m_in), (0, 0)))
    xf = xf.astype(jnp.bfloat16)                                     # (N, Mi, Cp)

    wt = jnp.transpose(weight, (2, 3, 1, 0)).reshape(KH * KW, C, O)  # (9, C, O)
    wt = jnp.pad(wt, ((0, 0), (0, c_pad - C), (0, o_pad - O)))
    wt = wt.astype(jnp.bfloat16)                                     # (9, Cp, Op)

    b_row = jnp.pad(bias.astype(jnp.float32), (0, o_pad - O)).reshape(1, o_pad)
    a_vec = jnp.asarray(alpha, jnp.float32).reshape(1)

    kernel = _make_kernel(taps, m_out)

    flops = 2 * N * m_out * c_pad * o_pad * len(taps)
    bytes_accessed = (xf.size * 2 + wt.size * 2 + b_row.size * 4
                      + N * m_out * o_pad * 4)

    out_wide = pl.pallas_call(
        kernel,
        out_shape=jax.ShapeDtypeStruct((N, m_out, o_pad), jnp.float32),
        grid_spec=pltpu.PrefetchScalarGridSpec(
            num_scalar_prefetch=0,
            grid=(N,),
            in_specs=[
                pl.BlockSpec((None, m_in_pad, c_pad), lambda n: (n, 0, 0)),
                pl.BlockSpec((KH * KW, c_pad, o_pad), lambda n: (0, 0, 0)),
                pl.BlockSpec((1, o_pad), lambda n: (0, 0)),
                pl.BlockSpec(memory_space=pltpu.MemorySpace.SMEM),
            ],
            out_specs=pl.BlockSpec((None, m_out, o_pad), lambda n: (n, 0, 0)),
            scratch_shapes=[pltpu.VMEM((m_in_pad, c_pad), jnp.float32)],
        ),
        compiler_params=pltpu.CompilerParams(
            dimension_semantics=("parallel",),
            vmem_limit_bytes=32 * 1024 * 1024,
        ),
        cost_estimate=pl.CostEstimate(
            flops=flops, transcendentals=0, bytes_accessed=bytes_accessed),
    )(xf, wt, b_row, a_vec)

    # (N, H*(W+2), O_pad) -> drop junk columns / padded lanes -> NCHW
    out = out_wide.reshape(N, H, Wp, o_pad)[:, :, :W, :O]
    return jnp.transpose(out, (0, 3, 1, 2))


if __name__ == "__main__":
    key = jax.random.PRNGKey(0)
    kx, kw, kb = jax.random.split(key, 3)

    # Small shapes consistent with the module: batch=2, in_ch=4, out_ch=8, 16x16
    N, C, O, H, W = 2, 4, 8, 16, 16
    K = 3

    x = jax.random.normal(kx, (N, C, H, W), dtype=jnp.float32)

    # Deterministic PyTorch-like init: uniform(-1/sqrt(fan_in), 1/sqrt(fan_in))
    fan_in = C * K * K
    bound = 1.0 / (fan_in ** 0.5)
    weight = jax.random.uniform(kw, (O, C, K, K), jnp.float32, -bound, bound)
    bias = jax.random.uniform(kb, (O,), jnp.float32, -bound, bound)
    alpha = jnp.float32(0.25)  # PyTorch PReLU default init

    out = conv_block_forward(x, weight, bias, alpha)
    out = jax.block_until_ready(out)

    # Pure-JAX reference with the same bf16 input/weight rounding, f32 accumulation.
    ref = jax.lax.conv_general_dilated(
        x.astype(jnp.bfloat16), weight.astype(jnp.bfloat16),
        window_strides=(1, 1), padding=((1, 1), (1, 1)),
        dimension_numbers=("NCHW", "OIHW", "NCHW"),
        preferred_element_type=jnp.float32,
    ) + bias.reshape(1, O, 1, 1)
    ref = jnp.where(ref > 0, ref, alpha * ref)

    assert out.shape == (N, O, H, W)
    assert jnp.allclose(out, ref, atol=2e-3, rtol=2e-3), "mismatch vs reference"
    print("KERNEL_OK")
</pallas_src>

<mosaic_0001>
module attributes {stable_mosaic.version = 11 : i64} {
  func.func @kernel(%arg0: i32, %arg1: memref<1x336x16xbf16, #tpu.memory_space<vmem>>, %arg2: memref<9x16x128xbf16, #tpu.memory_space<vmem>>, %arg3: memref<1x128xf32, #tpu.memory_space<vmem>>, %arg4: memref<1xf32, #tpu.memory_space<smem>>, %arg5: memref<1x288x128xf32, #tpu.memory_space<vmem>>, %arg6: memref<336x16xf32, #tpu.memory_space<vmem>>) attributes {dimension_semantics = [#tpu.dimension_semantics<parallel>], iteration_bounds = array<i64: 2>, scalar_prefetch = 0 : i64, scratch_operands = 1 : i64, tpu.core_type = #tpu.core_type<tc>, window_params = [{transform_indices = @transform_0, window_bounds = array<i64: 1, 336, 16>}, {pipeline_mode = #tpu.pipeline_mode<synchronous>, transform_indices = @transform_1, window_bounds = array<i64: 9, 16, 128>}, {pipeline_mode = #tpu.pipeline_mode<synchronous>, transform_indices = @transform_2, window_bounds = array<i64: 1, 128>}, {transform_indices = @transform_3, window_bounds = array<i64: 1>}, {transform_indices = @transform_4, window_bounds = array<i64: 1, 288, 128>}]} {
    %c0 = arith.constant 0 : index
    %c0_0 = arith.constant 0 : index
    %c0_1 = arith.constant 0 : index
    %0 = vector.load %arg1[%c0, %c0_0, %c0_1] : memref<1x336x16xbf16, #tpu.memory_space<vmem>>, vector<1x336x16xbf16>
    %1 = vector.shape_cast %0 : vector<1x336x16xbf16> to vector<336x16xbf16>
    %2 = arith.extf %1 : vector<336x16xbf16> to vector<336x16xf32>
    %c0_2 = arith.constant 0 : index
    %c0_3 = arith.constant 0 : index
    %3 = vector.load %arg6[%c0_2, %c0_3] : memref<336x16xf32, #tpu.memory_space<vmem>>, vector<336x16xf32>
    tpu.vector_store %arg6[%c0_2, %c0_3], %2 {strides = array<i32>} : memref<336x16xf32, #tpu.memory_space<vmem>>, vector<336x16xf32>,
    %c0_4 = arith.constant 0 : index
    %c0_5 = arith.constant 0 : index
    %4 = vector.load %arg6[%c0_4, %c0_5] : memref<336x16xf32, #tpu.memory_space<vmem>>, vector<288x16xf32>
    %5 = arith.truncf %4 : vector<288x16xf32> to vector<288x16xbf16>
    %c0_6 = arith.constant 0 : index
    %c0_7 = arith.constant 0 : index
    %c0_8 = arith.constant 0 : index
    %6 = vector.load %arg2[%c0_6, %c0_7, %c0_8] : memref<9x16x128xbf16, #tpu.memory_space<vmem>>, vector<1x16x128xbf16>
    %7 = vector.shape_cast %6 : vector<1x16x128xbf16> to vector<16x128xbf16>
    %cst = arith.constant dense<0.000000e+00> : vector<288x128xf32>
    %8 = tpu.matmul %5, %7, %cst {dimension_numbers = #tpu.dot_dimension_numbers<[1], [0], [0], [1], [0, 0, 1, 1], [], []>} : vector<288x16xbf16>, vector<16x128xbf16>, vector<288x128xf32> -> vector<288x128xf32>
    %c1 = arith.constant 1 : index
    %c0_9 = arith.constant 0 : index
    %9 = vector.load %arg6[%c1, %c0_9] : memref<336x16xf32, #tpu.memory_space<vmem>>, vector<288x16xf32>
    %10 = arith.truncf %9 : vector<288x16xf32> to vector<288x16xbf16>
    %c1_10 = arith.constant 1 : index
    %c0_11 = arith.constant 0 : index
    %c0_12 = arith.constant 0 : index
    %11 = vector.load %arg2[%c1_10, %c0_11, %c0_12] : memref<9x16x128xbf16, #tpu.memory_space<vmem>>, vector<1x16x128xbf16>
    %12 = vector.shape_cast %11 : vector<1x16x128xbf16> to vector<16x128xbf16>
    %cst_13 = arith.constant dense<0.000000e+00> : vector<288x128xf32>
    %13 = tpu.matmul %10, %12, %cst_13 {dimension_numbers = #tpu.dot_dimension_numbers<[1], [0], [0], [1], [0, 0, 1, 1], [], []>} : vector<288x16xbf16>, vector<16x128xbf16>, vector<288x128xf32> -> vector<288x128xf32>
    %14 = arith.addf %8, %13 : vector<288x128xf32>
    %c2 = arith.constant 2 : index
    %c0_14 = arith.constant 0 : index
    %15 = vector.load %arg6[%c2, %c0_14] : memref<336x16xf32, #tpu.memory_space<vmem>>, vector<288x16xf32>
    %16 = arith.truncf %15 : vector<288x16xf32> to vector<288x16xbf16>
    %c2_15 = arith.constant 2 : index
    %c0_16 = arith.constant 0 : index
    %c0_17 = arith.constant 0 : index
    %17 = vector.load %arg2[%c2_15, %c0_16, %c0_17] : memref<9x16x128xbf16, #tpu.memory_space<vmem>>, vector<1x16x128xbf16>
    %18 = vector.shape_cast %17 : vector<1x16x128xbf16> to vector<16x128xbf16>
    %cst_18 = arith.constant dense<0.000000e+00> : vector<288x128xf32>
    %19 = tpu.matmul %16, %18, %cst_18 {dimension_numbers = #tpu.dot_dimension_numbers<[1], [0], [0], [1], [0, 0, 1, 1], [], []>} : vector<288x16xbf16>, vector<16x128xbf16>, vector<288x128xf32> -> vector<288x128xf32>
    %20 = arith.addf %14, %19 : vector<288x128xf32>
    %c18 = arith.constant 18 : index
    %c0_19 = arith.constant 0 : index
    %21 = vector.load %arg6[%c18, %c0_19] : memref<336x16xf32, #tpu.memory_space<vmem>>, vector<288x16xf32>
    %22 = arith.truncf %21 : vector<288x16xf32> to vector<288x16xbf16>
    %c3 = arith.constant 3 : index
    %c0_20 = arith.constant 0 : index
    %c0_21 = arith.constant 0 : index
    %23 = vector.load %arg2[%c3, %c0_20, %c0_21] : memref<9x16x128xbf16, #tpu.memory_space<vmem>>, vector<1x16x128xbf16>
    %24 = vector.shape_cast %23 : vector<1x16x128xbf16> to vector<16x128xbf16>
    %cst_22 = arith.constant dense<0.000000e+00> : vector<288x128xf32>
    %25 = tpu.matmul %22, %24, %cst_22 {dimension_numbers = #tpu.dot_dimension_numbers<[1], [0], [0], [1], [0, 0, 1, 1], [], []>} : vector<288x16xbf16>, vector<16x128xbf16>, vector<288x128xf32> -> vector<288x128xf32>
    %26 = arith.addf %20, %25 : vector<288x128xf32>
    %c19 = arith.constant 19 : index
    %c0_23 = arith.constant 0 : index
    %27 = vector.load %arg6[%c19, %c0_23] : memref<336x16xf32, #tpu.memory_space<vmem>>, vector<288x16xf32>
    %28 = arith.truncf %27 : vector<288x16xf32> to vector<288x16xbf16>
    %c4 = arith.constant 4 : index
    %c0_24 = arith.constant 0 : index
    %c0_25 = arith.constant 0 : index
    %29 = vector.load %arg2[%c4, %c0_24, %c0_25] : memref<9x16x128xbf16, #tpu.memory_space<vmem>>, vector<1x16x128xbf16>
    %30 = vector.shape_cast %29 : vector<1x16x128xbf16> to vector<16x128xbf16>
    %cst_26 = arith.constant dense<0.000000e+00> : vector<288x128xf32>
    %31 = tpu.matmul %28, %30, %cst_26 {dimension_numbers = #tpu.dot_dimension_numbers<[1], [0], [0], [1], [0, 0, 1, 1], [], []>} : vector<288x16xbf16>, vector<16x128xbf16>, vector<288x128xf32> -> vector<288x128xf32>
    %32 = arith.addf %26, %31 : vector<288x128xf32>
    %c20 = arith.constant 20 : index
    %c0_27 = arith.constant 0 : index
    %33 = vector.load %arg6[%c20, %c0_27] : memref<336x16xf32, #tpu.memory_space<vmem>>, vector<288x16xf32>
    %34 = arith.truncf %33 : vector<288x16xf32> to vector<288x16xbf16>
    %c5 = arith.constant 5 : index
    %c0_28 = arith.constant 0 : index
    %c0_29 = arith.constant 0 : index
    %35 = vector.load %arg2[%c5, %c0_28, %c0_29] : memref<9x16x128xbf16, #tpu.memory_space<vmem>>, vector<1x16x128xbf16>
    %36 = vector.shape_cast %35 : vector<1x16x128xbf16> to vector<16x128xbf16>
    %cst_30 = arith.constant dense<0.000000e+00> : vector<288x128xf32>
    %37 = tpu.matmul %34, %36, %cst_30 {dimension_numbers = #tpu.dot_dimension_numbers<[1], [0], [0], [1], [0, 0, 1, 1], [], []>} : vector<288x16xbf16>, vector<16x128xbf16>, vector<288x128xf32> -> vector<288x128xf32>
    %38 = arith.addf %32, %37 : vector<288x128xf32>
    %c36 = arith.constant 36 : index
    %c0_31 = arith.constant 0 : index
    %39 = vector.load %arg6[%c36, %c0_31] : memref<336x16xf32, #tpu.memory_space<vmem>>, vector<288x16xf32>
    %40 = arith.truncf %39 : vector<288x16xf32> to vector<288x16xbf16>
    %c6 = arith.constant 6 : index
    %c0_32 = arith.constant 0 : index
    %c0_33 = arith.constant 0 : index
    %41 = vector.load %arg2[%c6, %c0_32, %c0_33] : memref<9x16x128xbf16, #tpu.memory_space<vmem>>, vector<1x16x128xbf16>
    %42 = vector.shape_cast %41 : vector<1x16x128xbf16> to vector<16x128xbf16>
    %cst_34 = arith.constant dense<0.000000e+00> : vector<288x128xf32>
    %43 = tpu.matmul %40, %42, %cst_34 {dimension_numbers = #tpu.dot_dimension_numbers<[1], [0], [0], [1], [0, 0, 1, 1], [], []>} : vector<288x16xbf16>, vector<16x128xbf16>, vector<288x128xf32> -> vector<288x128xf32>
    %44 = arith.addf %38, %43 : vector<288x128xf32>
    %c37 = arith.constant 37 : index
    %c0_35 = arith.constant 0 : index
    %45 = vector.load %arg6[%c37, %c0_35] : memref<336x16xf32, #tpu.memory_space<vmem>>, vector<288x16xf32>
    %46 = arith.truncf %45 : vector<288x16xf32> to vector<288x16xbf16>
    %c7 = arith.constant 7 : index
    %c0_36 = arith.constant 0 : index
    %c0_37 = arith.constant 0 : index
    %47 = vector.load %arg2[%c7, %c0_36, %c0_37] : memref<9x16x128xbf16, #tpu.memory_space<vmem>>, vector<1x16x128xbf16>
    %48 = vector.shape_cast %47 : vector<1x16x128xbf16> to vector<16x128xbf16>
    %cst_38 = arith.constant dense<0.000000e+00> : vector<288x128xf32>
    %49 = tpu.matmul %46, %48, %cst_38 {dimension_numbers = #tpu.dot_dimension_numbers<[1], [0], [0], [1], [0, 0, 1, 1], [], []>} : vector<288x16xbf16>, vector<16x128xbf16>, vector<288x128xf32> -> vector<288x128xf32>
    %50 = arith.addf %44, %49 : vector<288x128xf32>
    %c38 = arith.constant 38 : index
    %c0_39 = arith.constant 0 : index
    %51 = vector.load %arg6[%c38, %c0_39] : memref<336x16xf32, #tpu.memory_space<vmem>>, vector<288x16xf32>
    %52 = arith.truncf %51 : vector<288x16xf32> to vector<288x16xbf16>
    %c8 = arith.constant 8 : index
    %c0_40 = arith.constant 0 : index
    %c0_41 = arith.constant 0 : index
    %53 = vector.load %arg2[%c8, %c0_40, %c0_41] : memref<9x16x128xbf16, #tpu.memory_space<vmem>>, vector<1x16x128xbf16>
    %54 = vector.shape_cast %53 : vector<1x16x128xbf16> to vector<16x128xbf16>
    %cst_42 = arith.constant dense<0.000000e+00> : vector<288x128xf32>
    %55 = tpu.matmul %52, %54, %cst_42 {dimension_numbers = #tpu.dot_dimension_numbers<[1], [0], [0], [1], [0, 0, 1, 1], [], []>} : vector<288x16xbf16>, vector<16x128xbf16>, vector<288x128xf32> -> vector<288x128xf32>
    %56 = arith.addf %50, %55 : vector<288x128xf32>
    %c0_43 = arith.constant 0 : index
    %c0_44 = arith.constant 0 : index
    %57 = vector.load %arg3[%c0_43, %c0_44] : memref<1x128xf32, #tpu.memory_space<vmem>>, vector<1x128xf32>
    %58 = vector.broadcast %57 : vector<1x128xf32> to vector<288x128xf32>
    %59 = arith.addf %56, %58 : vector<288x128xf32>
    %c0_45 = arith.constant 0 : index
    %60 = memref.load %arg4[%c0_45] : memref<1xf32, #tpu.memory_space<smem>>
    %cst_46 = arith.constant 0.000000e+00 : f32
    %61 = vector.broadcast %cst_46 : f32 to vector<288x128xf32>
    %62 = arith.cmpf ogt, %59, %61 : vector<288x128xf32>
    %63 = vector.broadcast %60 : f32 to vector<288x128xf32>
    %64 = arith.mulf %63, %59 : vector<288x128xf32>
    %65 = arith.select %62, %59, %64 : vector<288x128xi1>, vector<288x128xf32>
    %c0_47 = arith.constant 0 : index
    %c0_48 = arith.constant 0 : index
    %c0_49 = arith.constant 0 : index
    %66 = vector.load %arg5[%c0_47, %c0_48, %c0_49] : memref<1x288x128xf32, #tpu.memory_space<vmem>>, vector<1x288x128xf32>
    %67 = vector.shape_cast %66 : vector<1x288x128xf32> to vector<288x128xf32>
    %68 = vector.shape_cast %65 : vector<288x128xf32> to vector<1x288x128xf32>
    tpu.vector_store %arg5[%c0_47, %c0_48, %c0_49], %68 {strides = array<i32>} : memref<1x288x128xf32, #tpu.memory_space<vmem>>, vector<1x288x128xf32>,
    return
  }
  func.func @transform_0(%arg0: i32) -> (i32, i32, i32) {
    %c0_i32 = arith.constant 0 : i32
    %c0_i32_0 = arith.constant 0 : i32
    %c0_i32_1 = arith.constant 0 : i32
    return %arg0, %c0_i32, %c0_i32_0 : i32, i32, i32
  }
  func.func @transform_1(%arg0: i32) -> (i32, i32, i32) {
    %c0_i32 = arith.constant 0 : i32
    %c0_i32_0 = arith.constant 0 : i32
    %c0_i32_1 = arith.constant 0 : i32
    %c0_i32_2 = arith.constant 0 : i32
    return %c0_i32, %c0_i32_0, %c0_i32_1 : i32, i32, i32
  }
  func.func @transform_2(%arg0: i32) -> (i32, i32) {
    %c0_i32 = arith.constant 0 : i32
    %c0_i32_0 = arith.constant 0 : i32
    %c0_i32_1 = arith.constant 0 : i32
    return %c0_i32, %c0_i32_0 : i32, i32
  }
  func.func @transform_3(%arg0: i32) -> i32 {
    %c0_i32 = arith.constant 0 : i32
    %c0_i32_0 = arith.constant 0 : i32
    return %c0_i32 : i32
  }
  func.func @transform_4(%arg0: i32) -> (i32, i32, i32) {
    %c0_i32 = arith.constant 0 : i32
    %c0_i32_0 = arith.constant 0 : i32
    %c0_i32_1 = arith.constant 0 : i32
    return %arg0, %c0_i32, %c0_i32_0 : i32, i32, i32
  }
}

</mosaic_0001>

<llo_original>
// kernel: tpu_custom_call.1
$region0: #{tpu_custom_call.1}
  #allocation0 [shape = 'u32[]', space=smem, size = 0x4, offset = 0x4, fixed_abs, tag = 'smem constant byte address 0x4 - core index']
  #allocation1 [shape = 'u32[144,128]{1,0:T(1,128)}', space=vmem, size = 0x12000, scoped, tag = 'internal scratch']
  #allocation2 [shape = 'f32[336,16]{1,0:T(8,128)}', space=vmem, size = 0x2a000, scoped, tag = 'scratch operand']
  #allocation3 [shape = 'f32[1]{0:T(128)S(6)}', space=smem, size = 0x200, scoped, tag = 'scoped memory for tpu_custom_call.1']
  %s0 = inlined_call_operand.vmem [shape: bf16[2,336,16], index: 0, kind: input, shape index: {}]
  %s1 = inlined_call_operand.vmem [shape: bf16[9,16,128], index: 1, kind: input, shape index: {}]
  %s2 = inlined_call_operand.vmem [shape: f32[1,128], index: 2, kind: input, shape index: {}]
  %s3 = inlined_call_operand.<no memory space> [shape: f32[1], index: 3, kind: input, shape index: {}]
  %s4 = inlined_call_operand.hbm [shape: f32[2,288,128], index: 4, kind: output, shape index: {}]
  %s5 = sld [smem:[#allocation0]]
  $region49: #{tpu_custom_call.1} parent=0
    _
  %s7 = ssub.s32 1, %s5
  %s8 = scalar_select 0, %s7, %s5
  %9 = sst [smem:[#allocation3]] %s3
  $region1: #{tpu_custom_call.1} parent=0
    #allocation4 [shape = 'u8[294912]{0}', space=vmem, size = 0x48000, scoped, tag = 'output window, operand 0']
    #allocation5 [shape = 's32[2]{0}', space=sflag, size = 0x8, scoped, tag = 'scoped memory for tpu_custom_call.1']
    %10 = vsyncpa [#allocation5], 0
    %s11 = scalar_lea.sflag [#allocation5], 1
    %12 = vsyncpa %s11, 0
    loop: start=0, step=1, limit=4
    $region2: #{tpu_custom_call.1} parent=1 // loop_pre_header
      _
    $region3: #{tpu_custom_call.1} parent=1 // loop_header
      %s14 = sphi 0, %s18
      %p15 = scmp.ge.s32.totalorder %s14, 4
      %s24 = sphi 0, %s26
      %s27 = sphi 0, %s24
      %s28 = sphi 0, %s27
      %s44 = sphi 0, %s28
      %s48 = sphi 0, %s48
      %s50 = sphi 0, %s48
      %s51 = sphi 0, %s50
      %s65 = sphi 0, %s51
      %s69 = sphi 0, %s69
      %s71 = sphi 0, %s69
      %s72 = sphi 0, %s71
      %s86 = sphi 0, %s72
      %s90 = sphi 0, %s90
      %s92 = sphi 0, %s90
      %s93 = sphi 0, %s92
      %s107 = sphi 0, %s93
      %s113 = sphi 0, %s115
      %s116 = sphi 0, %s113
      %s117 = sphi 0, %s116
      %s133 = sphi 0, %s117
    $region4: #{tpu_custom_call.1} parent=1 // loop_header_branch
      %17 = sbr.rel (%p15) target = $region8
    $region5: #{tpu_custom_call.1} parent=1 // loop_body
      %s19 = ssub.s32 %s14, 1
      %s20 = ssub.s32 %s14, 2
      %s21 = sadd.s32 %s14, 1
      %s22 = ssub.s32 %s14, %s21
      %p23 = scmp.eq.s32.totalorder %s22, 0
      %s25 = sadd.s32 %s24, 1
      %s26 = scalar_select %p23, %s24, %s25
      %p29 = pneg %p23
      %p30 = scmp.eq.s32.totalorder %s14, 1
      %p31 = por %p29, %p30
      %p32 = scmp.ne.s32.totalorder %s24, %s27
      %p33 = scmp.eq.s32.totalorder %s14, 0
      %p34 = por %p32, %p33
      %p35 = scmp.ne.s32.totalorder %s24, %s27
      %p36 = scmp.eq.s32.totalorder %s19, 1
      %p37 = por %p35, %p36
      %p38 = scmp.ne.s32.totalorder %s27, %s28
      %p39 = scmp.eq.s32.totalorder %s19, 0
      %p40 = por %p38, %p39
      %p41 = scmp.ne.s32.totalorder %s27, %s28
      %p42 = scmp.eq.s32.totalorder %s20, 1
      %p43 = por %p41, %p42
      %p45 = scmp.ne.s32.totalorder %s28, %s44
      %p46 = scmp.eq.s32.totalorder %s20, 0
      %p47 = por %p45, %p46
      %s49 = sadd.s32 %s48, 1
      %p52 = scmp.eq.s32.totalorder %s14, 1
      %p53 = scmp.ne.s32.totalorder %s48, %s50
      %p54 = scmp.eq.s32.totalorder %s14, 0
      %p55 = por %p53, %p54
      %p56 = scmp.ne.s32.totalorder %s48, %s50
      %p57 = scmp.eq.s32.totalorder %s19, 1
      %p58 = por %p56, %p57
      %p59 = scmp.ne.s32.totalorder %s50, %s51
      %p60 = scmp.eq.s32.totalorder %s19, 0
      %p61 = por %p59, %p60
      %p62 = scmp.ne.s32.totalorder %s50, %s51
      %p63 = scmp.eq.s32.totalorder %s20, 1
      %p64 = por %p62, %p63
      %p66 = scmp.ne.s32.totalorder %s51, %s65
      %p67 = scmp.eq.s32.totalorder %s20, 0
      %p68 = por %p66, %p67
      %s70 = sadd.s32 %s69, 1
      %p73 = scmp.eq.s32.totalorder %s14, 1
      %p74 = scmp.ne.s32.totalorder %s69, %s71
      %p75 = scmp.eq.s32.totalorder %s14, 0
      %p76 = por %p74, %p75
      %p77 = scmp.ne.s32.totalorder %s69, %s71
      %p78 = scmp.eq.s32.totalorder %s19, 1
      %p79 = por %p77, %p78
      %p80 = scmp.ne.s32.totalorder %s71, %s72
      %p81 = scmp.eq.s32.totalorder %s19, 0
      %p82 = por %p80, %p81
      %p83 = scmp.ne.s32.totalorder %s71, %s72
      %p84 = scmp.eq.s32.totalorder %s20, 1
      %p85 = por %p83, %p84
      %p87 = scmp.ne.s32.totalorder %s72, %s86
      %p88 = scmp.eq.s32.totalorder %s20, 0
      %p89 = por %p87, %p88
      %s91 = sadd.s32 %s90, 1
      %p94 = scmp.eq.s32.totalorder %s14, 1
      %p95 = scmp.ne.s32.totalorder %s90, %s92
      %p96 = scmp.eq.s32.totalorder %s14, 0
      %p97 = por %p95, %p96
      %p98 = scmp.ne.s32.totalorder %s90, %s92
      %p99 = scmp.eq.s32.totalorder %s19, 1
      %p100 = por %p98, %p99
      %p101 = scmp.ne.s32.totalorder %s92, %s93
      %p102 = scmp.eq.s32.totalorder %s19, 0
      %p103 = por %p101, %p102
      %p104 = scmp.ne.s32.totalorder %s92, %s93
      %p105 = scmp.eq.s32.totalorder %s20, 1
      %p106 = por %p104, %p105
      %p108 = scmp.ne.s32.totalorder %s93, %s107
      %p109 = scmp.eq.s32.totalorder %s20, 0
      %p110 = por %p108, %p109
      %s111 = ssub.s32 %s14, %s21
      %p112 = scmp.eq.s32.totalorder %s111, 0
      %s114 = sadd.s32 %s113, 1
      %s115 = scalar_select %p112, %s113, %s114
      %p118 = pneg %p112
      %p119 = scmp.eq.s32.totalorder %s14, 1
      %p120 = por %p118, %p119
      %p121 = scmp.ne.s32.totalorder %s113, %s116
      %p122 = scmp.eq.s32.totalorder %s14, 0
      %p123 = por %p121, %p122
      %p124 = scmp.ne.s32.totalorder %s113, %s116
      %p125 = scmp.eq.s32.totalorder %s19, 1
      %p126 = por %p124, %p125
      %p127 = scmp.ne.s32.totalorder %s116, %s117
      %p128 = scmp.eq.s32.totalorder %s19, 0
      %p129 = por %p127, %p128
      %p130 = scmp.ne.s32.totalorder %s116, %s117
      %p131 = scmp.eq.s32.totalorder %s20, 1
      %p132 = por %p130, %p131
      %p134 = scmp.ne.s32.totalorder %s117, %s133
      %p135 = scmp.eq.s32.totalorder %s20, 0
      %p136 = por %p134, %p135
      %p137 = scmp.le.s32.totalorder 1, %s14
      %p138 = scmp.lt.s32.totalorder %s14, 3
      %p139 = pnand %p137, %p138
      %p140 = pneg %p139
      // Predicated region
      $region9: #{tpu_custom_call.1} parent=5 // pred_check
        _
      $region10: #{tpu_custom_call.1} parent=5 // pred_check_branch
        %142 = sbr.rel (%p139) target = $region12
      $region11: #{tpu_custom_call.1} parent=5 // pred_region
        %s143 = ssub.s32 %s14, 1
        // Predicated region
        $region13: #{tpu_custom_call.1} parent=11 // pred_check
          %p144 = pneg %p61
        $region14: #{tpu_custom_call.1} parent=11 // pred_check_branch
          %146 = sbr.rel (%p144) target = $region16
        $region15: #{tpu_custom_call.1} parent=11 // pred_region
          _
        $region16: #{tpu_custom_call.1} parent=11 // pred_fallthru
          _
        // Predicated region
        $region17: #{tpu_custom_call.1} parent=11 // pred_check
          %p147 = pneg %p82
        $region18: #{tpu_custom_call.1} parent=11 // pred_check_branch
          %149 = sbr.rel (%p147) target = $region20
        $region19: #{tpu_custom_call.1} parent=11 // pred_region
          _
        $region20: #{tpu_custom_call.1} parent=11 // pred_fallthru
          _
        // Predicated region
        $region21: #{tpu_custom_call.1} parent=11 // pred_check
          %p150 = pneg %p103
        $region22: #{tpu_custom_call.1} parent=11 // pred_check_branch
          %152 = sbr.rel (%p150) target = $region24
        $region23: #{tpu_custom_call.1} parent=11 // pred_region
          _
        $region24: #{tpu_custom_call.1} parent=11 // pred_fallthru
          _
      $region12: #{tpu_custom_call.1} parent=5 // pred_fallthru
        _
      %p153 = scmp.lt.s32.totalorder %s14, 2
      // Predicated region
      $region25: #{tpu_custom_call.1} parent=5 // pred_check
        %p154 = pneg %p153
      $region26: #{tpu_custom_call.1} parent=5 // pred_check_branch
        %156 = sbr.rel (%p154) target = $region28
      $region27: #{tpu_custom_call.1} parent=5 // pred_region
        // Predicated region
        $region29: #{tpu_custom_call.1} parent=27 // pred_check
          %p157 = pneg %p34
        $region30: #{tpu_custom_call.1} parent=27 // pred_check_branch
          %159 = sbr.rel (%p157) target = $region32
        $region31: #{tpu_custom_call.1} parent=27 // pred_region
          %p160 = scmp.lt.s32.totalorder %s14, 1
          %s161 = scalar_select %p160, %s14, 1
          %s162 = smul.addr %s161, 42
          %s163 = smul.addr %s162, 4
          %s164 = scalar_lea.vmem %s0, %s163
        $region32: #{tpu_custom_call.1} parent=27 // pred_fallthru
          _
      $region28: #{tpu_custom_call.1} parent=5 // pred_fallthru
        _
      %p165 = scmp.le.s32.totalorder 1, %s14
      %p166 = scmp.lt.s32.totalorder %s14, 3
      %p167 = pnand %p165, %p166
      %p168 = pneg %p167
      // Predicated region
      $region33: #{tpu_custom_call.1} parent=5 // pred_check
        _
      $region34: #{tpu_custom_call.1} parent=5 // pred_check_branch
        %170 = sbr.rel (%p167) target = $region36
      $region35: #{tpu_custom_call.1} parent=5 // pred_region
        %s171 = ssub.s32 %s14, 1
        %p172 = scmp.lt.s32.totalorder %s19, 1
        %s173 = scalar_select %p172, %s19, 1
        %s174 = smul.addr %s173, 42
        %s175 = smul.addr %s174, 4
        %s176 = scalar_lea.vmem %s0, %s175
        %p177 = pneg %p40
        %p178 = pneg %p37
        %p179 = pneg %p61
        %p180 = pneg %p58
        %p181 = pneg %p82
        %p182 = pneg %p79
        %p183 = pneg %p103
        %p184 = pneg %p100
        %p185 = pneg %p129
        %p186 = pneg %p126
        %s187 = sand.u32 %s116, 1
        %s188 = scalar_lea.sflag [#allocation5], %s187
        %s189 = sand.u32 %s116, 1
        %s190 = smul.addr %s189, 288
        %s191 = scalar_lea.vmem [#allocation4], %s190
        %p192 = scmp.lt.s32.totalorder %s19, 1
        %s193 = scalar_select %p192, %s19, 1
        %s194 = smul.addr %s193, 42
        %s195 = smul.addr %s194, 4
        %s196 = scalar_lea.vmem %s0, %s195
        %v198 = vld [vmem:[%s196] sm:$0xf]
        %v199 = vld [vmem:[%s196 + $0x4] sm:$0xf]
        %v200 = vld [vmem:[%s196 + $0x8] sm:$0xf]
        %v201 = vld [vmem:[%s196 + $0xc] sm:$0xf]
        %v202 = vld [vmem:[%s196 + $0x10] sm:$0xf]
        %v203 = vld [vmem:[%s196 + $0x14] sm:$0xf]
        %v204 = vld [vmem:[%s196 + $0x18] sm:$0xf]
        %v205 = vld [vmem:[%s196 + $0x1c] sm:$0xf]
        %v206 = vld [vmem:[%s196 + $0x20] sm:$0xf]
        %v207 = vld [vmem:[%s196 + $0x24] sm:$0xf]
        %v208 = vld [vmem:[%s196 + $0x28] sm:$0xf]
        %v209 = vld [vmem:[%s196 + $0x2c] sm:$0xf]
        %v210 = vld [vmem:[%s196 + $0x30] sm:$0xf]
        %v211 = vld [vmem:[%s196 + $0x34] sm:$0xf]
        %v212 = vld [vmem:[%s196 + $0x38] sm:$0xf]
        %v213 = vld [vmem:[%s196 + $0x3c] sm:$0xf]
        %v214 = vld [vmem:[%s196 + $0x40] sm:$0xf]
        %v215 = vld [vmem:[%s196 + $0x44] sm:$0xf]
        %v216 = vld [vmem:[%s196 + $0x48] sm:$0xf]
        %v217 = vld [vmem:[%s196 + $0x4c] sm:$0xf]
        %v218 = vld [vmem:[%s196 + $0x50] sm:$0xf]
        %v219 = vld [vmem:[%s196 + $0x54] sm:$0xf]
        %v220 = vld [vmem:[%s196 + $0x58] sm:$0xf]
        %v221 = vld [vmem:[%s196 + $0x5c] sm:$0xf]
        %v222 = vld [vmem:[%s196 + $0x60] sm:$0xf]
        %v223 = vld [vmem:[%s196 + $0x64] sm:$0xf]
        %v224 = vld [vmem:[%s196 + $0x68] sm:$0xf]
        %v225 = vld [vmem:[%s196 + $0x6c] sm:$0xf]
        %v226 = vld [vmem:[%s196 + $0x70] sm:$0xf]
        %v227 = vld [vmem:[%s196 + $0x74] sm:$0xf]
        %v228 = vld [vmem:[%s196 + $0x78] sm:$0xf]
        %v229 = vld [vmem:[%s196 + $0x7c] sm:$0xf]
        %v230 = vld [vmem:[%s196 + $0x80] sm:$0xf]
        %v231 = vld [vmem:[%s196 + $0x84] sm:$0xf]
        %v232 = vld [vmem:[%s196 + $0x88] sm:$0xf]
        %v233 = vld [vmem:[%s196 + $0x8c] sm:$0xf]
        %v234 = vld [vmem:[%s196 + $0x90] sm:$0xf]
        %v235 = vld [vmem:[%s196 + $0x94] sm:$0xf]
        %v236 = vld [vmem:[%s196 + $0x98] sm:$0xf]
        %v237 = vld [vmem:[%s196 + $0x9c] sm:$0xf]
        %v238 = vld [vmem:[%s196 + $0xa0] sm:$0xf]
        %v239 = vld [vmem:[%s196 + $0xa4] sm:$0xf]
        %v240 = vunpack.c.l.bf16 %v198
        %v241 = vunpack.c.l.bf16 %v199
        %v242 = vunpack.c.l.bf16 %v200
        %v243 = vunpack.c.l.bf16 %v201
        %v244 = vunpack.c.l.bf16 %v202
        %v245 = vunpack.c.l.bf16 %v203
        %v246 = vunpack.c.l.bf16 %v204
        %v247 = vunpack.c.l.bf16 %v205
        %v248 = vunpack.c.l.bf16 %v206
        %v249 = vunpack.c.l.bf16 %v207
        %v250 = vunpack.c.l.bf16 %v208
        %v251 = vunpack.c.l.bf16 %v209
        %v252 = vunpack.c.l.bf16 %v210
        %v253 = vunpack.c.l.bf16 %v211
        %v254 = vunpack.c.l.bf16 %v212
        %v255 = vunpack.c.l.bf16 %v213
        %v256 = vunpack.c.l.bf16 %v214
        %v257 = vunpack.c.l.bf16 %v215
        %v258 = vunpack.c.l.bf16 %v216
        %v259 = vunpack.c.l.bf16 %v217
        %v260 = vunpack.c.l.bf16 %v218
        %v261 = vunpack.c.l.bf16 %v219
        %v262 = vunpack.c.l.bf16 %v220
        %v263 = vunpack.c.l.bf16 %v221
        %v264 = vunpack.c.l.bf16 %v222
        %v265 = vunpack.c.l.bf16 %v223
        %v266 = vunpack.c.l.bf16 %v224
        %v267 = vunpack.c.l.bf16 %v225
        %v268 = vunpack.c.l.bf16 %v226
        %v269 = vunpack.c.l.bf16 %v227
        %v270 = vunpack.c.l.bf16 %v228
        %v271 = vunpack.c.l.bf16 %v229
        %v272 = vunpack.c.l.bf16 %v230
        %v273 = vunpack.c.l.bf16 %v231
        %v274 = vunpack.c.l.bf16 %v232
        %v275 = vunpack.c.l.bf16 %v233
        %v276 = vunpack.c.l.bf16 %v234
        %v277 = vunpack.c.l.bf16 %v235
        %v278 = vunpack.c.l.bf16 %v236
        %v279 = vunpack.c.l.bf16 %v237
        %v280 = vunpack.c.l.bf16 %v238
        %v281 = vunpack.c.l.bf16 %v239
        %vm282 = vcmask 130048
        %283 = vst.msk [vmem:[#allocation2] sm:$0xff] %vm282, %v240
        %284 = vst.msk [vmem:[#allocation2 + $0x8] sm:$0xff] %vm282, %v241
        %285 = vst.msk [vmem:[#allocation2 + $0x10] sm:$0xff] %vm282, %v242
        %286 = vst.msk [vmem:[#allocation2 + $0x18] sm:$0xff] %vm282, %v243
        %287 = vst.msk [vmem:[#allocation2 + $0x20] sm:$0xff] %vm282, %v244
        %288 = vst.msk [vmem:[#allocation2 + $0x28] sm:$0xff] %vm282, %v245
        %289 = vst.msk [vmem:[#allocation2 + $0x30] sm:$0xff] %vm282, %v246
        %290 = vst.msk [vmem:[#allocation2 + $0x38] sm:$0xff] %vm282, %v247
        %291 = vst.msk [vmem:[#allocation2 + $0x40] sm:$0xff] %vm282, %v248
        %292 = vst.msk [vmem:[#allocation2 + $0x48] sm:$0xff] %vm282, %v249
        %293 = vst.msk [vmem:[#allocation2 + $0x50] sm:$0xff] %vm282, %v250
        %294 = vst.msk [vmem:[#allocation2 + $0x58] sm:$0xff] %vm282, %v251
        %295 = vst.msk [vmem:[#allocation2 + $0x60] sm:$0xff] %vm282, %v252
        %296 = vst.msk [vmem:[#allocation2 + $0x68] sm:$0xff] %vm282, %v253
        %297 = vst.msk [vmem:[#allocation2 + $0x70] sm:$0xff] %vm282, %v254
        %298 = vst.msk [vmem:[#allocation2 + $0x78] sm:$0xff] %vm282, %v255
        %299 = vst.msk [vmem:[#allocation2 + $0x80] sm:$0xff] %vm282, %v256
        %300 = vst.msk [vmem:[#allocation2 + $0x88] sm:$0xff] %vm282, %v257
        %301 = vst.msk [vmem:[#allocation2 + $0x90] sm:$0xff] %vm282, %v258
        %302 = vst.msk [vmem:[#allocation2 + $0x98] sm:$0xff] %vm282, %v259
        %303 = vst.msk [vmem:[#allocation2 + $0xa0] sm:$0xff] %vm282, %v260
        %304 = vst.msk [vmem:[#allocation2 + $0xa8] sm:$0xff] %vm282, %v261
        %305 = vst.msk [vmem:[#allocation2 + $0xb0] sm:$0xff] %vm282, %v262
        %306 = vst.msk [vmem:[#allocation2 + $0xb8] sm:$0xff] %vm282, %v263
        %307 = vst.msk [vmem:[#allocation2 + $0xc0] sm:$0xff] %vm282, %v264
        %308 = vst.msk [vmem:[#allocation2 + $0xc8] sm:$0xff] %vm282, %v265
        %309 = vst.msk [vmem:[#allocation2 + $0xd0] sm:$0xff] %vm282, %v266
        %310 = vst.msk [vmem:[#allocation2 + $0xd8] sm:$0xff] %vm282, %v267
        %311 = vst.msk [vmem:[#allocation2 + $0xe0] sm:$0xff] %vm282, %v268
        %312 = vst.msk [vmem:[#allocation2 + $0xe8] sm:$0xff] %vm282, %v269
        %313 = vst.msk [vmem:[#allocation2 + $0xf0] sm:$0xff] %vm282, %v270
        %314 = vst.msk [vmem:[#allocation2 + $0xf8] sm:$0xff] %vm282, %v271
        %315 = vst.msk [vmem:[#allocation2 + $0x100] sm:$0xff] %vm282, %v272
        %316 = vst.msk [vmem:[#allocation2 + $0x108] sm:$0xff] %vm282, %v273
        %317 = vst.msk [vmem:[#allocation2 + $0x110] sm:$0xff] %vm282, %v274
        %318 = vst.msk [vmem:[#allocation2 + $0x118] sm:$0xff] %vm282, %v275
        %319 = vst.msk [vmem:[#allocation2 + $0x120] sm:$0xff] %vm282, %v276
        %320 = vst.msk [vmem:[#allocation2 + $0x128] sm:$0xff] %vm282, %v277
        %321 = vst.msk [vmem:[#allocation2 + $0x130] sm:$0xff] %vm282, %v278
        %322 = vst.msk [vmem:[#allocation2 + $0x138] sm:$0xff] %vm282, %v279
        %323 = vst.msk [vmem:[#allocation2 + $0x140] sm:$0xff] %vm282, %v280
        %324 = vst.msk [vmem:[#allocation2 + $0x148] sm:$0xff] %vm282, %v281
        %v325 = vld [vmem:[#allocation2] sm:$0xff]
        %v326 = vld [vmem:[#allocation2 + $0x8] sm:$0xff]
        %v327 = vld [vmem:[#allocation2 + $0x10] sm:$0xff]
        %v328 = vld [vmem:[#allocation2 + $0x18] sm:$0xff]
        %v329 = vld [vmem:[#allocation2 + $0x20] sm:$0xff]
        %v330 = vld [vmem:[#allocation2 + $0x28] sm:$0xff]
        %v331 = vld [vmem:[#allocation2 + $0x30] sm:$0xff]
        %v332 = vld [vmem:[#allocation2 + $0x38] sm:$0xff]
        %v333 = vld [vmem:[#allocation2 + $0x40] sm:$0xff]
        %v334 = vld [vmem:[#allocation2 + $0x48] sm:$0xff]
        %v335 = vld [vmem:[#allocation2 + $0x50] sm:$0xff]
        %v336 = vld [vmem:[#allocation2 + $0x58] sm:$0xff]
        %v337 = vld [vmem:[#allocation2 + $0x60] sm:$0xff]
        %v338 = vld [vmem:[#allocation2 + $0x68] sm:$0xff]
        %v339 = vld [vmem:[#allocation2 + $0x70] sm:$0xff]
        %v340 = vld [vmem:[#allocation2 + $0x78] sm:$0xff]
        %v341 = vld [vmem:[#allocation2 + $0x80] sm:$0xff]
        %v342 = vld [vmem:[#allocation2 + $0x88] sm:$0xff]
        %v343 = vld [vmem:[#allocation2 + $0x90] sm:$0xff]
        %v344 = vld [vmem:[#allocation2 + $0x98] sm:$0xff]
        %v345 = vld [vmem:[#allocation2 + $0xa0] sm:$0xff]
        %v346 = vld [vmem:[#allocation2 + $0xa8] sm:$0xff]
        %v347 = vld [vmem:[#allocation2 + $0xb0] sm:$0xff]
        %v348 = vld [vmem:[#allocation2 + $0xb8] sm:$0xff]
        %v349 = vld [vmem:[#allocation2 + $0xc0] sm:$0xff]
        %v350 = vld [vmem:[#allocation2 + $0xc8] sm:$0xff]
        %v351 = vld [vmem:[#allocation2 + $0xd0] sm:$0xff]
        %v352 = vld [vmem:[#allocation2 + $0xd8] sm:$0xff]
        %v353 = vld [vmem:[#allocation2 + $0xe0] sm:$0xff]
        %v354 = vld [vmem:[#allocation2 + $0xe8] sm:$0xff]
        %v355 = vld [vmem:[#allocation2 + $0xf0] sm:$0xff]
        %v356 = vld [vmem:[#allocation2 + $0xf8] sm:$0xff]
        %v357 = vld [vmem:[#allocation2 + $0x100] sm:$0xff]
        %v358 = vld [vmem:[#allocation2 + $0x108] sm:$0xff]
        %v359 = vld [vmem:[#allocation2 + $0x110] sm:$0xff]
        %v360 = vld [vmem:[#allocation2 + $0x118] sm:$0xff]
        %v361 = vpack.c.bf16 %v326, %v325
        %v362 = vpack.c.bf16 %v328, %v327
        %v363 = vpack.c.bf16 %v330, %v329
        %v364 = vpack.c.bf16 %v332, %v331
        %v365 = vpack.c.bf16 %v334, %v333
        %v366 = vpack.c.bf16 %v336, %v335
        %v367 = vpack.c.bf16 %v338, %v337
        %v368 = vpack.c.bf16 %v340, %v339
        %v369 = vpack.c.bf16 %v342, %v341
        %v370 = vpack.c.bf16 %v344, %v343
        %v371 = vpack.c.bf16 %v346, %v345
        %v372 = vpack.c.bf16 %v348, %v347
        %v373 = vpack.c.bf16 %v350, %v349
        %v374 = vpack.c.bf16 %v352, %v351
        %v375 = vpack.c.bf16 %v354, %v353
        %v376 = vpack.c.bf16 %v356, %v355
        %v377 = vpack.c.bf16 %v358, %v357
        %v378 = vpack.c.bf16 %v360, %v359
        %v379 = vld [vmem:[%s1] sm:$0xf]
        %v380 = vld [vmem:[%s1 + $0x4] sm:$0xf]
        %v381 = vld [vmem:[#allocation2 + $0x1] sm:$0xff]
        %v382 = vld [vmem:[#allocation2 + $0x9] sm:$0xff]
        %v383 = vld [vmem:[#allocation2 + $0x11] sm:$0xff]
        %v384 = vld [vmem:[#allocation2 + $0x19] sm:$0xff]
        %v385 = vld [vmem:[#allocation2 + $0x21] sm:$0xff]
        %v386 = vld [vmem:[#allocation2 + $0x29] sm:$0xff]
        %v387 = vld [vmem:[#allocation2 + $0x31] sm:$0xff]
        %v388 = vld [vmem:[#allocation2 + $0x39] sm:$0xff]
        %v389 = vld [vmem:[#allocation2 + $0x41] sm:$0xff]
        %v390 = vld [vmem:[#allocation2 + $0x49] sm:$0xff]
        %v391 = vld [vmem:[#allocation2 + $0x51] sm:$0xff]
        %v392 = vld [vmem:[#allocation2 + $0x59] sm:$0xff]
        %v393 = vld [vmem:[#allocation2 + $0x61] sm:$0xff]
        %v394 = vld [vmem:[#allocation2 + $0x69] sm:$0xff]
        %v395 = vld [vmem:[#allocation2 + $0x71] sm:$0xff]
        %v396 = vld [vmem:[#allocation2 + $0x79] sm:$0xff]
        %v397 = vld [vmem:[#allocation2 + $0x81] sm:$0xff]
        %v398 = vld [vmem:[#allocation2 + $0x89] sm:$0xff]
        %v399 = vld [vmem:[#allocation2 + $0x91] sm:$0xff]
        %v400 = vld [vmem:[#allocation2 + $0x99] sm:$0xff]
        %v401 = vld [vmem:[#allocation2 + $0xa1] sm:$0xff]
        %v402 = vld [vmem:[#allocation2 + $0xa9] sm:$0xff]
        %v403 = vld [vmem:[#allocation2 + $0xb1] sm:$0xff]
        %v404 = vld [vmem:[#allocation2 + $0xb9] sm:$0xff]
        %v405 = vld [vmem:[#allocation2 + $0xc1] sm:$0xff]
        %v406 = vld [vmem:[#allocation2 + $0xc9] sm:$0xff]
        %v407 = vld [vmem:[#allocation2 + $0xd1] sm:$0xff]
        %v408 = vld [vmem:[#allocation2 + $0xd9] sm:$0xff]
        %v409 = vld [vmem:[#allocation2 + $0xe1] sm:$0xff]
        %v410 = vld [vmem:[#allocation2 + $0xe9] sm:$0xff]
        %v411 = vld [vmem:[#allocation2 + $0xf1] sm:$0xff]
        %v412 = vld [vmem:[#allocation2 + $0xf9] sm:$0xff]
        %v413 = vld [vmem:[#allocation2 + $0x101] sm:$0xff]
        %v414 = vld [vmem:[#allocation2 + $0x109] sm:$0xff]
        %v415 = vld [vmem:[#allocation2 + $0x111] sm:$0xff]
        %v416 = vld [vmem:[#allocation2 + $0x119] sm:$0xff]
        %v417 = vpack.c.bf16 %v382, %v381
        %v418 = vpack.c.bf16 %v384, %v383
        %v419 = vpack.c.bf16 %v386, %v385
        %v420 = vpack.c.bf16 %v388, %v387
        %v421 = vpack.c.bf16 %v390, %v389
        %v422 = vpack.c.bf16 %v392, %v391
        %v423 = vpack.c.bf16 %v394, %v393
        %v424 = vpack.c.bf16 %v396, %v395
        %v425 = vpack.c.bf16 %v398, %v397
        %v426 = vpack.c.bf16 %v400, %v399
        %v427 = vpack.c.bf16 %v402, %v401
        %v428 = vpack.c.bf16 %v404, %v403
        %v429 = vpack.c.bf16 %v406, %v405
        %v430 = vpack.c.bf16 %v408, %v407
        %v431 = vpack.c.bf16 %v410, %v409
        %v432 = vpack.c.bf16 %v412, %v411
        %v433 = vpack.c.bf16 %v414, %v413
        %v434 = vpack.c.bf16 %v416, %v415
        %s435 = scalar_lea.vmem %s1, 8
        %v436 = vld [vmem:[%s435] sm:$0xf]
        %v437 = vld [vmem:[%s435 + $0x4] sm:$0xf]
        %v440 = vunpack.c.l.b16 %v436
        %v441 = vunpack.c.l.b16 %v437
        %v442 = vpack.c.b16 %v441, %v440
        %v445 = vsel %vm282, %v417, 0
        %v448 = vsel %vm282, %v418, 0
        %v451 = vsel %vm282, %v419, 0
        %v454 = vsel %vm282, %v420, 0
        %v457 = vsel %vm282, %v421, 0
        %v460 = vsel %vm282, %v422, 0
        %v463 = vsel %vm282, %v423, 0
        %v466 = vsel %vm282, %v424, 0
        %v469 = vsel %vm282, %v425, 0
        %v472 = vsel %vm282, %v426, 0
        %v475 = vsel %vm282, %v427, 0
        %v478 = vsel %vm282, %v428, 0
        %v481 = vsel %vm282, %v429, 0
        %v484 = vsel %vm282, %v430, 0
        %v487 = vsel %vm282, %v431, 0
        %v490 = vsel %vm282, %v432, 0
        %v493 = vsel %vm282, %v433, 0
        %v496 = vsel %vm282, %v434, 0
        %498 = vmatprep.subr.bf16.mxu0 0
        %499 = vmatpush1.bf16.msra.mxu0 %v442
        %500 = vmatprep.subr.bf16.mxu0 0
        %501 = vmatpush1.bf16.msra.mxu0 0
        %502 = vmatprep.subr.bf16.mxu0 0
        %503 = vmatpush1.bf16.msra.mxu0 0
        %504 = vmatprep.subr.bf16.mxu0 0
        %505 = vmatpush1.bf16.msra.mxu0 0
        %506 = vmatprep.subr.bf16.mxu0 0
        %507 = vmatpush1.bf16.msra.mxu0 0
        %508 = vmatprep.subr.bf16.mxu0 0
        %509 = vmatpush1.bf16.msra.mxu0 0
        %510 = vmatprep.subr.bf16.mxu0 0
        %511 = vmatpush1.bf16.msra.mxu0 0
        %512 = vmatprep.subr.bf16.mxu0 0
        %513 = vmatpush1.bf16.msra.mxu0 0
        %514 = vmatprep.subr.bf16.mxu0 0
        %515 = vmatpush1.bf16.msra.mxu0 0
        %516 = vmatprep.subr.bf16.mxu0 0
        %517 = vmatpush1.bf16.msra.mxu0 0
        %518 = vmatprep.subr.bf16.mxu0 0
        %519 = vmatpush1.bf16.msra.mxu0 0
        %520 = vmatprep.subr.bf16.mxu0 0
        %521 = vmatpush1.bf16.msra.mxu0 0
        %522 = vmatprep.subr.bf16.mxu0 0
        %523 = vmatpush1.bf16.msra.mxu0 0
        %524 = vmatprep.subr.bf16.mxu0 0
        %525 = vmatpush1.bf16.msra.mxu0 0
        %526 = vmatprep.subr.bf16.mxu0 0
        %527 = vmatpush1.bf16.msra.mxu0 0
        %528 = vmatprep.subr.bf16.mxu0 0
        %529 = vmatpush1.bf16.msra.mxu0 0
        %530 = vmatprep.mubr.bf16.mxu0 0
        %531 = vmatmul.mubr.bf16.gmra.mrb[0].mxu0 %v445
        %v532 = vpop.f32.mrb[0].mxu0
        %v533 = vadd.f32 0.0, %v532
        %v534 = vpop.f32.mrb[0].mxu0
        %v535 = vpop.f32.mrb[0].mxu0
        %v536 = vadd.f32 0.0, %v535
        %v537 = vpop.f32.mrb[0].mxu0
        %538 = vmatprep.mubr.bf16.mxu0 0
        %539 = vmatmul.mubr.bf16.gmra.mrb[0].mxu0 %v448
        %v540 = vpop.f32.mrb[0].mxu0
        %v541 = vadd.f32 0.0, %v540
        %v542 = vpop.f32.mrb[0].mxu0
        %v543 = vpop.f32.mrb[0].mxu0
        %v544 = vadd.f32 0.0, %v543
        %v545 = vpop.f32.mrb[0].mxu0
        %546 = vmatprep.mubr.bf16.mxu0 0
        %547 = vmatmul.mubr.bf16.gmra.mrb[0].mxu0 %v451
        %v548 = vpop.f32.mrb[0].mxu0
        %v549 = vadd.f32 0.0, %v548
        %v550 = vpop.f32.mrb[0].mxu0
        %v551 = vpop.f32.mrb[0].mxu0
        %v552 = vadd.f32 0.0, %v551
        %v553 = vpop.f32.mrb[0].mxu0
        %554 = vmatprep.mubr.bf16.mxu0 0
        %555 = vmatmul.mubr.bf16.gmra.mrb[0].mxu0 %v454
        %v556 = vpop.f32.mrb[0].mxu0
        %v557 = vadd.f32 0.0, %v556
        %v558 = vpop.f32.mrb[0].mxu0
        %v559 = vpop.f32.mrb[0].mxu0
        %v560 = vadd.f32 0.0, %v559
        %v561 = vpop.f32.mrb[0].mxu0
        %562 = vmatprep.mubr.bf16.mxu0 0
        %563 = vmatmul.mubr.bf16.gmra.mrb[0].mxu0 %v457
        %v564 = vpop.f32.mrb[0].mxu0
        %v565 = vadd.f32 0.0, %v564
        %v566 = vpop.f32.mrb[0].mxu0
        %v567 = vpop.f32.mrb[0].mxu0
        %v568 = vadd.f32 0.0, %v567
        %v569 = vpop.f32.mrb[0].mxu0
        %570 = vmatprep.mubr.bf16.mxu0 0
        %571 = vmatmul.mubr.bf16.gmra.mrb[0].mxu0 %v460
        %v572 = vpop.f32.mrb[0].mxu0
        %v573 = vadd.f32 0.0, %v572
        %v574 = vpop.f32.mrb[0].mxu0
        %v575 = vpop.f32.mrb[0].mxu0
        %v576 = vadd.f32 0.0, %v575
        %v577 = vpop.f32.mrb[0].mxu0
        %578 = vmatprep.mubr.bf16.mxu0 0
        %579 = vmatmul.mubr.bf16.gmra.mrb[0].mxu0 %v463
        %v580 = vpop.f32.mrb[0].mxu0
        %v581 = vadd.f32 0.0, %v580
        %v582 = vpop.f32.mrb[0].mxu0
        %v583 = vpop.f32.mrb[0].mxu0
        %v584 = vadd.f32 0.0, %v583
        %v585 = vpop.f32.mrb[0].mxu0
        %586 = vmatprep.mubr.bf16.mxu0 0
        %587 = vmatmul.mubr.bf16.gmra.mrb[0].mxu0 %v466
        %v588 = vpop.f32.mrb[0].mxu0
        %v589 = vadd.f32 0.0, %v588
        %v590 = vpop.f32.mrb[0].mxu0
        %v591 = vpop.f32.mrb[0].mxu0
        %v592 = vadd.f32 0.0, %v591
        %v593 = vpop.f32.mrb[0].mxu0
        %594 = vmatprep.mubr.bf16.mxu0 0
        %595 = vmatmul.mubr.bf16.gmra.mrb[0].mxu0 %v469
        %v596 = vpop.f32.mrb[0].mxu0
        %v597 = vadd.f32 0.0, %v596
        %v598 = vpop.f32.mrb[0].mxu0
        %v599 = vpop.f32.mrb[0].mxu0
        %v600 = vadd.f32 0.0, %v599
        %v601 = vpop.f32.mrb[0].mxu0
        %602 = vmatprep.mubr.bf16.mxu0 0
        %603 = vmatmul.mubr.bf16.gmra.mrb[0].mxu0 %v472
        %v604 = vpop.f32.mrb[0].mxu0
        %v605 = vadd.f32 0.0, %v604
        %v606 = vpop.f32.mrb[0].mxu0
        %v607 = vpop.f32.mrb[0].mxu0
        %v608 = vadd.f32 0.0, %v607
        %v609 = vpop.f32.mrb[0].mxu0
        %610 = vmatprep.mubr.bf16.mxu0 0
        %611 = vmatmul.mubr.bf16.gmra.mrb[0].mxu0 %v475
        %v612 = vpop.f32.mrb[0].mxu0
        %v613 = vadd.f32 0.0, %v612
        %v614 = vpop.f32.mrb[0].mxu0
        %v615 = vpop.f32.mrb[0].mxu0
        %v616 = vadd.f32 0.0, %v615
        %v617 = vpop.f32.mrb[0].mxu0
        %618 = vmatprep.mubr.bf16.mxu0 0
        %619 = vmatmul.mubr.bf16.gmra.mrb[0].mxu0 %v478
        %v620 = vpop.f32.mrb[0].mxu0
        %v621 = vadd.f32 0.0, %v620
        %v622 = vpop.f32.mrb[0].mxu0
        %v623 = vpop.f32.mrb[0].mxu0
        %v624 = vadd.f32 0.0, %v623
        %v625 = vpop.f32.mrb[0].mxu0
        %626 = vmatprep.mubr.bf16.mxu0 0
        %627 = vmatmul.mubr.bf16.gmra.mrb[0].mxu0 %v481
        %v628 = vpop.f32.mrb[0].mxu0
        %v629 = vadd.f32 0.0, %v628
        %v630 = vpop.f32.mrb[0].mxu0
        %v631 = vpop.f32.mrb[0].mxu0
        %v632 = vadd.f32 0.0, %v631
        %v633 = vpop.f32.mrb[0].mxu0
        %634 = vmatprep.mubr.bf16.mxu0 0
        %635 = vmatmul.mubr.bf16.gmra.mrb[0].mxu0 %v484
        %v636 = vpop.f32.mrb[0].mxu0
        %v637 = vadd.f32 0.0, %v636
        %v638 = vpop.f32.mrb[0].mxu0
        %v639 = vpop.f32.mrb[0].mxu0
        %v640 = vadd.f32 0.0, %v639
        %v641 = vpop.f32.mrb[0].mxu0
        %642 = vmatprep.mubr.bf16.mxu0 0
        %643 = vmatmul.mubr.bf16.gmra.mrb[0].mxu0 %v487
        %v644 = vpop.f32.mrb[0].mxu0
        %v645 = vadd.f32 0.0, %v644
        %v646 = vpop.f32.mrb[0].mxu0
        %v647 = vpop.f32.mrb[0].mxu0
        %v648 = vadd.f32 0.0, %v647
        %v649 = vpop.f32.mrb[0].mxu0
        %650 = vmatprep.mubr.bf16.mxu0 0
        %651 = vmatmul.mubr.bf16.gmra.mrb[0].mxu0 %v490
        %v652 = vpop.f32.mrb[0].mxu0
        %v653 = vadd.f32 0.0, %v652
        %v654 = vpop.f32.mrb[0].mxu0
        %v655 = vpop.f32.mrb[0].mxu0
        %v656 = vadd.f32 0.0, %v655
        %v657 = vpop.f32.mrb[0].mxu0
        %658 = vmatprep.mubr.bf16.mxu0 0
        %659 = vmatmul.mubr.bf16.gmra.mrb[0].mxu0 %v493
        %v660 = vpop.f32.mrb[0].mxu0
        %v661 = vadd.f32 0.0, %v660
        %v662 = vpop.f32.mrb[0].mxu0
        %v663 = vpop.f32.mrb[0].mxu0
        %v664 = vadd.f32 0.0, %v663
        %v665 = vpop.f32.mrb[0].mxu0
        %666 = vmatprep.mubr.bf16.mxu0 0
        %667 = vmatmul.mubr.bf16.gmra.mrb[0].mxu0 %v496
        %v668 = vpop.f32.mrb[0].mxu0
        %v669 = vadd.f32 0.0, %v668
        %v670 = vpop.f32.mrb[0].mxu0
        %v671 = vpop.f32.mrb[0].mxu0
        %v672 = vadd.f32 0.0, %v671
        %v673 = vpop.f32.mrb[0].mxu0
        %674 = vdwg.mxu0
        %v677 = vunpack.c.l.b16 %v379
        %v678 = vunpack.c.l.b16 %v380
        %v679 = vpack.c.b16 %v678, %v677
        %v682 = vsel %vm282, %v361, 0
        %v685 = vsel %vm282, %v362, 0
        %v688 = vsel %vm282, %v363, 0
        %v691 = vsel %vm282, %v364, 0
        %v694 = vsel %vm282, %v365, 0
        %v697 = vsel %vm282, %v366, 0
        %v700 = vsel %vm282, %v367, 0
        %v703 = vsel %vm282, %v368, 0
        %v706 = vsel %vm282, %v369, 0
        %v709 = vsel %vm282, %v370, 0
        %v712 = vsel %vm282, %v371, 0
        %v715 = vsel %vm282, %v372, 0
        %v718 = vsel %vm282, %v373, 0
        %v721 = vsel %vm282, %v374, 0
        %v724 = vsel %vm282, %v375, 0
        %v727 = vsel %vm282, %v376, 0
        %v730 = vsel %vm282, %v377, 0
        %v733 = vsel %vm282, %v378, 0
        %735 = vmatprep.subr.bf16.mxu0 0
        %736 = vmatpush1.bf16.msra.mxu0 %v679
        %737 = vmatprep.subr.bf16.mxu0 0
        %738 = vmatpush1.bf16.msra.mxu0 0
        %739 = vmatprep.subr.bf16.mxu0 0
        %740 = vmatpush1.bf16.msra.mxu0 0
        %741 = vmatprep.subr.bf16.mxu0 0
        %742 = vmatpush1.bf16.msra.mxu0 0
        %743 = vmatprep.subr.bf16.mxu0 0
        %744 = vmatpush1.bf16.msra.mxu0 0
        %745 = vmatprep.subr.bf16.mxu0 0
        %746 = vmatpush1.bf16.msra.mxu0 0
        %747 = vmatprep.subr.bf16.mxu0 0
        %748 = vmatpush1.bf16.msra.mxu0 0
        %749 = vmatprep.subr.bf16.mxu0 0
        %750 = vmatpush1.bf16.msra.mxu0 0
        %751 = vmatprep.subr.bf16.mxu0 0
        %752 = vmatpush1.bf16.msra.mxu0 0
        %753 = vmatprep.subr.bf16.mxu0 0
        %754 = vmatpush1.bf16.msra.mxu0 0
        %755 = vmatprep.subr.bf16.mxu0 0
        %756 = vmatpush1.bf16.msra.mxu0 0
        %757 = vmatprep.subr.bf16.mxu0 0
        %758 = vmatpush1.bf16.msra.mxu0 0
        %759 = vmatprep.subr.bf16.mxu0 0
        %760 = vmatpush1.bf16.msra.mxu0 0
        %761 = vmatprep.subr.bf16.mxu0 0
        %762 = vmatpush1.bf16.msra.mxu0 0
        %763 = vmatprep.subr.bf16.mxu0 0
        %764 = vmatpush1.bf16.msra.mxu0 0
        %765 = vmatprep.subr.bf16.mxu0 0
        %766 = vmatpush1.bf16.msra.mxu0 0
        %767 = vmatprep.mubr.bf16.mxu0 0
        %768 = vmatmul.mubr.bf16.gmra.mrb[0].mxu0 %v682
        %v769 = vpop.f32.mrb[0].mxu0
        %v770 = vadd.f32 %v533, %v769
        %v771 = vpop.f32.mrb[0].mxu0
        %v772 = vpop.f32.mrb[0].mxu0
        %v773 = vadd.f32 %v536, %v772
        %v774 = vpop.f32.mrb[0].mxu0
        %775 = vmatprep.mubr.bf16.mxu0 0
        %776 = vmatmul.mubr.bf16.gmra.mrb[0].mxu0 %v685
        %v777 = vpop.f32.mrb[0].mxu0
        %v778 = vadd.f32 %v541, %v777
        %v779 = vpop.f32.mrb[0].mxu0
        %v780 = vpop.f32.mrb[0].mxu0
        %v781 = vadd.f32 %v544, %v780
        %v782 = vpop.f32.mrb[0].mxu0
        %783 = vmatprep.mubr.bf16.mxu0 0
        %784 = vmatmul.mubr.bf16.gmra.mrb[0].mxu0 %v688
        %v785 = vpop.f32.mrb[0].mxu0
        %v786 = vadd.f32 %v549, %v785
        %v787 = vpop.f32.mrb[0].mxu0
        %v788 = vpop.f32.mrb[0].mxu0
        %v789 = vadd.f32 %v552, %v788
        %v790 = vpop.f32.mrb[0].mxu0
        %791 = vmatprep.mubr.bf16.mxu0 0
        %792 = vmatmul.mubr.bf16.gmra.mrb[0].mxu0 %v691
        %v793 = vpop.f32.mrb[0].mxu0
        %v794 = vadd.f32 %v557, %v793
        %v795 = vpop.f32.mrb[0].mxu0
        %v796 = vpop.f32.mrb[0].mxu0
        %v797 = vadd.f32 %v560, %v796
        %v798 = vpop.f32.mrb[0].mxu0
        %799 = vmatprep.mubr.bf16.mxu0 0
        %800 = vmatmul.mubr.bf16.gmra.mrb[0].mxu0 %v694
        %v801 = vpop.f32.mrb[0].mxu0
        %v802 = vadd.f32 %v565, %v801
        %v803 = vpop.f32.mrb[0].mxu0
        %v804 = vpop.f32.mrb[0].mxu0
        %v805 = vadd.f32 %v568, %v804
        %v806 = vpop.f32.mrb[0].mxu0
        %807 = vmatprep.mubr.bf16.mxu0 0
        %808 = vmatmul.mubr.bf16.gmra.mrb[0].mxu0 %v697
        %v809 = vpop.f32.mrb[0].mxu0
        %v810 = vadd.f32 %v573, %v809
        %v811 = vpop.f32.mrb[0].mxu0
        %v812 = vpop.f32.mrb[0].mxu0
        %v813 = vadd.f32 %v576, %v812
        %v814 = vpop.f32.mrb[0].mxu0
        %815 = vmatprep.mubr.bf16.mxu0 0
        %816 = vmatmul.mubr.bf16.gmra.mrb[0].mxu0 %v700
        %v817 = vpop.f32.mrb[0].mxu0
        %v818 = vadd.f32 %v581, %v817
        %v819 = vpop.f32.mrb[0].mxu0
        %v820 = vpop.f32.mrb[0].mxu0
        %v821 = vadd.f32 %v584, %v820
        %v822 = vpop.f32.mrb[0].mxu0
        %823 = vmatprep.mubr.bf16.mxu0 0
        %824 = vmatmul.mubr.bf16.gmra.mrb[0].mxu0 %v703
        %v825 = vpop.f32.mrb[0].mxu0
        %v826 = vadd.f32 %v589, %v825
        %v827 = vpop.f32.mrb[0].mxu0
        %v828 = vpop.f32.mrb[0].mxu0
        %v829 = vadd.f32 %v592, %v828
        %v830 = vpop.f32.mrb[0].mxu0
        %831 = vmatprep.mubr.bf16.mxu0 0
        %832 = vmatmul.mubr.bf16.gmra.mrb[0].mxu0 %v706
        %v833 = vpop.f32.mrb[0].mxu0
        %v834 = vadd.f32 %v597, %v833
        %v835 = vpop.f32.mrb[0].mxu0
        %v836 = vpop.f32.mrb[0].mxu0
        %v837 = vadd.f32 %v600, %v836
        %v838 = vpop.f32.mrb[0].mxu0
        %839 = vmatprep.mubr.bf16.mxu0 0
        %840 = vmatmul.mubr.bf16.gmra.mrb[0].mxu0 %v709
        %v841 = vpop.f32.mrb[0].mxu0
        %v842 = vadd.f32 %v605, %v841
        %v843 = vpop.f32.mrb[0].mxu0
        %v844 = vpop.f32.mrb[0].mxu0
        %v845 = vadd.f32 %v608, %v844
        %v846 = vpop.f32.mrb[0].mxu0
        %847 = vmatprep.mubr.bf16.mxu0 0
        %848 = vmatmul.mubr.bf16.gmra.mrb[0].mxu0 %v712
        %v849 = vpop.f32.mrb[0].mxu0
        %v850 = vadd.f32 %v613, %v849
        %v851 = vpop.f32.mrb[0].mxu0
        %v852 = vpop.f32.mrb[0].mxu0
        %v853 = vadd.f32 %v616, %v852
        %v854 = vpop.f32.mrb[0].mxu0
        %855 = vmatprep.mubr.bf16.mxu0 0
        %856 = vmatmul.mubr.bf16.gmra.mrb[0].mxu0 %v715
        %v857 = vpop.f32.mrb[0].mxu0
        %v858 = vadd.f32 %v621, %v857
        %v859 = vpop.f32.mrb[0].mxu0
        %v860 = vpop.f32.mrb[0].mxu0
        %v861 = vadd.f32 %v624, %v860
        %v862 = vpop.f32.mrb[0].mxu0
        %863 = vmatprep.mubr.bf16.mxu0 0
        %864 = vmatmul.mubr.bf16.gmra.mrb[0].mxu0 %v718
        %v865 = vpop.f32.mrb[0].mxu0
        %v866 = vadd.f32 %v629, %v865
        %v867 = vpop.f32.mrb[0].mxu0
        %v868 = vpop.f32.mrb[0].mxu0
        %v869 = vadd.f32 %v632, %v868
        %v870 = vpop.f32.mrb[0].mxu0
        %871 = vmatprep.mubr.bf16.mxu0 0
        %872 = vmatmul.mubr.bf16.gmra.mrb[0].mxu0 %v721
        %v873 = vpop.f32.mrb[0].mxu0
        %v874 = vadd.f32 %v637, %v873
        %v875 = vpop.f32.mrb[0].mxu0
        %v876 = vpop.f32.mrb[0].mxu0
        %v877 = vadd.f32 %v640, %v876
        %v878 = vpop.f32.mrb[0].mxu0
        %879 = vmatprep.mubr.bf16.mxu0 0
        %880 = vmatmul.mubr.bf16.gmra.mrb[0].mxu0 %v724
        %v881 = vpop.f32.mrb[0].mxu0
        %v882 = vadd.f32 %v645, %v881
        %v883 = vpop.f32.mrb[0].mxu0
        %v884 = vpop.f32.mrb[0].mxu0
        %v885 = vadd.f32 %v648, %v884
        %v886 = vpop.f32.mrb[0].mxu0
        %887 = vmatprep.mubr.bf16.mxu0 0
        %888 = vmatmul.mubr.bf16.gmra.mrb[0].mxu0 %v727
        %v889 = vpop.f32.mrb[0].mxu0
        %v890 = vadd.f32 %v653, %v889
        %v891 = vpop.f32.mrb[0].mxu0
        %v892 = vpop.f32.mrb[0].mxu0
        %v893 = vadd.f32 %v656, %v892
        %v894 = vpop.f32.mrb[0].mxu0
        %895 = vmatprep.mubr.bf16.mxu0 0
        %896 = vmatmul.mubr.bf16.gmra.mrb[0].mxu0 %v730
        %v897 = vpop.f32.mrb[0].mxu0
        %v898 = vadd.f32 %v661, %v897
        %v899 = vpop.f32.mrb[0].mxu0
        %v900 = vpop.f32.mrb[0].mxu0
        %v901 = vadd.f32 %v664, %v900
        %v902 = vpop.f32.mrb[0].mxu0
        %903 = vmatprep.mubr.bf16.mxu0 0
        %904 = vmatmul.mubr.bf16.gmra.mrb[0].mxu0 %v733
        %v905 = vpop.f32.mrb[0].mxu0
        %v906 = vadd.f32 %v669, %v905
        %v907 = vpop.f32.mrb[0].mxu0
        %v908 = vpop.f32.mrb[0].mxu0
        %v909 = vadd.f32 %v672, %v908
        %v910 = vpop.f32.mrb[0].mxu0
        %911 = vdwg.mxu0
        %v912 = vld [vmem:[#allocation2 + $0x2] sm:$0xff]
        %v913 = vld [vmem:[#allocation2 + $0xa] sm:$0xff]
        %v914 = vld [vmem:[#allocation2 + $0x12] sm:$0xff]
        %v915 = vld [vmem:[#allocation2 + $0x1a] sm:$0xff]
        %v916 = vld [vmem:[#allocation2 + $0x22] sm:$0xff]
        %v917 = vld [vmem:[#allocation2 + $0x2a] sm:$0xff]
        %v918 = vld [vmem:[#allocation2 + $0x32] sm:$0xff]
        %v919 = vld [vmem:[#allocation2 + $0x3a] sm:$0xff]
        %v920 = vld [vmem:[#allocation2 + $0x42] sm:$0xff]
        %v921 = vld [vmem:[#allocation2 + $0x4a] sm:$0xff]
        %v922 = vld [vmem:[#allocation2 + $0x52] sm:$0xff]
        %v923 = vld [vmem:[#allocation2 + $0x5a] sm:$0xff]
        %v924 = vld [vmem:[#allocation2 + $0x62] sm:$0xff]
        %v925 = vld [vmem:[#allocation2 + $0x6a] sm:$0xff]
        %v926 = vld [vmem:[#allocation2 + $0x72] sm:$0xff]
        %v927 = vld [vmem:[#allocation2 + $0x7a] sm:$0xff]
        %v928 = vld [vmem:[#allocation2 + $0x82] sm:$0xff]
        %v929 = vld [vmem:[#allocation2 + $0x8a] sm:$0xff]
        %v930 = vld [vmem:[#allocation2 + $0x92] sm:$0xff]
        %v931 = vld [vmem:[#allocation2 + $0x9a] sm:$0xff]
        %v932 = vld [vmem:[#allocation2 + $0xa2] sm:$0xff]
        %v933 = vld [vmem:[#allocation2 + $0xaa] sm:$0xff]
        %v934 = vld [vmem:[#allocation2 + $0xb2] sm:$0xff]
        %v935 = vld [vmem:[#allocation2 + $0xba] sm:$0xff]
        %v936 = vld [vmem:[#allocation2 + $0xc2] sm:$0xff]
        %v937 = vld [vmem:[#allocation2 + $0xca] sm:$0xff]
        %v938 = vld [vmem:[#allocation2 + $0xd2] sm:$0xff]
        %v939 = vld [vmem:[#allocation2 + $0xda] sm:$0xff]
        %v940 = vld [vmem:[#allocation2 + $0xe2] sm:$0xff]
        %v941 = vld [vmem:[#allocation2 + $0xea] sm:$0xff]
        %v942 = vld [vmem:[#allocation2 + $0xf2] sm:$0xff]
        %v943 = vld [vmem:[#allocation2 + $0xfa] sm:$0xff]
        %v944 = vld [vmem:[#allocation2 + $0x102] sm:$0xff]
        %v945 = vld [vmem:[#allocation2 + $0x10a] sm:$0xff]
        %v946 = vld [vmem:[#allocation2 + $0x112] sm:$0xff]
        %v947 = vld [vmem:[#allocation2 + $0x11a] sm:$0xff]
        %v948 = vpack.c.bf16 %v913, %v912
        %v949 = vpack.c.bf16 %v915, %v914
        %v950 = vpack.c.bf16 %v917, %v916
        %v951 = vpack.c.bf16 %v919, %v918
        %v952 = vpack.c.bf16 %v921, %v920
        %v953 = vpack.c.bf16 %v923, %v922
        %v954 = vpack.c.bf16 %v925, %v924
        %v955 = vpack.c.bf16 %v927, %v926
        %v956 = vpack.c.bf16 %v929, %v928
        %v957 = vpack.c.bf16 %v931, %v930
        %v958 = vpack.c.bf16 %v933, %v932
        %v959 = vpack.c.bf16 %v935, %v934
        %v960 = vpack.c.bf16 %v937, %v936
        %v961 = vpack.c.bf16 %v939, %v938
        %v962 = vpack.c.bf16 %v941, %v940
        %v963 = vpack.c.bf16 %v943, %v942
        %v964 = vpack.c.bf16 %v945, %v944
        %v965 = vpack.c.bf16 %v947, %v946
        %s966 = scalar_lea.vmem %s1, 16
        %v967 = vld [vmem:[%s966] sm:$0xf]
        %v968 = vld [vmem:[%s966 + $0x4] sm:$0xf]
        %v971 = vunpack.c.l.b16 %v967
        %v972 = vunpack.c.l.b16 %v968
        %v973 = vpack.c.b16 %v972, %v971
        %v976 = vsel %vm282, %v948, 0
        %v979 = vsel %vm282, %v949, 0
        %v982 = vsel %vm282, %v950, 0
        %v985 = vsel %vm282, %v951, 0
        %v988 = vsel %vm282, %v952, 0
        %v991 = vsel %vm282, %v953, 0
        %v994 = vsel %vm282, %v954, 0
        %v997 = vsel %vm282, %v955, 0
        %v1000 = vsel %vm282, %v956, 0
        %v1003 = vsel %vm282, %v957, 0
        %v1006 = vsel %vm282, %v958, 0
        %v1009 = vsel %vm282, %v959, 0
        %v1012 = vsel %vm282, %v960, 0
        %v1015 = vsel %vm282, %v961, 0
        %v1018 = vsel %vm282, %v962, 0
        %v1021 = vsel %vm282, %v963, 0
        %v1024 = vsel %vm282, %v964, 0
        %v1027 = vsel %vm282, %v965, 0
        %1029 = vmatprep.subr.bf16.mxu0 0
        %1030 = vmatpush1.bf16.msra.mxu0 %v973
        %1031 = vmatprep.subr.bf16.mxu0 0
        %1032 = vmatpush1.bf16.msra.mxu0 0
        %1033 = vmatprep.subr.bf16.mxu0 0
        %1034 = vmatpush1.bf16.msra.mxu0 0
        %1035 = vmatprep.subr.bf16.mxu0 0
        %1036 = vmatpush1.bf16.msra.mxu0 0
        %1037 = vmatprep.subr.bf16.mxu0 0
        %1038 = vmatpush1.bf16.msra.mxu0 0
        %1039 = vmatprep.subr.bf16.mxu0 0
        %1040 = vmatpush1.bf16.msra.mxu0 0
        %1041 = vmatprep.subr.bf16.mxu0 0
        %1042 = vmatpush1.bf16.msra.mxu0 0
        %1043 = vmatprep.subr.bf16.mxu0 0
        %1044 = vmatpush1.bf16.msra.mxu0 0
        %1045 = vmatprep.subr.bf16.mxu0 0
        %1046 = vmatpush1.bf16.msra.mxu0 0
        %1047 = vmatprep.subr.bf16.mxu0 0
        %1048 = vmatpush1.bf16.msra.mxu0 0
        %1049 = vmatprep.subr.bf16.mxu0 0
        %1050 = vmatpush1.bf16.msra.mxu0 0
        %1051 = vmatprep.subr.bf16.mxu0 0
        %1052 = vmatpush1.bf16.msra.mxu0 0
        %1053 = vmatprep.subr.bf16.mxu0 0
        %1054 = vmatpush1.bf16.msra.mxu0 0
        %1055 = vmatprep.subr.bf16.mxu0 0
        %1056 = vmatpush1.bf16.msra.mxu0 0
        %1057 = vmatprep.subr.bf16.mxu0 0
        %1058 = vmatpush1.bf16.msra.mxu0 0
        %1059 = vmatprep.subr.bf16.mxu0 0
        %1060 = vmatpush1.bf16.msra.mxu0 0
        %1061 = vmatprep.mubr.bf16.mxu0 0
        %1062 = vmatmul.mubr.bf16.gmra.mrb[0].mxu0 %v976
        %v1063 = vpop.f32.mrb[0].mxu0
        %v1064 = vadd.f32 0.0, %v1063
        %v1065 = vpop.f32.mrb[0].mxu0
        %v1066 = vpop.f32.mrb[0].mxu0
        %v1067 = vadd.f32 0.0, %v1066
        %v1068 = vpop.f32.mrb[0].mxu0
        %1069 = vmatprep.mubr.bf16.mxu0 0
        %1070 = vmatmul.mubr.bf16.gmra.mrb[0].mxu0 %v979
        %v1071 = vpop.f32.mrb[0].mxu0
        %v1072 = vadd.f32 0.0, %v1071
        %v1073 = vpop.f32.mrb[0].mxu0
        %v1074 = vpop.f32.mrb[0].mxu0
        %v1075 = vadd.f32 0.0, %v1074
        %v1076 = vpop.f32.mrb[0].mxu0
        %1077 = vmatprep.mubr.bf16.mxu0 0
        %1078 = vmatmul.mubr.bf16.gmra.mrb[0].mxu0 %v982
        %v1079 = vpop.f32.mrb[0].mxu0
        %v1080 = vadd.f32 0.0, %v1079
        %v1081 = vpop.f32.mrb[0].mxu0
        %v1082 = vpop.f32.mrb[0].mxu0
        %v1083 = vadd.f32 0.0, %v1082
        %v1084 = vpop.f32.mrb[0].mxu0
        %1085 = vmatprep.mubr.bf16.mxu0 0
        %1086 = vmatmul.mubr.bf16.gmra.mrb[0].mxu0 %v985
        %v1087 = vpop.f32.mrb[0].mxu0
        %v1088 = vadd.f32 0.0, %v1087
        %v1089 = vpop.f32.mrb[0].mxu0
        %v1090 = vpop.f32.mrb[0].mxu0
        %v1091 = vadd.f32 0.0, %v1090
        %v1092 = vpop.f32.mrb[0].mxu0
        %1093 = vmatprep.mubr.bf16.mxu0 0
        %1094 = vmatmul.mubr.bf16.gmra.mrb[0].mxu0 %v988
        %v1095 = vpop.f32.mrb[0].mxu0
        %v1096 = vadd.f32 0.0, %v1095
        %v1097 = vpop.f32.mrb[0].mxu0
        %v1098 = vpop.f32.mrb[0].mxu0
        %v1099 = vadd.f32 0.0, %v1098
        %v1100 = vpop.f32.mrb[0].mxu0
        %1101 = vmatprep.mubr.bf16.mxu0 0
        %1102 = vmatmul.mubr.bf16.gmra.mrb[0].mxu0 %v991
        %v1103 = vpop.f32.mrb[0].mxu0
        %v1104 = vadd.f32 0.0, %v1103
        %v1105 = vpop.f32.mrb[0].mxu0
        %v1106 = vpop.f32.mrb[0].mxu0
        %v1107 = vadd.f32 0.0, %v1106
        %v1108 = vpop.f32.mrb[0].mxu0
        %1109 = vmatprep.mubr.bf16.mxu0 0
        %1110 = vmatmul.mubr.bf16.gmra.mrb[0].mxu0 %v994
        %v1111 = vpop.f32.mrb[0].mxu0
        %v1112 = vadd.f32 0.0, %v1111
        %v1113 = vpop.f32.mrb[0].mxu0
        %v1114 = vpop.f32.mrb[0].mxu0
        %v1115 = vadd.f32 0.0, %v1114
        %v1116 = vpop.f32.mrb[0].mxu0
        %1117 = vmatprep.mubr.bf16.mxu0 0
        %1118 = vmatmul.mubr.bf16.gmra.mrb[0].mxu0 %v997
        %v1119 = vpop.f32.mrb[0].mxu0
        %v1120 = vadd.f32 0.0, %v1119
        %v1121 = vpop.f32.mrb[0].mxu0
        %v1122 = vpop.f32.mrb[0].mxu0
        %v1123 = vadd.f32 0.0, %v1122
        %v1124 = vpop.f32.mrb[0].mxu0
        %1125 = vmatprep.mubr.bf16.mxu0 0
        %1126 = vmatmul.mubr.bf16.gmra.mrb[0].mxu0 %v1000
        %v1127 = vpop.f32.mrb[0].mxu0
        %v1128 = vadd.f32 0.0, %v1127
        %v1129 = vpop.f32.mrb[0].mxu0
        %v1130 = vpop.f32.mrb[0].mxu0
        %v1131 = vadd.f32 0.0, %v1130
        %v1132 = vpop.f32.mrb[0].mxu0
        %1133 = vmatprep.mubr.bf16.mxu0 0
        %1134 = vmatmul.mubr.bf16.gmra.mrb[0].mxu0 %v1003
        %v1135 = vpop.f32.mrb[0].mxu0
        %v1136 = vadd.f32 0.0, %v1135
        %v1137 = vpop.f32.mrb[0].mxu0
        %v1138 = vpop.f32.mrb[0].mxu0
        %v1139 = vadd.f32 0.0, %v1138
        %v1140 = vpop.f32.mrb[0].mxu0
        %1141 = vmatprep.mubr.bf16.mxu0 0
        %1142 = vmatmul.mubr.bf16.gmra.mrb[0].mxu0 %v1006
        %v1143 = vpop.f32.mrb[0].mxu0
        %v1144 = vadd.f32 0.0, %v1143
        %v1145 = vpop.f32.mrb[0].mxu0
        %v1146 = vpop.f32.mrb[0].mxu0
        %v1147 = vadd.f32 0.0, %v1146
        %v1148 = vpop.f32.mrb[0].mxu0
        %1149 = vmatprep.mubr.bf16.mxu0 0
        %1150 = vmatmul.mubr.bf16.gmra.mrb[0].mxu0 %v1009
        %v1151 = vpop.f32.mrb[0].mxu0
        %v1152 = vadd.f32 0.0, %v1151
        %v1153 = vpop.f32.mrb[0].mxu0
        %v1154 = vpop.f32.mrb[0].mxu0
        %v1155 = vadd.f32 0.0, %v1154
        %v1156 = vpop.f32.mrb[0].mxu0
        %1157 = vmatprep.mubr.bf16.mxu0 0
        %1158 = vmatmul.mubr.bf16.gmra.mrb[0].mxu0 %v1012
        %v1159 = vpop.f32.mrb[0].mxu0
        %v1160 = vadd.f32 0.0, %v1159
        %v1161 = vpop.f32.mrb[0].mxu0
        %v1162 = vpop.f32.mrb[0].mxu0
        %v1163 = vadd.f32 0.0, %v1162
        %v1164 = vpop.f32.mrb[0].mxu0
        %1165 = vmatprep.mubr.bf16.mxu0 0
        %1166 = vmatmul.mubr.bf16.gmra.mrb[0].mxu0 %v1015
        %v1167 = vpop.f32.mrb[0].mxu0
        %v1168 = vadd.f32 0.0, %v1167
        %v1169 = vpop.f32.mrb[0].mxu0
        %v1170 = vpop.f32.mrb[0].mxu0
        %v1171 = vadd.f32 0.0, %v1170
        %v1172 = vpop.f32.mrb[0].mxu0
        %1173 = vmatprep.mubr.bf16.mxu0 0
        %1174 = vmatmul.mubr.bf16.gmra.mrb[0].mxu0 %v1018
        %v1175 = vpop.f32.mrb[0].mxu0
        %v1176 = vadd.f32 0.0, %v1175
        %v1177 = vpop.f32.mrb[0].mxu0
        %v1178 = vpop.f32.mrb[0].mxu0
        %v1179 = vadd.f32 0.0, %v1178
        %v1180 = vpop.f32.mrb[0].mxu0
        %1181 = vmatprep.mubr.bf16.mxu0 0
        %1182 = vmatmul.mubr.bf16.gmra.mrb[0].mxu0 %v1021
        %v1183 = vpop.f32.mrb[0].mxu0
        %v1184 = vadd.f32 0.0, %v1183
        %v1185 = vpop.f32.mrb[0].mxu0
        %v1186 = vpop.f32.mrb[0].mxu0
        %v1187 = vadd.f32 0.0, %v1186
        %v1188 = vpop.f32.mrb[0].mxu0
        %1189 = vmatprep.mubr.bf16.mxu0 0
        %1190 = vmatmul.mubr.bf16.gmra.mrb[0].mxu0 %v1024
        %v1191 = vpop.f32.mrb[0].mxu0
        %v1192 = vadd.f32 0.0, %v1191
        %v1193 = vpop.f32.mrb[0].mxu0
        %v1194 = vpop.f32.mrb[0].mxu0
        %v1195 = vadd.f32 0.0, %v1194
        %v1196 = vpop.f32.mrb[0].mxu0
        %1197 = vmatprep.mubr.bf16.mxu0 0
        %1198 = vmatmul.mubr.bf16.gmra.mrb[0].mxu0 %v1027
        %v1199 = vpop.f32.mrb[0].mxu0
        %v1200 = vadd.f32 0.0, %v1199
        %v1201 = vpop.f32.mrb[0].mxu0
        %v1202 = vpop.f32.mrb[0].mxu0
        %v1203 = vadd.f32 0.0, %v1202
        %v1204 = vpop.f32.mrb[0].mxu0
        %1205 = vdwg.mxu0
        %v1206 = vadd.f32 %v770, %v1064
        %v1207 = vadd.f32 %v773, %v1067
        %v1208 = vadd.f32 %v778, %v1072
        %v1209 = vadd.f32 %v781, %v1075
        %v1210 = vadd.f32 %v786, %v1080
        %v1211 = vadd.f32 %v789, %v1083
        %v1212 = vadd.f32 %v794, %v1088
        %v1213 = vadd.f32 %v797, %v1091
        %v1214 = vadd.f32 %v802, %v1096
        %v1215 = vadd.f32 %v805, %v1099
        %v1216 = vadd.f32 %v810, %v1104
        %v1217 = vadd.f32 %v813, %v1107
        %v1218 = vadd.f32 %v818, %v1112
        %v1219 = vadd.f32 %v821, %v1115
        %v1220 = vadd.f32 %v826, %v1120
        %v1221 = vadd.f32 %v829, %v1123
        %v1222 = vadd.f32 %v834, %v1128
        %v1223 = vadd.f32 %v837, %v1131
        %v1224 = vadd.f32 %v842, %v1136
        %v1225 = vadd.f32 %v845, %v1139
        %v1226 = vadd.f32 %v850, %v1144
        %v1227 = vadd.f32 %v853, %v1147
        %v1228 = vadd.f32 %v858, %v1152
        %v1229 = vadd.f32 %v861, %v1155
        %v1230 = vadd.f32 %v866, %v1160
        %v1231 = vadd.f32 %v869, %v1163
        %v1232 = vadd.f32 %v874, %v1168
        %v1233 = vadd.f32 %v877, %v1171
        %v1234 = vadd.f32 %v882, %v1176
        %v1235 = vadd.f32 %v885, %v1179
        %v1236 = vadd.f32 %v890, %v1184
        %v1237 = vadd.f32 %v893, %v1187
        %v1238 = vadd.f32 %v898, %v1192
        %v1239 = vadd.f32 %v901, %v1195
        %v1240 = vadd.f32 %v906, %v1200
        %v1241 = vadd.f32 %v909, %v1203
        %v1242 = vld [vmem:[#allocation2 + $0x12] sm:$0xff]
        %v1243 = vld [vmem:[#allocation2 + $0x1a] sm:$0xff]
        %v1244 = vld [vmem:[#allocation2 + $0x22] sm:$0xff]
        %v1245 = vld [vmem:[#allocation2 + $0x2a] sm:$0xff]
        %v1246 = vld [vmem:[#allocation2 + $0x32] sm:$0xff]
        %v1247 = vld [vmem:[#allocation2 + $0x3a] sm:$0xff]
        %v1248 = vld [vmem:[#allocation2 + $0x42] sm:$0xff]
        %v1249 = vld [vmem:[#allocation2 + $0x4a] sm:$0xff]
        %v1250 = vld [vmem:[#allocation2 + $0x52] sm:$0xff]
        %v1251 = vld [vmem:[#allocation2 + $0x5a] sm:$0xff]
        %v1252 = vld [vmem:[#allocation2 + $0x62] sm:$0xff]
        %v1253 = vld [vmem:[#allocation2 + $0x6a] sm:$0xff]
        %v1254 = vld [vmem:[#allocation2 + $0x72] sm:$0xff]
        %v1255 = vld [vmem:[#allocation2 + $0x7a] sm:$0xff]
        %v1256 = vld [vmem:[#allocation2 + $0x82] sm:$0xff]
        %v1257 = vld [vmem:[#allocation2 + $0x8a] sm:$0xff]
        %v1258 = vld [vmem:[#allocation2 + $0x92] sm:$0xff]
        %v1259 = vld [vmem:[#allocation2 + $0x9a] sm:$0xff]
        %v1260 = vld [vmem:[#allocation2 + $0xa2] sm:$0xff]
        %v1261 = vld [vmem:[#allocation2 + $0xaa] sm:$0xff]
        %v1262 = vld [vmem:[#allocation2 + $0xb2] sm:$0xff]
        %v1263 = vld [vmem:[#allocation2 + $0xba] sm:$0xff]
        %v1264 = vld [vmem:[#allocation2 + $0xc2] sm:$0xff]
        %v1265 = vld [vmem:[#allocation2 + $0xca] sm:$0xff]
        %v1266 = vld [vmem:[#allocation2 + $0xd2] sm:$0xff]
        %v1267 = vld [vmem:[#allocation2 + $0xda] sm:$0xff]
        %v1268 = vld [vmem:[#allocation2 + $0xe2] sm:$0xff]
        %v1269 = vld [vmem:[#allocation2 + $0xea] sm:$0xff]
        %v1270 = vld [vmem:[#allocation2 + $0xf2] sm:$0xff]
        %v1271 = vld [vmem:[#allocation2 + $0xfa] sm:$0xff]
        %v1272 = vld [vmem:[#allocation2 + $0x102] sm:$0xff]
        %v1273 = vld [vmem:[#allocation2 + $0x10a] sm:$0xff]
        %v1274 = vld [vmem:[#allocation2 + $0x112] sm:$0xff]
        %v1275 = vld [vmem:[#allocation2 + $0x11a] sm:$0xff]
        %v1276 = vld [vmem:[#allocation2 + $0x122] sm:$0xff]
        %v1277 = vld [vmem:[#allocation2 + $0x12a] sm:$0xff]
        %v1278 = vpack.c.bf16 %v1243, %v1242
        %v1279 = vpack.c.bf16 %v1245, %v1244
        %v1280 = vpack.c.bf16 %v1247, %v1246
        %v1281 = vpack.c.bf16 %v1249, %v1248
        %v1282 = vpack.c.bf16 %v1251, %v1250
        %v1283 = vpack.c.bf16 %v1253, %v1252
        %v1284 = vpack.c.bf16 %v1255, %v1254
        %v1285 = vpack.c.bf16 %v1257, %v1256
        %v1286 = vpack.c.bf16 %v1259, %v1258
        %v1287 = vpack.c.bf16 %v1261, %v1260
        %v1288 = vpack.c.bf16 %v1263, %v1262
        %v1289 = vpack.c.bf16 %v1265, %v1264
        %v1290 = vpack.c.bf16 %v1267, %v1266
        %v1291 = vpack.c.bf16 %v1269, %v1268
        %v1292 = vpack.c.bf16 %v1271, %v1270
        %v1293 = vpack.c.bf16 %v1273, %v1272
        %v1294 = vpack.c.bf16 %v1275, %v1274
        %v1295 = vpack.c.bf16 %v1277, %v1276
        %s1296 = scalar_lea.vmem %s1, 24
        %v1297 = vld [vmem:[%s1296] sm:$0xf]
        %v1298 = vld [vmem:[%s1296 + $0x4] sm:$0xf]
        %v1301 = vunpack.c.l.b16 %v1297
        %v1302 = vunpack.c.l.b16 %v1298
        %v1303 = vpack.c.b16 %v1302, %v1301
        %v1306 = vsel %vm282, %v1278, 0
        %v1309 = vsel %vm282, %v1279, 0
        %v1312 = vsel %vm282, %v1280, 0
        %v1315 = vsel %vm282, %v1281, 0
        %v1318 = vsel %vm282, %v1282, 0
        %v1321 = vsel %vm282, %v1283, 0
        %v1324 = vsel %vm282, %v1284, 0
        %v1327 = vsel %vm282, %v1285, 0
        %v1330 = vsel %vm282, %v1286, 0
        %v1333 = vsel %vm282, %v1287, 0
        %v1336 = vsel %vm282, %v1288, 0
        %v1339 = vsel %vm282, %v1289, 0
        %v1342 = vsel %vm282, %v1290, 0
        %v1345 = vsel %vm282, %v1291, 0
        %v1348 = vsel %vm282, %v1292, 0
        %v1351 = vsel %vm282, %v1293, 0
        %v1354 = vsel %vm282, %v1294, 0
        %v1357 = vsel %vm282, %v1295, 0
        %1359 = vmatprep.subr.bf16.mxu0 0
        %1360 = vmatpush1.bf16.msra.mxu0 %v1303
        %1361 = vmatprep.subr.bf16.mxu0 0
        %1362 = vmatpush1.bf16.msra.mxu0 0
        %1363 = vmatprep.subr.bf16.mxu0 0
        %1364 = vmatpush1.bf16.msra.mxu0 0
        %1365 = vmatprep.subr.bf16.mxu0 0
        %1366 = vmatpush1.bf16.msra.mxu0 0
        %1367 = vmatprep.subr.bf16.mxu0 0
        %1368 = vmatpush1.bf16.msra.mxu0 0
        %1369 = vmatprep.subr.bf16.mxu0 0
        %1370 = vmatpush1.bf16.msra.mxu0 0
        %1371 = vmatprep.subr.bf16.mxu0 0
        %1372 = vmatpush1.bf16.msra.mxu0 0
        %1373 = vmatprep.subr.bf16.mxu0 0
        %1374 = vmatpush1.bf16.msra.mxu0 0
        %1375 = vmatprep.subr.bf16.mxu0 0
        %1376 = vmatpush1.bf16.msra.mxu0 0
        %1377 = vmatprep.subr.bf16.mxu0 0
        %1378 = vmatpush1.bf16.msra.mxu0 0
        %1379 = vmatprep.subr.bf16.mxu0 0
        %1380 = vmatpush1.bf16.msra.mxu0 0
        %1381 = vmatprep.subr.bf16.mxu0 0
        %1382 = vmatpush1.bf16.msra.mxu0 0
        %1383 = vmatprep.subr.bf16.mxu0 0
        %1384 = vmatpush1.bf16.msra.mxu0 0
        %1385 = vmatprep.subr.bf16.mxu0 0
        %1386 = vmatpush1.bf16.msra.mxu0 0
        %1387 = vmatprep.subr.bf16.mxu0 0
        %1388 = vmatpush1.bf16.msra.mxu0 0
        %1389 = vmatprep.subr.bf16.mxu0 0
        %1390 = vmatpush1.bf16.msra.mxu0 0
        %1391 = vmatprep.mubr.bf16.mxu0 0
        %1392 = vmatmul.mubr.bf16.gmra.mrb[0].mxu0 %v1306
        %v1393 = vpop.f32.mrb[0].mxu0
        %v1394 = vadd.f32 0.0, %v1393
        %v1395 = vpop.f32.mrb[0].mxu0
        %v1396 = vpop.f32.mrb[0].mxu0
        %v1397 = vadd.f32 0.0, %v1396
        %v1398 = vpop.f32.mrb[0].mxu0
        %1399 = vmatprep.mubr.bf16.mxu0 0
        %1400 = vmatmul.mubr.bf16.gmra.mrb[0].mxu0 %v1309
        %v1401 = vpop.f32.mrb[0].mxu0
        %v1402 = vadd.f32 0.0, %v1401
        %v1403 = vpop.f32.mrb[0].mxu0
        %v1404 = vpop.f32.mrb[0].mxu0
        %v1405 = vadd.f32 0.0, %v1404
        %v1406 = vpop.f32.mrb[0].mxu0
        %1407 = vmatprep.mubr.bf16.mxu0 0
        %1408 = vmatmul.mubr.bf16.gmra.mrb[0].mxu0 %v1312
        %v1409 = vpop.f32.mrb[0].mxu0
        %v1410 = vadd.f32 0.0, %v1409
        %v1411 = vpop.f32.mrb[0].mxu0
        %v1412 = vpop.f32.mrb[0].mxu0
        %v1413 = vadd.f32 0.0, %v1412
        %v1414 = vpop.f32.mrb[0].mxu0
        %1415 = vmatprep.mubr.bf16.mxu0 0
        %1416 = vmatmul.mubr.bf16.gmra.mrb[0].mxu0 %v1315
        %v1417 = vpop.f32.mrb[0].mxu0
        %v1418 = vadd.f32 0.0, %v1417
        %v1419 = vpop.f32.mrb[0].mxu0
        %v1420 = vpop.f32.mrb[0].mxu0
        %v1421 = vadd.f32 0.0, %v1420
        %v1422 = vpop.f32.mrb[0].mxu0
        %1423 = vmatprep.mubr.bf16.mxu0 0
        %1424 = vmatmul.mubr.bf16.gmra.mrb[0].mxu0 %v1318
        %v1425 = vpop.f32.mrb[0].mxu0
        %v1426 = vadd.f32 0.0, %v1425
        %v1427 = vpop.f32.mrb[0].mxu0
        %v1428 = vpop.f32.mrb[0].mxu0
        %v1429 = vadd.f32 0.0, %v1428
        %v1430 = vpop.f32.mrb[0].mxu0
        %1431 = vmatprep.mubr.bf16.mxu0 0
        %1432 = vmatmul.mubr.bf16.gmra.mrb[0].mxu0 %v1321
        %v1433 = vpop.f32.mrb[0].mxu0
        %v1434 = vadd.f32 0.0, %v1433
        %v1435 = vpop.f32.mrb[0].mxu0
        %v1436 = vpop.f32.mrb[0].mxu0
        %v1437 = vadd.f32 0.0, %v1436
        %v1438 = vpop.f32.mrb[0].mxu0
        %1439 = vmatprep.mubr.bf16.mxu0 0
        %1440 = vmatmul.mubr.bf16.gmra.mrb[0].mxu0 %v1324
        %v1441 = vpop.f32.mrb[0].mxu0
        %v1442 = vadd.f32 0.0, %v1441
        %v1443 = vpop.f32.mrb[0].mxu0
        %v1444 = vpop.f32.mrb[0].mxu0
        %v1445 = vadd.f32 0.0, %v1444
        %v1446 = vpop.f32.mrb[0].mxu0
        %1447 = vmatprep.mubr.bf16.mxu0 0
        %1448 = vmatmul.mubr.bf16.gmra.mrb[0].mxu0 %v1327
        %v1449 = vpop.f32.mrb[0].mxu0
        %v1450 = vadd.f32 0.0, %v1449
        %v1451 = vpop.f32.mrb[0].mxu0
        %v1452 = vpop.f32.mrb[0].mxu0
        %v1453 = vadd.f32 0.0, %v1452
        %v1454 = vpop.f32.mrb[0].mxu0
        %1455 = vmatprep.mubr.bf16.mxu0 0
        %1456 = vmatmul.mubr.bf16.gmra.mrb[0].mxu0 %v1330
        %v1457 = vpop.f32.mrb[0].mxu0
        %v1458 = vadd.f32 0.0, %v1457
        %v1459 = vpop.f32.mrb[0].mxu0
        %v1460 = vpop.f32.mrb[0].mxu0
        %v1461 = vadd.f32 0.0, %v1460
        %v1462 = vpop.f32.mrb[0].mxu0
        %1463 = vmatprep.mubr.bf16.mxu0 0
        %1464 = vmatmul.mubr.bf16.gmra.mrb[0].mxu0 %v1333
        %v1465 = vpop.f32.mrb[0].mxu0
        %v1466 = vadd.f32 0.0, %v1465
        %v1467 = vpop.f32.mrb[0].mxu0
        %v1468 = vpop.f32.mrb[0].mxu0
        %v1469 = vadd.f32 0.0, %v1468
        %v1470 = vpop.f32.mrb[0].mxu0
        %1471 = vmatprep.mubr.bf16.mxu0 0
        %1472 = vmatmul.mubr.bf16.gmra.mrb[0].mxu0 %v1336
        %v1473 = vpop.f32.mrb[0].mxu0
        %v1474 = vadd.f32 0.0, %v1473
        %v1475 = vpop.f32.mrb[0].mxu0
        %v1476 = vpop.f32.mrb[0].mxu0
        %v1477 = vadd.f32 0.0, %v1476
        %v1478 = vpop.f32.mrb[0].mxu0
        %1479 = vmatprep.mubr.bf16.mxu0 0
        %1480 = vmatmul.mubr.bf16.gmra.mrb[0].mxu0 %v1339
        %v1481 = vpop.f32.mrb[0].mxu0
        %v1482 = vadd.f32 0.0, %v1481
        %v1483 = vpop.f32.mrb[0].mxu0
        %v1484 = vpop.f32.mrb[0].mxu0
        %v1485 = vadd.f32 0.0, %v1484
        %v1486 = vpop.f32.mrb[0].mxu0
        %1487 = vmatprep.mubr.bf16.mxu0 0
        %1488 = vmatmul.mubr.bf16.gmra.mrb[0].mxu0 %v1342
        %v1489 = vpop.f32.mrb[0].mxu0
        %v1490 = vadd.f32 0.0, %v1489
        %v1491 = vpop.f32.mrb[0].mxu0
        %v1492 = vpop.f32.mrb[0].mxu0
        %v1493 = vadd.f32 0.0, %v1492
        %v1494 = vpop.f32.mrb[0].mxu0
        %1495 = vmatprep.mubr.bf16.mxu0 0
        %1496 = vmatmul.mubr.bf16.gmra.mrb[0].mxu0 %v1345
        %v1497 = vpop.f32.mrb[0].mxu0
        %v1498 = vadd.f32 0.0, %v1497
        %v1499 = vpop.f32.mrb[0].mxu0
        %v1500 = vpop.f32.mrb[0].mxu0
        %v1501 = vadd.f32 0.0, %v1500
        %v1502 = vpop.f32.mrb[0].mxu0
        %1503 = vmatprep.mubr.bf16.mxu0 0
        %1504 = vmatmul.mubr.bf16.gmra.mrb[0].mxu0 %v1348
        %v1505 = vpop.f32.mrb[0].mxu0
        %v1506 = vadd.f32 0.0, %v1505
        %v1507 = vpop.f32.mrb[0].mxu0
        %v1508 = vpop.f32.mrb[0].mxu0
        %v1509 = vadd.f32 0.0, %v1508
        %v1510 = vpop.f32.mrb[0].mxu0
        %1511 = vmatprep.mubr.bf16.mxu0 0
        %1512 = vmatmul.mubr.bf16.gmra.mrb[0].mxu0 %v1351
        %v1513 = vpop.f32.mrb[0].mxu0
        %v1514 = vadd.f32 0.0, %v1513
        %v1515 = vpop.f32.mrb[0].mxu0
        %v1516 = vpop.f32.mrb[0].mxu0
        %v1517 = vadd.f32 0.0, %v1516
        %v1518 = vpop.f32.mrb[0].mxu0
        %1519 = vmatprep.mubr.bf16.mxu0 0
        %1520 = vmatmul.mubr.bf16.gmra.mrb[0].mxu0 %v1354
        %v1521 = vpop.f32.mrb[0].mxu0
        %v1522 = vadd.f32 0.0, %v1521
        %v1523 = vpop.f32.mrb[0].mxu0
        %v1524 = vpop.f32.mrb[0].mxu0
        %v1525 = vadd.f32 0.0, %v1524
        %v1526 = vpop.f32.mrb[0].mxu0
        %1527 = vmatprep.mubr.bf16.mxu0 0
        %1528 = vmatmul.mubr.bf16.gmra.mrb[0].mxu0 %v1357
        %v1529 = vpop.f32.mrb[0].mxu0
        %v1530 = vadd.f32 0.0, %v1529
        %v1531 = vpop.f32.mrb[0].mxu0
        %v1532 = vpop.f32.mrb[0].mxu0
        %v1533 = vadd.f32 0.0, %v1532
        %v1534 = vpop.f32.mrb[0].mxu0
        %1535 = vdwg.mxu0
        %v1536 = vadd.f32 %v1206, %v1394
        %v1537 = vadd.f32 %v1207, %v1397
        %v1538 = vadd.f32 %v1208, %v1402
        %v1539 = vadd.f32 %v1209, %v1405
        %v1540 = vadd.f32 %v1210, %v1410
        %v1541 = vadd.f32 %v1211, %v1413
        %v1542 = vadd.f32 %v1212, %v1418
        %v1543 = vadd.f32 %v1213, %v1421
        %v1544 = vadd.f32 %v1214, %v1426
        %v1545 = vadd.f32 %v1215, %v1429
        %v1546 = vadd.f32 %v1216, %v1434
        %v1547 = vadd.f32 %v1217, %v1437
        %v1548 = vadd.f32 %v1218, %v1442
        %v1549 = vadd.f32 %v1219, %v1445
        %v1550 = vadd.f32 %v1220, %v1450
        %v1551 = vadd.f32 %v1221, %v1453
        %v1552 = vadd.f32 %v1222, %v1458
        %v1553 = vadd.f32 %v1223, %v1461
        %v1554 = vadd.f32 %v1224, %v1466
        %v1555 = vadd.f32 %v1225, %v1469
        %v1556 = vadd.f32 %v1226, %v1474
        %v1557 = vadd.f32 %v1227, %v1477
        %v1558 = vadd.f32 %v1228, %v1482
        %v1559 = vadd.f32 %v1229, %v1485
        %v1560 = vadd.f32 %v1230, %v1490
        %v1561 = vadd.f32 %v1231, %v1493
        %v1562 = vadd.f32 %v1232, %v1498
        %v1563 = vadd.f32 %v1233, %v1501
        %v1564 = vadd.f32 %v1234, %v1506
        %v1565 = vadd.f32 %v1235, %v1509
        %v1566 = vadd.f32 %v1236, %v1514
        %v1567 = vadd.f32 %v1237, %v1517
        %v1568 = vadd.f32 %v1238, %v1522
        %v1569 = vadd.f32 %v1239, %v1525
        %v1570 = vadd.f32 %v1240, %v1530
        %v1571 = vadd.f32 %v1241, %v1533
        %v1572 = vld [vmem:[#allocation2 + $0x13] sm:$0xff]
        %v1573 = vld [vmem:[#allocation2 + $0x1b] sm:$0xff]
        %v1574 = vld [vmem:[#allocation2 + $0x23] sm:$0xff]
        %v1575 = vld [vmem:[#allocation2 + $0x2b] sm:$0xff]
        %v1576 = vld [vmem:[#allocation2 + $0x33] sm:$0xff]
        %v1577 = vld [vmem:[#allocation2 + $0x3b] sm:$0xff]
        %v1578 = vld [vmem:[#allocation2 + $0x43] sm:$0xff]
        %v1579 = vld [vmem:[#allocation2 + $0x4b] sm:$0xff]
        %v1580 = vld [vmem:[#allocation2 + $0x53] sm:$0xff]
        %v1581 = vld [vmem:[#allocation2 + $0x5b] sm:$0xff]
        %v1582 = vld [vmem:[#allocation2 + $0x63] sm:$0xff]
        %v1583 = vld [vmem:[#allocation2 + $0x6b] sm:$0xff]
        %v1584 = vld [vmem:[#allocation2 + $0x73] sm:$0xff]
        %v1585 = vld [vmem:[#allocation2 + $0x7b] sm:$0xff]
        %v1586 = vld [vmem:[#allocation2 + $0x83] sm:$0xff]
        %v1587 = vld [vmem:[#allocation2 + $0x8b] sm:$0xff]
        %v1588 = vld [vmem:[#allocation2 + $0x93] sm:$0xff]
        %v1589 = vld [vmem:[#allocation2 + $0x9b] sm:$0xff]
        %v1590 = vld [vmem:[#allocation2 + $0xa3] sm:$0xff]
        %v1591 = vld [vmem:[#allocation2 + $0xab] sm:$0xff]
        %v1592 = vld [vmem:[#allocation2 + $0xb3] sm:$0xff]
        %v1593 = vld [vmem:[#allocation2 + $0xbb] sm:$0xff]
        %v1594 = vld [vmem:[#allocation2 + $0xc3] sm:$0xff]
        %v1595 = vld [vmem:[#allocation2 + $0xcb] sm:$0xff]
        %v1596 = vld [vmem:[#allocation2 + $0xd3] sm:$0xff]
        %v1597 = vld [vmem:[#allocation2 + $0xdb] sm:$0xff]
        %v1598 = vld [vmem:[#allocation2 + $0xe3] sm:$0xff]
        %v1599 = vld [vmem:[#allocation2 + $0xeb] sm:$0xff]
        %v1600 = vld [vmem:[#allocation2 + $0xf3] sm:$0xff]
        %v1601 = vld [vmem:[#allocation2 + $0xfb] sm:$0xff]
        %v1602 = vld [vmem:[#allocation2 + $0x103] sm:$0xff]
        %v1603 = vld [vmem:[#allocation2 + $0x10b] sm:$0xff]
        %v1604 = vld [vmem:[#allocation2 + $0x113] sm:$0xff]
        %v1605 = vld [vmem:[#allocation2 + $0x11b] sm:$0xff]
        %v1606 = vld [vmem:[#allocation2 + $0x123] sm:$0xff]
        %v1607 = vld [vmem:[#allocation2 + $0x12b] sm:$0xff]
        %v1608 = vpack.c.bf16 %v1573, %v1572
        %v1609 = vpack.c.bf16 %v1575, %v1574
        %v1610 = vpack.c.bf16 %v1577, %v1576
        %v1611 = vpack.c.bf16 %v1579, %v1578
        %v1612 = vpack.c.bf16 %v1581, %v1580
        %v1613 = vpack.c.bf16 %v1583, %v1582
        %v1614 = vpack.c.bf16 %v1585, %v1584
        %v1615 = vpack.c.bf16 %v1587, %v1586
        %v1616 = vpack.c.bf16 %v1589, %v1588
        %v1617 = vpack.c.bf16 %v1591, %v1590
        %v1618 = vpack.c.bf16 %v1593, %v1592
        %v1619 = vpack.c.bf16 %v1595, %v1594
        %v1620 = vpack.c.bf16 %v1597, %v1596
        %v1621 = vpack.c.bf16 %v1599, %v1598
        %v1622 = vpack.c.bf16 %v1601, %v1600
        %v1623 = vpack.c.bf16 %v1603, %v1602
        %v1624 = vpack.c.bf16 %v1605, %v1604
        %v1625 = vpack.c.bf16 %v1607, %v1606
        %s1626 = scalar_lea.vmem %s1, 32
        %v1627 = vld [vmem:[%s1626] sm:$0xf]
        %v1628 = vld [vmem:[%s1626 + $0x4] sm:$0xf]
        %v1631 = vunpack.c.l.b16 %v1627
        %v1632 = vunpack.c.l.b16 %v1628
        %v1633 = vpack.c.b16 %v1632, %v1631
        %v1636 = vsel %vm282, %v1608, 0
        %v1639 = vsel %vm282, %v1609, 0
        %v1642 = vsel %vm282, %v1610, 0
        %v1645 = vsel %vm282, %v1611, 0
        %v1648 = vsel %vm282, %v1612, 0
        %v1651 = vsel %vm282, %v1613, 0
        %v1654 = vsel %vm282, %v1614, 0
        %v1657 = vsel %vm282, %v1615, 0
        %v1660 = vsel %vm282, %v1616, 0
        %v1663 = vsel %vm282, %v1617, 0
        %v1666 = vsel %vm282, %v1618, 0
        %v1669 = vsel %vm282, %v1619, 0
        %v1672 = vsel %vm282, %v1620, 0
        %v1675 = vsel %vm282, %v1621, 0
        %v1678 = vsel %vm282, %v1622, 0
        %v1681 = vsel %vm282, %v1623, 0
        %v1684 = vsel %vm282, %v1624, 0
        %v1687 = vsel %vm282, %v1625, 0
        %1689 = vmatprep.subr.bf16.mxu0 0
        %1690 = vmatpush1.bf16.msra.mxu0 %v1633
        %1691 = vmatprep.subr.bf16.mxu0 0
        %1692 = vmatpush1.bf16.msra.mxu0 0
        %1693 = vmatprep.subr.bf16.mxu0 0
        %1694 = vmatpush1.bf16.msra.mxu0 0
        %1695 = vmatprep.subr.bf16.mxu0 0
        %1696 = vmatpush1.bf16.msra.mxu0 0
        %1697 = vmatprep.subr.bf16.mxu0 0
        %1698 = vmatpush1.bf16.msra.mxu0 0
        %1699 = vmatprep.subr.bf16.mxu0 0
        %1700 = vmatpush1.bf16.msra.mxu0 0
        %1701 = vmatprep.subr.bf16.mxu0 0
        %1702 = vmatpush1.bf16.msra.mxu0 0
        %1703 = vmatprep.subr.bf16.mxu0 0
        %1704 = vmatpush1.bf16.msra.mxu0 0
        %1705 = vmatprep.subr.bf16.mxu0 0
        %1706 = vmatpush1.bf16.msra.mxu0 0
        %1707 = vmatprep.subr.bf16.mxu0 0
        %1708 = vmatpush1.bf16.msra.mxu0 0
        %1709 = vmatprep.subr.bf16.mxu0 0
        %1710 = vmatpush1.bf16.msra.mxu0 0
        %1711 = vmatprep.subr.bf16.mxu0 0
        %1712 = vmatpush1.bf16.msra.mxu0 0
        %1713 = vmatprep.subr.bf16.mxu0 0
        %1714 = vmatpush1.bf16.msra.mxu0 0
        %1715 = vmatprep.subr.bf16.mxu0 0
        %1716 = vmatpush1.bf16.msra.mxu0 0
        %1717 = vmatprep.subr.bf16.mxu0 0
        %1718 = vmatpush1.bf16.msra.mxu0 0
        %1719 = vmatprep.subr.bf16.mxu0 0
        %1720 = vmatpush1.bf16.msra.mxu0 0
        %1721 = vmatprep.mubr.bf16.mxu0 0
        %1722 = vmatmul.mubr.bf16.gmra.mrb[0].mxu0 %v1636
        %v1723 = vpop.f32.mrb[0].mxu0
        %v1724 = vadd.f32 0.0, %v1723
        %v1725 = vpop.f32.mrb[0].mxu0
        %v1726 = vpop.f32.mrb[0].mxu0
        %v1727 = vadd.f32 0.0, %v1726
        %v1728 = vpop.f32.mrb[0].mxu0
        %1729 = vmatprep.mubr.bf16.mxu0 0
        %1730 = vmatmul.mubr.bf16.gmra.mrb[0].mxu0 %v1639
        %v1731 = vpop.f32.mrb[0].mxu0
        %v1732 = vadd.f32 0.0, %v1731
        %v1733 = vpop.f32.mrb[0].mxu0
        %v1734 = vpop.f32.mrb[0].mxu0
        %v1735 = vadd.f32 0.0, %v1734
        %v1736 = vpop.f32.mrb[0].mxu0
        %1737 = vmatprep.mubr.bf16.mxu0 0
        %1738 = vmatmul.mubr.bf16.gmra.mrb[0].mxu0 %v1642
        %v1739 = vpop.f32.mrb[0].mxu0
        %v1740 = vadd.f32 0.0, %v1739
        %v1741 = vpop.f32.mrb[0].mxu0
        %v1742 = vpop.f32.mrb[0].mxu0
        %v1743 = vadd.f32 0.0, %v1742
        %v1744 = vpop.f32.mrb[0].mxu0
        %1745 = vmatprep.mubr.bf16.mxu0 0
        %1746 = vmatmul.mubr.bf16.gmra.mrb[0].mxu0 %v1645
        %v1747 = vpop.f32.mrb[0].mxu0
        %v1748 = vadd.f32 0.0, %v1747
        %v1749 = vpop.f32.mrb[0].mxu0
        %v1750 = vpop.f32.mrb[0].mxu0
        %v1751 = vadd.f32 0.0, %v1750
        %v1752 = vpop.f32.mrb[0].mxu0
        %1753 = vmatprep.mubr.bf16.mxu0 0
        %1754 = vmatmul.mubr.bf16.gmra.mrb[0].mxu0 %v1648
        %v1755 = vpop.f32.mrb[0].mxu0
        %v1756 = vadd.f32 0.0, %v1755
        %v1757 = vpop.f32.mrb[0].mxu0
        %v1758 = vpop.f32.mrb[0].mxu0
        %v1759 = vadd.f32 0.0, %v1758
        %v1760 = vpop.f32.mrb[0].mxu0
        %1761 = vmatprep.mubr.bf16.mxu0 0
        %1762 = vmatmul.mubr.bf16.gmra.mrb[0].mxu0 %v1651
        %v1763 = vpop.f32.mrb[0].mxu0
        %v1764 = vadd.f32 0.0, %v1763
        %v1765 = vpop.f32.mrb[0].mxu0
        %v1766 = vpop.f32.mrb[0].mxu0
        %v1767 = vadd.f32 0.0, %v1766
        %v1768 = vpop.f32.mrb[0].mxu0
        %1769 = vmatprep.mubr.bf16.mxu0 0
        %1770 = vmatmul.mubr.bf16.gmra.mrb[0].mxu0 %v1654
        %v1771 = vpop.f32.mrb[0].mxu0
        %v1772 = vadd.f32 0.0, %v1771
        %v1773 = vpop.f32.mrb[0].mxu0
        %v1774 = vpop.f32.mrb[0].mxu0
        %v1775 = vadd.f32 0.0, %v1774
        %v1776 = vpop.f32.mrb[0].mxu0
        %1777 = vmatprep.mubr.bf16.mxu0 0
        %1778 = vmatmul.mubr.bf16.gmra.mrb[0].mxu0 %v1657
        %v1779 = vpop.f32.mrb[0].mxu0
        %v1780 = vadd.f32 0.0, %v1779
        %v1781 = vpop.f32.mrb[0].mxu0
        %v1782 = vpop.f32.mrb[0].mxu0
        %v1783 = vadd.f32 0.0, %v1782
        %v1784 = vpop.f32.mrb[0].mxu0
        %1785 = vmatprep.mubr.bf16.mxu0 0
        %1786 = vmatmul.mubr.bf16.gmra.mrb[0].mxu0 %v1660
        %v1787 = vpop.f32.mrb[0].mxu0
        %v1788 = vadd.f32 0.0, %v1787
        %v1789 = vpop.f32.mrb[0].mxu0
        %v1790 = vpop.f32.mrb[0].mxu0
        %v1791 = vadd.f32 0.0, %v1790
        %v1792 = vpop.f32.mrb[0].mxu0
        %1793 = vmatprep.mubr.bf16.mxu0 0
        %1794 = vmatmul.mubr.bf16.gmra.mrb[0].mxu0 %v1663
        %v1795 = vpop.f32.mrb[0].mxu0
        %v1796 = vadd.f32 0.0, %v1795
        %v1797 = vpop.f32.mrb[0].mxu0
        %v1798 = vpop.f32.mrb[0].mxu0
        %v1799 = vadd.f32 0.0, %v1798
        %v1800 = vpop.f32.mrb[0].mxu0
        %1801 = vmatprep.mubr.bf16.mxu0 0
        %1802 = vmatmul.mubr.bf16.gmra.mrb[0].mxu0 %v1666
        %v1803 = vpop.f32.mrb[0].mxu0
        %v1804 = vadd.f32 0.0, %v1803
        %v1805 = vpop.f32.mrb[0].mxu0
        %v1806 = vpop.f32.mrb[0].mxu0
        %v1807 = vadd.f32 0.0, %v1806
        %v1808 = vpop.f32.mrb[0].mxu0
        %1809 = vmatprep.mubr.bf16.mxu0 0
        %1810 = vmatmul.mubr.bf16.gmra.mrb[0].mxu0 %v1669
        %v1811 = vpop.f32.mrb[0].mxu0
        %v1812 = vadd.f32 0.0, %v1811
        %v1813 = vpop.f32.mrb[0].mxu0
        %v1814 = vpop.f32.mrb[0].mxu0
        %v1815 = vadd.f32 0.0, %v1814
        %v1816 = vpop.f32.mrb[0].mxu0
        %1817 = vmatprep.mubr.bf16.mxu0 0
        %1818 = vmatmul.mubr.bf16.gmra.mrb[0].mxu0 %v1672
        %v1819 = vpop.f32.mrb[0].mxu0
        %v1820 = vadd.f32 0.0, %v1819
        %v1821 = vpop.f32.mrb[0].mxu0
        %v1822 = vpop.f32.mrb[0].mxu0
        %v1823 = vadd.f32 0.0, %v1822
        %v1824 = vpop.f32.mrb[0].mxu0
        %1825 = vmatprep.mubr.bf16.mxu0 0
        %1826 = vmatmul.mubr.bf16.gmra.mrb[0].mxu0 %v1675
        %v1827 = vpop.f32.mrb[0].mxu0
        %v1828 = vadd.f32 0.0, %v1827
        %v1829 = vpop.f32.mrb[0].mxu0
        %v1830 = vpop.f32.mrb[0].mxu0
        %v1831 = vadd.f32 0.0, %v1830
        %v1832 = vpop.f32.mrb[0].mxu0
        %1833 = vmatprep.mubr.bf16.mxu0 0
        %1834 = vmatmul.mubr.bf16.gmra.mrb[0].mxu0 %v1678
        %v1835 = vpop.f32.mrb[0].mxu0
        %v1836 = vadd.f32 0.0, %v1835
        %v1837 = vpop.f32.mrb[0].mxu0
        %v1838 = vpop.f32.mrb[0].mxu0
        %v1839 = vadd.f32 0.0, %v1838
        %v1840 = vpop.f32.mrb[0].mxu0
        %1841 = vmatprep.mubr.bf16.mxu0 0
        %1842 = vmatmul.mubr.bf16.gmra.mrb[0].mxu0 %v1681
        %v1843 = vpop.f32.mrb[0].mxu0
        %v1844 = vadd.f32 0.0, %v1843
        %v1845 = vpop.f32.mrb[0].mxu0
        %v1846 = vpop.f32.mrb[0].mxu0
        %v1847 = vadd.f32 0.0, %v1846
        %v1848 = vpop.f32.mrb[0].mxu0
        %1849 = vmatprep.mubr.bf16.mxu0 0
        %1850 = vmatmul.mubr.bf16.gmra.mrb[0].mxu0 %v1684
        %v1851 = vpop.f32.mrb[0].mxu0
        %v1852 = vadd.f32 0.0, %v1851
        %v1853 = vpop.f32.mrb[0].mxu0
        %v1854 = vpop.f32.mrb[0].mxu0
        %v1855 = vadd.f32 0.0, %v1854
        %v1856 = vpop.f32.mrb[0].mxu0
        %1857 = vmatprep.mubr.bf16.mxu0 0
        %1858 = vmatmul.mubr.bf16.gmra.mrb[0].mxu0 %v1687
        %v1859 = vpop.f32.mrb[0].mxu0
        %v1860 = vadd.f32 0.0, %v1859
        %v1861 = vpop.f32.mrb[0].mxu0
        %v1862 = vpop.f32.mrb[0].mxu0
        %v1863 = vadd.f32 0.0, %v1862
        %v1864 = vpop.f32.mrb[0].mxu0
        %1865 = vdwg.mxu0
        %v1866 = vadd.f32 %v1536, %v1724
        %v1867 = vadd.f32 %v1537, %v1727
        %v1868 = vadd.f32 %v1538, %v1732
        %v1869 = vadd.f32 %v1539, %v1735
        %v1870 = vadd.f32 %v1540, %v1740
        %v1871 = vadd.f32 %v1541, %v1743
        %v1872 = vadd.f32 %v1542, %v1748
        %v1873 = vadd.f32 %v1543, %v1751
        %v1874 = vadd.f32 %v1544, %v1756
        %v1875 = vadd.f32 %v1545, %v1759
        %v1876 = vadd.f32 %v1546, %v1764
        %v1877 = vadd.f32 %v1547, %v1767
        %v1878 = vadd.f32 %v1548, %v1772
        %v1879 = vadd.f32 %v1549, %v1775
        %v1880 = vadd.f32 %v1550, %v1780
        %v1881 = vadd.f32 %v1551, %v1783
        %v1882 = vadd.f32 %v1552, %v1788
        %v1883 = vadd.f32 %v1553, %v1791
        %v1884 = vadd.f32 %v1554, %v1796
        %v1885 = vadd.f32 %v1555, %v1799
        %v1886 = vadd.f32 %v1556, %v1804
        %v1887 = vadd.f32 %v1557, %v1807
        %v1888 = vadd.f32 %v1558, %v1812
        %v1889 = vadd.f32 %v1559, %v1815
        %v1890 = vadd.f32 %v1560, %v1820
        %v1891 = vadd.f32 %v1561, %v1823
        %v1892 = vadd.f32 %v1562, %v1828
        %v1893 = vadd.f32 %v1563, %v1831
        %v1894 = vadd.f32 %v1564, %v1836
        %v1895 = vadd.f32 %v1565, %v1839
        %v1896 = vadd.f32 %v1566, %v1844
        %v1897 = vadd.f32 %v1567, %v1847
        %v1898 = vadd.f32 %v1568, %v1852
        %v1899 = vadd.f32 %v1569, %v1855
        %v1900 = vadd.f32 %v1570, %v1860
        %v1901 = vadd.f32 %v1571, %v1863
        %v1902 = vld [vmem:[#allocation2 + $0x14] sm:$0xff]
        %v1903 = vld [vmem:[#allocation2 + $0x1c] sm:$0xff]
        %v1904 = vld [vmem:[#allocation2 + $0x24] sm:$0xff]
        %v1905 = vld [vmem:[#allocation2 + $0x2c] sm:$0xff]
        %v1906 = vld [vmem:[#allocation2 + $0x34] sm:$0xff]
        %v1907 = vld [vmem:[#allocation2 + $0x3c] sm:$0xff]
        %v1908 = vld [vmem:[#allocation2 + $0x44] sm:$0xff]
        %v1909 = vld [vmem:[#allocation2 + $0x4c] sm:$0xff]
        %v1910 = vld [vmem:[#allocation2 + $0x54] sm:$0xff]
        %v1911 = vld [vmem:[#allocation2 + $0x5c] sm:$0xff]
        %v1912 = vld [vmem:[#allocation2 + $0x64] sm:$0xff]
        %v1913 = vld [vmem:[#allocation2 + $0x6c] sm:$0xff]
        %v1914 = vld [vmem:[#allocation2 + $0x74] sm:$0xff]
        %v1915 = vld [vmem:[#allocation2 + $0x7c] sm:$0xff]
        %v1916 = vld [vmem:[#allocation2 + $0x84] sm:$0xff]
        %v1917 = vld [vmem:[#allocation2 + $0x8c] sm:$0xff]
        %v1918 = vld [vmem:[#allocation2 + $0x94] sm:$0xff]
        %v1919 = vld [vmem:[#allocation2 + $0x9c] sm:$0xff]
        %v1920 = vld [vmem:[#allocation2 + $0xa4] sm:$0xff]
        %v1921 = vld [vmem:[#allocation2 + $0xac] sm:$0xff]
        %v1922 = vld [vmem:[#allocation2 + $0xb4] sm:$0xff]
        %v1923 = vld [vmem:[#allocation2 + $0xbc] sm:$0xff]
        %v1924 = vld [vmem:[#allocation2 + $0xc4] sm:$0xff]
        %v1925 = vld [vmem:[#allocation2 + $0xcc] sm:$0xff]
        %v1926 = vld [vmem:[#allocation2 + $0xd4] sm:$0xff]
        %v1927 = vld [vmem:[#allocation2 + $0xdc] sm:$0xff]
        %v1928 = vld [vmem:[#allocation2 + $0xe4] sm:$0xff]
        %v1929 = vld [vmem:[#allocation2 + $0xec] sm:$0xff]
        %v1930 = vld [vmem:[#allocation2 + $0xf4] sm:$0xff]
        %v1931 = vld [vmem:[#allocation2 + $0xfc] sm:$0xff]
        %v1932 = vld [vmem:[#allocation2 + $0x104] sm:$0xff]
        %v1933 = vld [vmem:[#allocation2 + $0x10c] sm:$0xff]
        %v1934 = vld [vmem:[#allocation2 + $0x114] sm:$0xff]
        %v1935 = vld [vmem:[#allocation2 + $0x11c] sm:$0xff]
        %v1936 = vld [vmem:[#allocation2 + $0x124] sm:$0xff]
        %v1937 = vld [vmem:[#allocation2 + $0x12c] sm:$0xff]
        %v1938 = vpack.c.bf16 %v1903, %v1902
        %v1939 = vpack.c.bf16 %v1905, %v1904
        %v1940 = vpack.c.bf16 %v1907, %v1906
        %v1941 = vpack.c.bf16 %v1909, %v1908
        %v1942 = vpack.c.bf16 %v1911, %v1910
        %v1943 = vpack.c.bf16 %v1913, %v1912
        %v1944 = vpack.c.bf16 %v1915, %v1914
        %v1945 = vpack.c.bf16 %v1917, %v1916
        %v1946 = vpack.c.bf16 %v1919, %v1918
        %v1947 = vpack.c.bf16 %v1921, %v1920
        %v1948 = vpack.c.bf16 %v1923, %v1922
        %v1949 = vpack.c.bf16 %v1925, %v1924
        %v1950 = vpack.c.bf16 %v1927, %v1926
        %v1951 = vpack.c.bf16 %v1929, %v1928
        %v1952 = vpack.c.bf16 %v1931, %v1930
        %v1953 = vpack.c.bf16 %v1933, %v1932
        %v1954 = vpack.c.bf16 %v1935, %v1934
        %v1955 = vpack.c.bf16 %v1937, %v1936
        %s1956 = scalar_lea.vmem %s1, 40
        %v1957 = vld [vmem:[%s1956] sm:$0xf]
        %v1958 = vld [vmem:[%s1956 + $0x4] sm:$0xf]
        %v1961 = vunpack.c.l.b16 %v1957
        %v1962 = vunpack.c.l.b16 %v1958
        %v1963 = vpack.c.b16 %v1962, %v1961
        %v1966 = vsel %vm282, %v1938, 0
        %v1969 = vsel %vm282, %v1939, 0
        %v1972 = vsel %vm282, %v1940, 0
        %v1975 = vsel %vm282, %v1941, 0
        %v1978 = vsel %vm282, %v1942, 0
        %v1981 = vsel %vm282, %v1943, 0
        %v1984 = vsel %vm282, %v1944, 0
        %v1987 = vsel %vm282, %v1945, 0
        %v1990 = vsel %vm282, %v1946, 0
        %v1993 = vsel %vm282, %v1947, 0
        %v1996 = vsel %vm282, %v1948, 0
        %v1999 = vsel %vm282, %v1949, 0
        %v2002 = vsel %vm282, %v1950, 0
        %v2005 = vsel %vm282, %v1951, 0
        %v2008 = vsel %vm282, %v1952, 0
        %v2011 = vsel %vm282, %v1953, 0
        %v2014 = vsel %vm282, %v1954, 0
        %v2017 = vsel %vm282, %v1955, 0
        %2019 = vmatprep.subr.bf16.mxu0 0
        %2020 = vmatpush1.bf16.msra.mxu0 %v1963
        %2021 = vmatprep.subr.bf16.mxu0 0
        %2022 = vmatpush1.bf16.msra.mxu0 0
        %2023 = vmatprep.subr.bf16.mxu0 0
        %2024 = vmatpush1.bf16.msra.mxu0 0
        %2025 = vmatprep.subr.bf16.mxu0 0
        %2026 = vmatpush1.bf16.msra.mxu0 0
        %2027 = vmatprep.subr.bf16.mxu0 0
        %2028 = vmatpush1.bf16.msra.mxu0 0
        %2029 = vmatprep.subr.bf16.mxu0 0
        %2030 = vmatpush1.bf16.msra.mxu0 0
        %2031 = vmatprep.subr.bf16.mxu0 0
        %2032 = vmatpush1.bf16.msra.mxu0 0
        %2033 = vmatprep.subr.bf16.mxu0 0
        %2034 = vmatpush1.bf16.msra.mxu0 0
        %2035 = vmatprep.subr.bf16.mxu0 0
        %2036 = vmatpush1.bf16.msra.mxu0 0
        %2037 = vmatprep.subr.bf16.mxu0 0
        %2038 = vmatpush1.bf16.msra.mxu0 0
        %2039 = vmatprep.subr.bf16.mxu0 0
        %2040 = vmatpush1.bf16.msra.mxu0 0
        %2041 = vmatprep.subr.bf16.mxu0 0
        %2042 = vmatpush1.bf16.msra.mxu0 0
        %2043 = vmatprep.subr.bf16.mxu0 0
        %2044 = vmatpush1.bf16.msra.mxu0 0
        %2045 = vmatprep.subr.bf16.mxu0 0
        %2046 = vmatpush1.bf16.msra.mxu0 0
        %2047 = vmatprep.subr.bf16.mxu0 0
        %2048 = vmatpush1.bf16.msra.mxu0 0
        %2049 = vmatprep.subr.bf16.mxu0 0
        %2050 = vmatpush1.bf16.msra.mxu0 0
        %2051 = vmatprep.mubr.bf16.mxu0 0
        %2052 = vmatmul.mubr.bf16.gmra.mrb[0].mxu0 %v1966
        %v2053 = vpop.f32.mrb[0].mxu0
        %v2054 = vadd.f32 0.0, %v2053
        %v2055 = vpop.f32.mrb[0].mxu0
        %v2056 = vpop.f32.mrb[0].mxu0
        %v2057 = vadd.f32 0.0, %v2056
        %v2058 = vpop.f32.mrb[0].mxu0
        %2059 = vmatprep.mubr.bf16.mxu0 0
        %2060 = vmatmul.mubr.bf16.gmra.mrb[0].mxu0 %v1969
        %v2061 = vpop.f32.mrb[0].mxu0
        %v2062 = vadd.f32 0.0, %v2061
        %v2063 = vpop.f32.mrb[0].mxu0
        %v2064 = vpop.f32.mrb[0].mxu0
        %v2065 = vadd.f32 0.0, %v2064
        %v2066 = vpop.f32.mrb[0].mxu0
        %2067 = vmatprep.mubr.bf16.mxu0 0
        %2068 = vmatmul.mubr.bf16.gmra.mrb[0].mxu0 %v1972
        %v2069 = vpop.f32.mrb[0].mxu0
        %v2070 = vadd.f32 0.0, %v2069
        %v2071 = vpop.f32.mrb[0].mxu0
        %v2072 = vpop.f32.mrb[0].mxu0
        %v2073 = vadd.f32 0.0, %v2072
        %v2074 = vpop.f32.mrb[0].mxu0
        %2075 = vmatprep.mubr.bf16.mxu0 0
        %2076 = vmatmul.mubr.bf16.gmra.mrb[0].mxu0 %v1975
        %v2077 = vpop.f32.mrb[0].mxu0
        %v2078 = vadd.f32 0.0, %v2077
        %v2079 = vpop.f32.mrb[0].mxu0
        %v2080 = vpop.f32.mrb[0].mxu0
        %v2081 = vadd.f32 0.0, %v2080
        %v2082 = vpop.f32.mrb[0].mxu0
        %2083 = vmatprep.mubr.bf16.mxu0 0
        %2084 = vmatmul.mubr.bf16.gmra.mrb[0].mxu0 %v1978
        %v2085 = vpop.f32.mrb[0].mxu0
        %v2086 = vadd.f32 0.0, %v2085
        %v2087 = vpop.f32.mrb[0].mxu0
        %v2088 = vpop.f32.mrb[0].mxu0
        %v2089 = vadd.f32 0.0, %v2088
        %v2090 = vpop.f32.mrb[0].mxu0
        %2091 = vmatprep.mubr.bf16.mxu0 0
        %2092 = vmatmul.mubr.bf16.gmra.mrb[0].mxu0 %v1981
        %v2093 = vpop.f32.mrb[0].mxu0
        %v2094 = vadd.f32 0.0, %v2093
        %v2095 = vpop.f32.mrb[0].mxu0
        %v2096 = vpop.f32.mrb[0].mxu0
        %v2097 = vadd.f32 0.0, %v2096
        %v2098 = vpop.f32.mrb[0].mxu0
        %2099 = vmatprep.mubr.bf16.mxu0 0
        %2100 = vmatmul.mubr.bf16.gmra.mrb[0].mxu0 %v1984
        %v2101 = vpop.f32.mrb[0].mxu0
        %v2102 = vadd.f32 0.0, %v2101
        %v2103 = vpop.f32.mrb[0].mxu0
        %v2104 = vpop.f32.mrb[0].mxu0
        %v2105 = vadd.f32 0.0, %v2104
        %v2106 = vpop.f32.mrb[0].mxu0
        %2107 = vmatprep.mubr.bf16.mxu0 0
        %2108 = vmatmul.mubr.bf16.gmra.mrb[0].mxu0 %v1987
        %v2109 = vpop.f32.mrb[0].mxu0
        %v2110 = vadd.f32 0.0, %v2109
        %v2111 = vpop.f32.mrb[0].mxu0
        %v2112 = vpop.f32.mrb[0].mxu0
        %v2113 = vadd.f32 0.0, %v2112
        %v2114 = vpop.f32.mrb[0].mxu0
        %2115 = vmatprep.mubr.bf16.mxu0 0
        %2116 = vmatmul.mubr.bf16.gmra.mrb[0].mxu0 %v1990
        %v2117 = vpop.f32.mrb[0].mxu0
        %v2118 = vadd.f32 0.0, %v2117
        %v2119 = vpop.f32.mrb[0].mxu0
        %v2120 = vpop.f32.mrb[0].mxu0
        %v2121 = vadd.f32 0.0, %v2120
        %v2122 = vpop.f32.mrb[0].mxu0
        %2123 = vmatprep.mubr.bf16.mxu0 0
        %2124 = vmatmul.mubr.bf16.gmra.mrb[0].mxu0 %v1993
        %v2125 = vpop.f32.mrb[0].mxu0
        %v2126 = vadd.f32 0.0, %v2125
        %v2127 = vpop.f32.mrb[0].mxu0
        %v2128 = vpop.f32.mrb[0].mxu0
        %v2129 = vadd.f32 0.0, %v2128
        %v2130 = vpop.f32.mrb[0].mxu0
        %2131 = vmatprep.mubr.bf16.mxu0 0
        %2132 = vmatmul.mubr.bf16.gmra.mrb[0].mxu0 %v1996
        %v2133 = vpop.f32.mrb[0].mxu0
        %v2134 = vadd.f32 0.0, %v2133
        %v2135 = vpop.f32.mrb[0].mxu0
        %v2136 = vpop.f32.mrb[0].mxu0
        %v2137 = vadd.f32 0.0, %v2136
        %v2138 = vpop.f32.mrb[0].mxu0
        %2139 = vmatprep.mubr.bf16.mxu0 0
        %2140 = vmatmul.mubr.bf16.gmra.mrb[0].mxu0 %v1999
        %v2141 = vpop.f32.mrb[0].mxu0
        %v2142 = vadd.f32 0.0, %v2141
        %v2143 = vpop.f32.mrb[0].mxu0
        %v2144 = vpop.f32.mrb[0].mxu0
        %v2145 = vadd.f32 0.0, %v2144
        %v2146 = vpop.f32.mrb[0].mxu0
        %2147 = vmatprep.mubr.bf16.mxu0 0
        %2148 = vmatmul.mubr.bf16.gmra.mrb[0].mxu0 %v2002
        %v2149 = vpop.f32.mrb[0].mxu0
        %v2150 = vadd.f32 0.0, %v2149
        %v2151 = vpop.f32.mrb[0].mxu0
        %v2152 = vpop.f32.mrb[0].mxu0
        %v2153 = vadd.f32 0.0, %v2152
        %v2154 = vpop.f32.mrb[0].mxu0
        %2155 = vmatprep.mubr.bf16.mxu0 0
        %2156 = vmatmul.mubr.bf16.gmra.mrb[0].mxu0 %v2005
        %v2157 = vpop.f32.mrb[0].mxu0
        %v2158 = vadd.f32 0.0, %v2157
        %v2159 = vpop.f32.mrb[0].mxu0
        %v2160 = vpop.f32.mrb[0].mxu0
        %v2161 = vadd.f32 0.0, %v2160
        %v2162 = vpop.f32.mrb[0].mxu0
        %2163 = vmatprep.mubr.bf16.mxu0 0
        %2164 = vmatmul.mubr.bf16.gmra.mrb[0].mxu0 %v2008
        %v2165 = vpop.f32.mrb[0].mxu0
        %v2166 = vadd.f32 0.0, %v2165
        %v2167 = vpop.f32.mrb[0].mxu0
        %v2168 = vpop.f32.mrb[0].mxu0
        %v2169 = vadd.f32 0.0, %v2168
        %v2170 = vpop.f32.mrb[0].mxu0
        %2171 = vmatprep.mubr.bf16.mxu0 0
        %2172 = vmatmul.mubr.bf16.gmra.mrb[0].mxu0 %v2011
        %v2173 = vpop.f32.mrb[0].mxu0
        %v2174 = vadd.f32 0.0, %v2173
        %v2175 = vpop.f32.mrb[0].mxu0
        %v2176 = vpop.f32.mrb[0].mxu0
        %v2177 = vadd.f32 0.0, %v2176
        %v2178 = vpop.f32.mrb[0].mxu0
        %2179 = vmatprep.mubr.bf16.mxu0 0
        %2180 = vmatmul.mubr.bf16.gmra.mrb[0].mxu0 %v2014
        %v2181 = vpop.f32.mrb[0].mxu0
        %v2182 = vadd.f32 0.0, %v2181
        %v2183 = vpop.f32.mrb[0].mxu0
        %v2184 = vpop.f32.mrb[0].mxu0
        %v2185 = vadd.f32 0.0, %v2184
        %v2186 = vpop.f32.mrb[0].mxu0
        %2187 = vmatprep.mubr.bf16.mxu0 0
        %2188 = vmatmul.mubr.bf16.gmra.mrb[0].mxu0 %v2017
        %v2189 = vpop.f32.mrb[0].mxu0
        %v2190 = vadd.f32 0.0, %v2189
        %v2191 = vpop.f32.mrb[0].mxu0
        %v2192 = vpop.f32.mrb[0].mxu0
        %v2193 = vadd.f32 0.0, %v2192
        %v2194 = vpop.f32.mrb[0].mxu0
        %2195 = vdwg.mxu0
        %v2196 = vadd.f32 %v1866, %v2054
        %v2197 = vadd.f32 %v1867, %v2057
        %v2198 = vadd.f32 %v1868, %v2062
        %v2199 = vadd.f32 %v1869, %v2065
        %v2200 = vadd.f32 %v1870, %v2070
        %v2201 = vadd.f32 %v1871, %v2073
        %v2202 = vadd.f32 %v1872, %v2078
        %v2203 = vadd.f32 %v1873, %v2081
        %v2204 = vadd.f32 %v1874, %v2086
        %v2205 = vadd.f32 %v1875, %v2089
        %v2206 = vadd.f32 %v1876, %v2094
        %v2207 = vadd.f32 %v1877, %v2097
        %v2208 = vadd.f32 %v1878, %v2102
        %v2209 = vadd.f32 %v1879, %v2105
        %v2210 = vadd.f32 %v1880, %v2110
        %v2211 = vadd.f32 %v1881, %v2113
        %v2212 = vadd.f32 %v1882, %v2118
        %v2213 = vadd.f32 %v1883, %v2121
        %v2214 = vadd.f32 %v1884, %v2126
        %v2215 = vadd.f32 %v1885, %v2129
        %v2216 = vadd.f32 %v1886, %v2134
        %v2217 = vadd.f32 %v1887, %v2137
        %v2218 = vadd.f32 %v1888, %v2142
        %v2219 = vadd.f32 %v1889, %v2145
        %v2220 = vadd.f32 %v1890, %v2150
        %v2221 = vadd.f32 %v1891, %v2153
        %v2222 = vadd.f32 %v1892, %v2158
        %v2223 = vadd.f32 %v1893, %v2161
        %v2224 = vadd.f32 %v1894, %v2166
        %v2225 = vadd.f32 %v1895, %v2169
        %v2226 = vadd.f32 %v1896, %v2174
        %v2227 = vadd.f32 %v1897, %v2177
        %v2228 = vadd.f32 %v1898, %v2182
        %v2229 = vadd.f32 %v1899, %v2185
        %v2230 = vadd.f32 %v1900, %v2190
        %v2231 = vadd.f32 %v1901, %v2193
        %v2232 = vld [vmem:[#allocation2 + $0x24] sm:$0xff]
        %v2233 = vld [vmem:[#allocation2 + $0x2c] sm:$0xff]
        %v2234 = vld [vmem:[#allocation2 + $0x34] sm:$0xff]
        %v2235 = vld [vmem:[#allocation2 + $0x3c] sm:$0xff]
        %v2236 = vld [vmem:[#allocation2 + $0x44] sm:$0xff]
        %v2237 = vld [vmem:[#allocation2 + $0x4c] sm:$0xff]
        %v2238 = vld [vmem:[#allocation2 + $0x54] sm:$0xff]
        %v2239 = vld [vmem:[#allocation2 + $0x5c] sm:$0xff]
        %v2240 = vld [vmem:[#allocation2 + $0x64] sm:$0xff]
        %v2241 = vld [vmem:[#allocation2 + $0x6c] sm:$0xff]
        %v2242 = vld [vmem:[#allocation2 + $0x74] sm:$0xff]
        %v2243 = vld [vmem:[#allocation2 + $0x7c] sm:$0xff]
        %v2244 = vld [vmem:[#allocation2 + $0x84] sm:$0xff]
        %v2245 = vld [vmem:[#allocation2 + $0x8c] sm:$0xff]
        %v2246 = vld [vmem:[#allocation2 + $0x94] sm:$0xff]
        %v2247 = vld [vmem:[#allocation2 + $0x9c] sm:$0xff]
        %v2248 = vld [vmem:[#allocation2 + $0xa4] sm:$0xff]
        %v2249 = vld [vmem:[#allocation2 + $0xac] sm:$0xff]
        %v2250 = vld [vmem:[#allocation2 + $0xb4] sm:$0xff]
        %v2251 = vld [vmem:[#allocation2 + $0xbc] sm:$0xff]
        %v2252 = vld [vmem:[#allocation2 + $0xc4] sm:$0xff]
        %v2253 = vld [vmem:[#allocation2 + $0xcc] sm:$0xff]
        %v2254 = vld [vmem:[#allocation2 + $0xd4] sm:$0xff]
        %v2255 = vld [vmem:[#allocation2 + $0xdc] sm:$0xff]
        %v2256 = vld [vmem:[#allocation2 + $0xe4] sm:$0xff]
        %v2257 = vld [vmem:[#allocation2 + $0xec] sm:$0xff]
        %v2258 = vld [vmem:[#allocation2 + $0xf4] sm:$0xff]
        %v2259 = vld [vmem:[#allocation2 + $0xfc] sm:$0xff]
        %v2260 = vld [vmem:[#allocation2 + $0x104] sm:$0xff]
        %v2261 = vld [vmem:[#allocation2 + $0x10c] sm:$0xff]
        %v2262 = vld [vmem:[#allocation2 + $0x114] sm:$0xff]
        %v2263 = vld [vmem:[#allocation2 + $0x11c] sm:$0xff]
        %v2264 = vld [vmem:[#allocation2 + $0x124] sm:$0xff]
        %v2265 = vld [vmem:[#allocation2 + $0x12c] sm:$0xff]
        %v2266 = vld [vmem:[#allocation2 + $0x134] sm:$0xff]
        %v2267 = vld [vmem:[#allocation2 + $0x13c] sm:$0xff]
        %v2268 = vpack.c.bf16 %v2233, %v2232
        %v2269 = vpack.c.bf16 %v2235, %v2234
        %v2270 = vpack.c.bf16 %v2237, %v2236
        %v2271 = vpack.c.bf16 %v2239, %v2238
        %v2272 = vpack.c.bf16 %v2241, %v2240
        %v2273 = vpack.c.bf16 %v2243, %v2242
        %v2274 = vpack.c.bf16 %v2245, %v2244
        %v2275 = vpack.c.bf16 %v2247, %v2246
        %v2276 = vpack.c.bf16 %v2249, %v2248
        %v2277 = vpack.c.bf16 %v2251, %v2250
        %v2278 = vpack.c.bf16 %v2253, %v2252
        %v2279 = vpack.c.bf16 %v2255, %v2254
        %v2280 = vpack.c.bf16 %v2257, %v2256
        %v2281 = vpack.c.bf16 %v2259, %v2258
        %v2282 = vpack.c.bf16 %v2261, %v2260
        %v2283 = vpack.c.bf16 %v2263, %v2262
        %v2284 = vpack.c.bf16 %v2265, %v2264
        %v2285 = vpack.c.bf16 %v2267, %v2266
        %s2286 = scalar_lea.vmem %s1, 48
        %v2287 = vld [vmem:[%s2286] sm:$0xf]
        %v2288 = vld [vmem:[%s2286 + $0x4] sm:$0xf]
        %v2291 = vunpack.c.l.b16 %v2287
        %v2292 = vunpack.c.l.b16 %v2288
        %v2293 = vpack.c.b16 %v2292, %v2291
        %v2296 = vsel %vm282, %v2268, 0
        %v2299 = vsel %vm282, %v2269, 0
        %v2302 = vsel %vm282, %v2270, 0
        %v2305 = vsel %vm282, %v2271, 0
        %v2308 = vsel %vm282, %v2272, 0
        %v2311 = vsel %vm282, %v2273, 0
        %v2314 = vsel %vm282, %v2274, 0
        %v2317 = vsel %vm282, %v2275, 0
        %v2320 = vsel %vm282, %v2276, 0
        %v2323 = vsel %vm282, %v2277, 0
        %v2326 = vsel %vm282, %v2278, 0
        %v2329 = vsel %vm282, %v2279, 0
        %v2332 = vsel %vm282, %v2280, 0
        %v2335 = vsel %vm282, %v2281, 0
        %v2338 = vsel %vm282, %v2282, 0
        %v2341 = vsel %vm282, %v2283, 0
        %v2344 = vsel %vm282, %v2284, 0
        %v2347 = vsel %vm282, %v2285, 0
        %2349 = vmatprep.subr.bf16.mxu0 0
        %2350 = vmatpush1.bf16.msra.mxu0 %v2293
        %2351 = vmatprep.subr.bf16.mxu0 0
        %2352 = vmatpush1.bf16.msra.mxu0 0
        %2353 = vmatprep.subr.bf16.mxu0 0
        %2354 = vmatpush1.bf16.msra.mxu0 0
        %2355 = vmatprep.subr.bf16.mxu0 0
        %2356 = vmatpush1.bf16.msra.mxu0 0
        %2357 = vmatprep.subr.bf16.mxu0 0
        %2358 = vmatpush1.bf16.msra.mxu0 0
        %2359 = vmatprep.subr.bf16.mxu0 0
        %2360 = vmatpush1.bf16.msra.mxu0 0
        %2361 = vmatprep.subr.bf16.mxu0 0
        %2362 = vmatpush1.bf16.msra.mxu0 0
        %2363 = vmatprep.subr.bf16.mxu0 0
        %2364 = vmatpush1.bf16.msra.mxu0 0
        %2365 = vmatprep.subr.bf16.mxu0 0
        %2366 = vmatpush1.bf16.msra.mxu0 0
        %2367 = vmatprep.subr.bf16.mxu0 0
        %2368 = vmatpush1.bf16.msra.mxu0 0
        %2369 = vmatprep.subr.bf16.mxu0 0
        %2370 = vmatpush1.bf16.msra.mxu0 0
        %2371 = vmatprep.subr.bf16.mxu0 0
        %2372 = vmatpush1.bf16.msra.mxu0 0
        %2373 = vmatprep.subr.bf16.mxu0 0
        %2374 = vmatpush1.bf16.msra.mxu0 0
        %2375 = vmatprep.subr.bf16.mxu0 0
        %2376 = vmatpush1.bf16.msra.mxu0 0
        %2377 = vmatprep.subr.bf16.mxu0 0
        %2378 = vmatpush1.bf16.msra.mxu0 0
        %2379 = vmatprep.subr.bf16.mxu0 0
        %2380 = vmatpush1.bf16.msra.mxu0 0
        %2381 = vmatprep.mubr.bf16.mxu0 0
        %2382 = vmatmul.mubr.bf16.gmra.mrb[0].mxu0 %v2296
        %v2383 = vpop.f32.mrb[0].mxu0
        %v2384 = vadd.f32 0.0, %v2383
        %v2385 = vpop.f32.mrb[0].mxu0
        %v2386 = vpop.f32.mrb[0].mxu0
        %v2387 = vadd.f32 0.0, %v2386
        %v2388 = vpop.f32.mrb[0].mxu0
        %2389 = vmatprep.mubr.bf16.mxu0 0
        %2390 = vmatmul.mubr.bf16.gmra.mrb[0].mxu0 %v2299
        %v2391 = vpop.f32.mrb[0].mxu0
        %v2392 = vadd.f32 0.0, %v2391
        %v2393 = vpop.f32.mrb[0].mxu0
        %v2394 = vpop.f32.mrb[0].mxu0
        %v2395 = vadd.f32 0.0, %v2394
        %v2396 = vpop.f32.mrb[0].mxu0
        %2397 = vmatprep.mubr.bf16.mxu0 0
        %2398 = vmatmul.mubr.bf16.gmra.mrb[0].mxu0 %v2302
        %v2399 = vpop.f32.mrb[0].mxu0
        %v2400 = vadd.f32 0.0, %v2399
        %v2401 = vpop.f32.mrb[0].mxu0
        %v2402 = vpop.f32.mrb[0].mxu0
        %v2403 = vadd.f32 0.0, %v2402
        %v2404 = vpop.f32.mrb[0].mxu0
        %2405 = vmatprep.mubr.bf16.mxu0 0
        %2406 = vmatmul.mubr.bf16.gmra.mrb[0].mxu0 %v2305
        %v2407 = vpop.f32.mrb[0].mxu0
        %v2408 = vadd.f32 0.0, %v2407
        %v2409 = vpop.f32.mrb[0].mxu0
        %v2410 = vpop.f32.mrb[0].mxu0
        %v2411 = vadd.f32 0.0, %v2410
        %v2412 = vpop.f32.mrb[0].mxu0
        %2413 = vmatprep.mubr.bf16.mxu0 0
        %2414 = vmatmul.mubr.bf16.gmra.mrb[0].mxu0 %v2308
        %v2415 = vpop.f32.mrb[0].mxu0
        %v2416 = vadd.f32 0.0, %v2415
        %v2417 = vpop.f32.mrb[0].mxu0
        %v2418 = vpop.f32.mrb[0].mxu0
        %v2419 = vadd.f32 0.0, %v2418
        %v2420 = vpop.f32.mrb[0].mxu0
        %2421 = vmatprep.mubr.bf16.mxu0 0
        %2422 = vmatmul.mubr.bf16.gmra.mrb[0].mxu0 %v2311
        %v2423 = vpop.f32.mrb[0].mxu0
        %v2424 = vadd.f32 0.0, %v2423
        %v2425 = vpop.f32.mrb[0].mxu0
        %v2426 = vpop.f32.mrb[0].mxu0
        %v2427 = vadd.f32 0.0, %v2426
        %v2428 = vpop.f32.mrb[0].mxu0
        %2429 = vmatprep.mubr.bf16.mxu0 0
        %2430 = vmatmul.mubr.bf16.gmra.mrb[0].mxu0 %v2314
        %v2431 = vpop.f32.mrb[0].mxu0
        %v2432 = vadd.f32 0.0, %v2431
        %v2433 = vpop.f32.mrb[0].mxu0
        %v2434 = vpop.f32.mrb[0].mxu0
        %v2435 = vadd.f32 0.0, %v2434
        %v2436 = vpop.f32.mrb[0].mxu0
        %2437 = vmatprep.mubr.bf16.mxu0 0
        %2438 = vmatmul.mubr.bf16.gmra.mrb[0].mxu0 %v2317
        %v2439 = vpop.f32.mrb[0].mxu0
        %v2440 = vadd.f32 0.0, %v2439
        %v2441 = vpop.f32.mrb[0].mxu0
        %v2442 = vpop.f32.mrb[0].mxu0
        %v2443 = vadd.f32 0.0, %v2442
        %v2444 = vpop.f32.mrb[0].mxu0
        %2445 = vmatprep.mubr.bf16.mxu0 0
        %2446 = vmatmul.mubr.bf16.gmra.mrb[0].mxu0 %v2320
        %v2447 = vpop.f32.mrb[0].mxu0
        %v2448 = vadd.f32 0.0, %v2447
        %v2449 = vpop.f32.mrb[0].mxu0
        %v2450 = vpop.f32.mrb[0].mxu0
        %v2451 = vadd.f32 0.0, %v2450
        %v2452 = vpop.f32.mrb[0].mxu0
        %2453 = vmatprep.mubr.bf16.mxu0 0
        %2454 = vmatmul.mubr.bf16.gmra.mrb[0].mxu0 %v2323
        %v2455 = vpop.f32.mrb[0].mxu0
        %v2456 = vadd.f32 0.0, %v2455
        %v2457 = vpop.f32.mrb[0].mxu0
        %v2458 = vpop.f32.mrb[0].mxu0
        %v2459 = vadd.f32 0.0, %v2458
        %v2460 = vpop.f32.mrb[0].mxu0
        %2461 = vmatprep.mubr.bf16.mxu0 0
        %2462 = vmatmul.mubr.bf16.gmra.mrb[0].mxu0 %v2326
        %v2463 = vpop.f32.mrb[0].mxu0
        %v2464 = vadd.f32 0.0, %v2463
        %v2465 = vpop.f32.mrb[0].mxu0
        %v2466 = vpop.f32.mrb[0].mxu0
        %v2467 = vadd.f32 0.0, %v2466
        %v2468 = vpop.f32.mrb[0].mxu0
        %2469 = vmatprep.mubr.bf16.mxu0 0
        %2470 = vmatmul.mubr.bf16.gmra.mrb[0].mxu0 %v2329
        %v2471 = vpop.f32.mrb[0].mxu0
        %v2472 = vadd.f32 0.0, %v2471
        %v2473 = vpop.f32.mrb[0].mxu0
        %v2474 = vpop.f32.mrb[0].mxu0
        %v2475 = vadd.f32 0.0, %v2474
        %v2476 = vpop.f32.mrb[0].mxu0
        %2477 = vmatprep.mubr.bf16.mxu0 0
        %2478 = vmatmul.mubr.bf16.gmra.mrb[0].mxu0 %v2332
        %v2479 = vpop.f32.mrb[0].mxu0
        %v2480 = vadd.f32 0.0, %v2479
        %v2481 = vpop.f32.mrb[0].mxu0
        %v2482 = vpop.f32.mrb[0].mxu0
        %v2483 = vadd.f32 0.0, %v2482
        %v2484 = vpop.f32.mrb[0].mxu0
        %2485 = vmatprep.mubr.bf16.mxu0 0
        %2486 = vmatmul.mubr.bf16.gmra.mrb[0].mxu0 %v2335
        %v2487 = vpop.f32.mrb[0].mxu0
        %v2488 = vadd.f32 0.0, %v2487
        %v2489 = vpop.f32.mrb[0].mxu0
        %v2490 = vpop.f32.mrb[0].mxu0
        %v2491 = vadd.f32 0.0, %v2490
        %v2492 = vpop.f32.mrb[0].mxu0
        %2493 = vmatprep.mubr.bf16.mxu0 0
        %2494 = vmatmul.mubr.bf16.gmra.mrb[0].mxu0 %v2338
        %v2495 = vpop.f32.mrb[0].mxu0
        %v2496 = vadd.f32 0.0, %v2495
        %v2497 = vpop.f32.mrb[0].mxu0
        %v2498 = vpop.f32.mrb[0].mxu0
        %v2499 = vadd.f32 0.0, %v2498
        %v2500 = vpop.f32.mrb[0].mxu0
        %2501 = vmatprep.mubr.bf16.mxu0 0
        %2502 = vmatmul.mubr.bf16.gmra.mrb[0].mxu0 %v2341
        %v2503 = vpop.f32.mrb[0].mxu0
        %v2504 = vadd.f32 0.0, %v2503
        %v2505 = vpop.f32.mrb[0].mxu0
        %v2506 = vpop.f32.mrb[0].mxu0
        %v2507 = vadd.f32 0.0, %v2506
        %v2508 = vpop.f32.mrb[0].mxu0
        %2509 = vmatprep.mubr.bf16.mxu0 0
        %2510 = vmatmul.mubr.bf16.gmra.mrb[0].mxu0 %v2344
        %v2511 = vpop.f32.mrb[0].mxu0
        %v2512 = vadd.f32 0.0, %v2511
        %v2513 = vpop.f32.mrb[0].mxu0
        %v2514 = vpop.f32.mrb[0].mxu0
        %v2515 = vadd.f32 0.0, %v2514
        %v2516 = vpop.f32.mrb[0].mxu0
        %2517 = vmatprep.mubr.bf16.mxu0 0
        %2518 = vmatmul.mubr.bf16.gmra.mrb[0].mxu0 %v2347
        %v2519 = vpop.f32.mrb[0].mxu0
        %v2520 = vadd.f32 0.0, %v2519
        %v2521 = vpop.f32.mrb[0].mxu0
        %v2522 = vpop.f32.mrb[0].mxu0
        %v2523 = vadd.f32 0.0, %v2522
        %v2524 = vpop.f32.mrb[0].mxu0
        %2525 = vdwg.mxu0
        %v2526 = vadd.f32 %v2196, %v2384
        %v2527 = vadd.f32 %v2197, %v2387
        %v2528 = vadd.f32 %v2198, %v2392
        %v2529 = vadd.f32 %v2199, %v2395
        %v2530 = vadd.f32 %v2200, %v2400
        %v2531 = vadd.f32 %v2201, %v2403
        %v2532 = vadd.f32 %v2202, %v2408
        %v2533 = vadd.f32 %v2203, %v2411
        %v2534 = vadd.f32 %v2204, %v2416
        %v2535 = vadd.f32 %v2205, %v2419
        %v2536 = vadd.f32 %v2206, %v2424
        %v2537 = vadd.f32 %v2207, %v2427
        %v2538 = vadd.f32 %v2208, %v2432
        %v2539 = vadd.f32 %v2209, %v2435
        %v2540 = vadd.f32 %v2210, %v2440
        %v2541 = vadd.f32 %v2211, %v2443
        %v2542 = vadd.f32 %v2212, %v2448
        %v2543 = vadd.f32 %v2213, %v2451
        %v2544 = vadd.f32 %v2214, %v2456
        %v2545 = vadd.f32 %v2215, %v2459
        %v2546 = vadd.f32 %v2216, %v2464
        %v2547 = vadd.f32 %v2217, %v2467
        %v2548 = vadd.f32 %v2218, %v2472
        %v2549 = vadd.f32 %v2219, %v2475
        %v2550 = vadd.f32 %v2220, %v2480
        %v2551 = vadd.f32 %v2221, %v2483
        %v2552 = vadd.f32 %v2222, %v2488
        %v2553 = vadd.f32 %v2223, %v2491
        %v2554 = vadd.f32 %v2224, %v2496
        %v2555 = vadd.f32 %v2225, %v2499
        %v2556 = vadd.f32 %v2226, %v2504
        %v2557 = vadd.f32 %v2227, %v2507
        %v2558 = vadd.f32 %v2228, %v2512
        %v2559 = vadd.f32 %v2229, %v2515
        %v2560 = vadd.f32 %v2230, %v2520
        %v2561 = vadd.f32 %v2231, %v2523
        %v2562 = vld [vmem:[#allocation2 + $0x25] sm:$0xff]
        %v2563 = vld [vmem:[#allocation2 + $0x2d] sm:$0xff]
        %v2564 = vld [vmem:[#allocation2 + $0x35] sm:$0xff]
        %v2565 = vld [vmem:[#allocation2 + $0x3d] sm:$0xff]
        %v2566 = vld [vmem:[#allocation2 + $0x45] sm:$0xff]
        %v2567 = vld [vmem:[#allocation2 + $0x4d] sm:$0xff]
        %v2568 = vld [vmem:[#allocation2 + $0x55] sm:$0xff]
        %v2569 = vld [vmem:[#allocation2 + $0x5d] sm:$0xff]
        %v2570 = vld [vmem:[#allocation2 + $0x65] sm:$0xff]
        %v2571 = vld [vmem:[#allocation2 + $0x6d] sm:$0xff]
        %v2572 = vld [vmem:[#allocation2 + $0x75] sm:$0xff]
        %v2573 = vld [vmem:[#allocation2 + $0x7d] sm:$0xff]
        %v2574 = vld [vmem:[#allocation2 + $0x85] sm:$0xff]
        %v2575 = vld [vmem:[#allocation2 + $0x8d] sm:$0xff]
        %v2576 = vld [vmem:[#allocation2 + $0x95] sm:$0xff]
        %v2577 = vld [vmem:[#allocation2 + $0x9d] sm:$0xff]
        %v2578 = vld [vmem:[#allocation2 + $0xa5] sm:$0xff]
        %v2579 = vld [vmem:[#allocation2 + $0xad] sm:$0xff]
        %v2580 = vld [vmem:[#allocation2 + $0xb5] sm:$0xff]
        %v2581 = vld [vmem:[#allocation2 + $0xbd] sm:$0xff]
        %v2582 = vld [vmem:[#allocation2 + $0xc5] sm:$0xff]
        %v2583 = vld [vmem:[#allocation2 + $0xcd] sm:$0xff]
        %v2584 = vld [vmem:[#allocation2 + $0xd5] sm:$0xff]
        %v2585 = vld [vmem:[#allocation2 + $0xdd] sm:$0xff]
        %v2586 = vld [vmem:[#allocation2 + $0xe5] sm:$0xff]
        %v2587 = vld [vmem:[#allocation2 + $0xed] sm:$0xff]
        %v2588 = vld [vmem:[#allocation2 + $0xf5] sm:$0xff]
        %v2589 = vld [vmem:[#allocation2 + $0xfd] sm:$0xff]
        %v2590 = vld [vmem:[#allocation2 + $0x105] sm:$0xff]
        %v2591 = vld [vmem:[#allocation2 + $0x10d] sm:$0xff]
        %v2592 = vld [vmem:[#allocation2 + $0x115] sm:$0xff]
        %v2593 = vld [vmem:[#allocation2 + $0x11d] sm:$0xff]
        %v2594 = vld [vmem:[#allocation2 + $0x125] sm:$0xff]
        %v2595 = vld [vmem:[#allocation2 + $0x12d] sm:$0xff]
        %v2596 = vld [vmem:[#allocation2 + $0x135] sm:$0xff]
        %v2597 = vld [vmem:[#allocation2 + $0x13d] sm:$0xff]
        %v2598 = vpack.c.bf16 %v2563, %v2562
        %v2599 = vpack.c.bf16 %v2565, %v2564
        %v2600 = vpack.c.bf16 %v2567, %v2566
        %v2601 = vpack.c.bf16 %v2569, %v2568
        %v2602 = vpack.c.bf16 %v2571, %v2570
        %v2603 = vpack.c.bf16 %v2573, %v2572
        %v2604 = vpack.c.bf16 %v2575, %v2574
        %v2605 = vpack.c.bf16 %v2577, %v2576
        %v2606 = vpack.c.bf16 %v2579, %v2578
        %v2607 = vpack.c.bf16 %v2581, %v2580
        %v2608 = vpack.c.bf16 %v2583, %v2582
        %v2609 = vpack.c.bf16 %v2585, %v2584
        %v2610 = vpack.c.bf16 %v2587, %v2586
        %v2611 = vpack.c.bf16 %v2589, %v2588
        %v2612 = vpack.c.bf16 %v2591, %v2590
        %v2613 = vpack.c.bf16 %v2593, %v2592
        %v2614 = vpack.c.bf16 %v2595, %v2594
        %v2615 = vpack.c.bf16 %v2597, %v2596
        %s2616 = scalar_lea.vmem %s1, 56
        %v2617 = vld [vmem:[%s2616] sm:$0xf]
        %v2618 = vld [vmem:[%s2616 + $0x4] sm:$0xf]
        %v2621 = vunpack.c.l.b16 %v2617
        %v2622 = vunpack.c.l.b16 %v2618
        %v2623 = vpack.c.b16 %v2622, %v2621
        %v2626 = vsel %vm282, %v2598, 0
        %v2629 = vsel %vm282, %v2599, 0
        %v2632 = vsel %vm282, %v2600, 0
        %v2635 = vsel %vm282, %v2601, 0
        %v2638 = vsel %vm282, %v2602, 0
        %v2641 = vsel %vm282, %v2603, 0
        %v2644 = vsel %vm282, %v2604, 0
        %v2647 = vsel %vm282, %v2605, 0
        %v2650 = vsel %vm282, %v2606, 0
        %v2653 = vsel %vm282, %v2607, 0
        %v2656 = vsel %vm282, %v2608, 0
        %v2659 = vsel %vm282, %v2609, 0
        %v2662 = vsel %vm282, %v2610, 0
        %v2665 = vsel %vm282, %v2611, 0
        %v2668 = vsel %vm282, %v2612, 0
        %v2671 = vsel %vm282, %v2613, 0
        %v2674 = vsel %vm282, %v2614, 0
        %v2677 = vsel %vm282, %v2615, 0
        %2679 = vmatprep.subr.bf16.mxu0 0
        %2680 = vmatpush1.bf16.msra.mxu0 %v2623
        %2681 = vmatprep.subr.bf16.mxu0 0
        %2682 = vmatpush1.bf16.msra.mxu0 0
        %2683 = vmatprep.subr.bf16.mxu0 0
        %2684 = vmatpush1.bf16.msra.mxu0 0
        %2685 = vmatprep.subr.bf16.mxu0 0
        %2686 = vmatpush1.bf16.msra.mxu0 0
        %2687 = vmatprep.subr.bf16.mxu0 0
        %2688 = vmatpush1.bf16.msra.mxu0 0
        %2689 = vmatprep.subr.bf16.mxu0 0
        %2690 = vmatpush1.bf16.msra.mxu0 0
        %2691 = vmatprep.subr.bf16.mxu0 0
        %2692 = vmatpush1.bf16.msra.mxu0 0
        %2693 = vmatprep.subr.bf16.mxu0 0
        %2694 = vmatpush1.bf16.msra.mxu0 0
        %2695 = vmatprep.subr.bf16.mxu0 0
        %2696 = vmatpush1.bf16.msra.mxu0 0
        %2697 = vmatprep.subr.bf16.mxu0 0
        %2698 = vmatpush1.bf16.msra.mxu0 0
        %2699 = vmatprep.subr.bf16.mxu0 0
        %2700 = vmatpush1.bf16.msra.mxu0 0
        %2701 = vmatprep.subr.bf16.mxu0 0
        %2702 = vmatpush1.bf16.msra.mxu0 0
        %2703 = vmatprep.subr.bf16.mxu0 0
        %2704 = vmatpush1.bf16.msra.mxu0 0
        %2705 = vmatprep.subr.bf16.mxu0 0
        %2706 = vmatpush1.bf16.msra.mxu0 0
        %2707 = vmatprep.subr.bf16.mxu0 0
        %2708 = vmatpush1.bf16.msra.mxu0 0
        %2709 = vmatprep.subr.bf16.mxu0 0
        %2710 = vmatpush1.bf16.msra.mxu0 0
        %2711 = vmatprep.mubr.bf16.mxu0 0
        %2712 = vmatmul.mubr.bf16.gmra.mrb[0].mxu0 %v2626
        %v2713 = vpop.f32.mrb[0].mxu0
        %v2714 = vadd.f32 0.0, %v2713
        %v2715 = vpop.f32.mrb[0].mxu0
        %v2716 = vpop.f32.mrb[0].mxu0
        %v2717 = vadd.f32 0.0, %v2716
        %v2718 = vpop.f32.mrb[0].mxu0
        %2719 = vmatprep.mubr.bf16.mxu0 0
        %2720 = vmatmul.mubr.bf16.gmra.mrb[0].mxu0 %v2629
        %v2721 = vpop.f32.mrb[0].mxu0
        %v2722 = vadd.f32 0.0, %v2721
        %v2723 = vpop.f32.mrb[0].mxu0
        %v2724 = vpop.f32.mrb[0].mxu0
        %v2725 = vadd.f32 0.0, %v2724
        %v2726 = vpop.f32.mrb[0].mxu0
        %2727 = vmatprep.mubr.bf16.mxu0 0
        %2728 = vmatmul.mubr.bf16.gmra.mrb[0].mxu0 %v2632
        %v2729 = vpop.f32.mrb[0].mxu0
        %v2730 = vadd.f32 0.0, %v2729
        %v2731 = vpop.f32.mrb[0].mxu0
        %v2732 = vpop.f32.mrb[0].mxu0
        %v2733 = vadd.f32 0.0, %v2732
        %v2734 = vpop.f32.mrb[0].mxu0
        %2735 = vmatprep.mubr.bf16.mxu0 0
        %2736 = vmatmul.mubr.bf16.gmra.mrb[0].mxu0 %v2635
        %v2737 = vpop.f32.mrb[0].mxu0
        %v2738 = vadd.f32 0.0, %v2737
        %v2739 = vpop.f32.mrb[0].mxu0
        %v2740 = vpop.f32.mrb[0].mxu0
        %v2741 = vadd.f32 0.0, %v2740
        %v2742 = vpop.f32.mrb[0].mxu0
        %2743 = vmatprep.mubr.bf16.mxu0 0
        %2744 = vmatmul.mubr.bf16.gmra.mrb[0].mxu0 %v2638
        %v2745 = vpop.f32.mrb[0].mxu0
        %v2746 = vadd.f32 0.0, %v2745
        %v2747 = vpop.f32.mrb[0].mxu0
        %v2748 = vpop.f32.mrb[0].mxu0
        %v2749 = vadd.f32 0.0, %v2748
        %v2750 = vpop.f32.mrb[0].mxu0
        %2751 = vmatprep.mubr.bf16.mxu0 0
        %2752 = vmatmul.mubr.bf16.gmra.mrb[0].mxu0 %v2641
        %v2753 = vpop.f32.mrb[0].mxu0
        %v2754 = vadd.f32 0.0, %v2753
        %v2755 = vpop.f32.mrb[0].mxu0
        %v2756 = vpop.f32.mrb[0].mxu0
        %v2757 = vadd.f32 0.0, %v2756
        %v2758 = vpop.f32.mrb[0].mxu0
        %2759 = vmatprep.mubr.bf16.mxu0 0
        %2760 = vmatmul.mubr.bf16.gmra.mrb[0].mxu0 %v2644
        %v2761 = vpop.f32.mrb[0].mxu0
        %v2762 = vadd.f32 0.0, %v2761
        %v2763 = vpop.f32.mrb[0].mxu0
        %v2764 = vpop.f32.mrb[0].mxu0
        %v2765 = vadd.f32 0.0, %v2764
        %v2766 = vpop.f32.mrb[0].mxu0
        %2767 = vmatprep.mubr.bf16.mxu0 0
        %2768 = vmatmul.mubr.bf16.gmra.mrb[0].mxu0 %v2647
        %v2769 = vpop.f32.mrb[0].mxu0
        %v2770 = vadd.f32 0.0, %v2769
        %v2771 = vpop.f32.mrb[0].mxu0
        %v2772 = vpop.f32.mrb[0].mxu0
        %v2773 = vadd.f32 0.0, %v2772
        %v2774 = vpop.f32.mrb[0].mxu0
        %2775 = vmatprep.mubr.bf16.mxu0 0
        %2776 = vmatmul.mubr.bf16.gmra.mrb[0].mxu0 %v2650
        %v2777 = vpop.f32.mrb[0].mxu0
        %v2778 = vadd.f32 0.0, %v2777
        %v2779 = vpop.f32.mrb[0].mxu0
        %v2780 = vpop.f32.mrb[0].mxu0
        %v2781 = vadd.f32 0.0, %v2780
        %v2782 = vpop.f32.mrb[0].mxu0
        %2783 = vmatprep.mubr.bf16.mxu0 0
        %2784 = vmatmul.mubr.bf16.gmra.mrb[0].mxu0 %v2653
        %v2785 = vpop.f32.mrb[0].mxu0
        %v2786 = vadd.f32 0.0, %v2785
        %v2787 = vpop.f32.mrb[0].mxu0
        %v2788 = vpop.f32.mrb[0].mxu0
        %v2789 = vadd.f32 0.0, %v2788
        %v2790 = vpop.f32.mrb[0].mxu0
        %2791 = vmatprep.mubr.bf16.mxu0 0
        %2792 = vmatmul.mubr.bf16.gmra.mrb[0].mxu0 %v2656
        %v2793 = vpop.f32.mrb[0].mxu0
        %v2794 = vadd.f32 0.0, %v2793
        %v2795 = vpop.f32.mrb[0].mxu0
        %v2796 = vpop.f32.mrb[0].mxu0
        %v2797 = vadd.f32 0.0, %v2796
        %v2798 = vpop.f32.mrb[0].mxu0
        %2799 = vmatprep.mubr.bf16.mxu0 0
        %2800 = vmatmul.mubr.bf16.gmra.mrb[0].mxu0 %v2659
        %v2801 = vpop.f32.mrb[0].mxu0
        %v2802 = vadd.f32 0.0, %v2801
        %v2803 = vpop.f32.mrb[0].mxu0
        %v2804 = vpop.f32.mrb[0].mxu0
        %v2805 = vadd.f32 0.0, %v2804
        %v2806 = vpop.f32.mrb[0].mxu0
        %2807 = vmatprep.mubr.bf16.mxu0 0
        %2808 = vmatmul.mubr.bf16.gmra.mrb[0].mxu0 %v2662
        %v2809 = vpop.f32.mrb[0].mxu0
        %v2810 = vadd.f32 0.0, %v2809
        %v2811 = vpop.f32.mrb[0].mxu0
        %v2812 = vpop.f32.mrb[0].mxu0
        %v2813 = vadd.f32 0.0, %v2812
        %v2814 = vpop.f32.mrb[0].mxu0
        %2815 = vmatprep.mubr.bf16.mxu0 0
        %2816 = vmatmul.mubr.bf16.gmra.mrb[0].mxu0 %v2665
        %v2817 = vpop.f32.mrb[0].mxu0
        %v2818 = vadd.f32 0.0, %v2817
        %v2819 = vpop.f32.mrb[0].mxu0
        %v2820 = vpop.f32.mrb[0].mxu0
        %v2821 = vadd.f32 0.0, %v2820
        %v2822 = vpop.f32.mrb[0].mxu0
        %2823 = vmatprep.mubr.bf16.mxu0 0
        %2824 = vmatmul.mubr.bf16.gmra.mrb[0].mxu0 %v2668
        %v2825 = vpop.f32.mrb[0].mxu0
        %v2826 = vadd.f32 0.0, %v2825
        %v2827 = vpop.f32.mrb[0].mxu0
        %v2828 = vpop.f32.mrb[0].mxu0
        %v2829 = vadd.f32 0.0, %v2828
        %v2830 = vpop.f32.mrb[0].mxu0
        %2831 = vmatprep.mubr.bf16.mxu0 0
        %2832 = vmatmul.mubr.bf16.gmra.mrb[0].mxu0 %v2671
        %v2833 = vpop.f32.mrb[0].mxu0
        %v2834 = vadd.f32 0.0, %v2833
        %v2835 = vpop.f32.mrb[0].mxu0
        %v2836 = vpop.f32.mrb[0].mxu0
        %v2837 = vadd.f32 0.0, %v2836
        %v2838 = vpop.f32.mrb[0].mxu0
        %2839 = vmatprep.mubr.bf16.mxu0 0
        %2840 = vmatmul.mubr.bf16.gmra.mrb[0].mxu0 %v2674
        %v2841 = vpop.f32.mrb[0].mxu0
        %v2842 = vadd.f32 0.0, %v2841
        %v2843 = vpop.f32.mrb[0].mxu0
        %v2844 = vpop.f32.mrb[0].mxu0
        %v2845 = vadd.f32 0.0, %v2844
        %v2846 = vpop.f32.mrb[0].mxu0
        %2847 = vmatprep.mubr.bf16.mxu0 0
        %2848 = vmatmul.mubr.bf16.gmra.mrb[0].mxu0 %v2677
        %v2849 = vpop.f32.mrb[0].mxu0
        %v2850 = vadd.f32 0.0, %v2849
        %v2851 = vpop.f32.mrb[0].mxu0
        %v2852 = vpop.f32.mrb[0].mxu0
        %v2853 = vadd.f32 0.0, %v2852
        %v2854 = vpop.f32.mrb[0].mxu0
        %2855 = vdwg.mxu0
        %v2856 = vadd.f32 %v2526, %v2714
        %v2857 = vadd.f32 %v2527, %v2717
        %v2858 = vadd.f32 %v2528, %v2722
        %v2859 = vadd.f32 %v2529, %v2725
        %v2860 = vadd.f32 %v2530, %v2730
        %v2861 = vadd.f32 %v2531, %v2733
        %v2862 = vadd.f32 %v2532, %v2738
        %v2863 = vadd.f32 %v2533, %v2741
        %v2864 = vadd.f32 %v2534, %v2746
        %v2865 = vadd.f32 %v2535, %v2749
        %v2866 = vadd.f32 %v2536, %v2754
        %v2867 = vadd.f32 %v2537, %v2757
        %v2868 = vadd.f32 %v2538, %v2762
        %v2869 = vadd.f32 %v2539, %v2765
        %v2870 = vadd.f32 %v2540, %v2770
        %v2871 = vadd.f32 %v2541, %v2773
        %v2872 = vadd.f32 %v2542, %v2778
        %v2873 = vadd.f32 %v2543, %v2781
        %v2874 = vadd.f32 %v2544, %v2786
        %v2875 = vadd.f32 %v2545, %v2789
        %v2876 = vadd.f32 %v2546, %v2794
        %v2877 = vadd.f32 %v2547, %v2797
        %v2878 = vadd.f32 %v2548, %v2802
        %v2879 = vadd.f32 %v2549, %v2805
        %v2880 = vadd.f32 %v2550, %v2810
        %v2881 = vadd.f32 %v2551, %v2813
        %v2882 = vadd.f32 %v2552, %v2818
        %v2883 = vadd.f32 %v2553, %v2821
        %v2884 = vadd.f32 %v2554, %v2826
        %v2885 = vadd.f32 %v2555, %v2829
        %v2886 = vadd.f32 %v2556, %v2834
        %v2887 = vadd.f32 %v2557, %v2837
        %v2888 = vadd.f32 %v2558, %v2842
        %v2889 = vadd.f32 %v2559, %v2845
        %v2890 = vadd.f32 %v2560, %v2850
        %v2891 = vadd.f32 %v2561, %v2853
        %v2892 = vld [vmem:[#allocation2 + $0x26] sm:$0xff]
        %v2893 = vld [vmem:[#allocation2 + $0x2e] sm:$0xff]
        %v2894 = vld [vmem:[#allocation2 + $0x36] sm:$0xff]
        %v2895 = vld [vmem:[#allocation2 + $0x3e] sm:$0xff]
        %v2896 = vld [vmem:[#allocation2 + $0x46] sm:$0xff]
        %v2897 = vld [vmem:[#allocation2 + $0x4e] sm:$0xff]
        %v2898 = vld [vmem:[#allocation2 + $0x56] sm:$0xff]
        %v2899 = vld [vmem:[#allocation2 + $0x5e] sm:$0xff]
        %v2900 = vld [vmem:[#allocation2 + $0x66] sm:$0xff]
        %v2901 = vld [vmem:[#allocation2 + $0x6e] sm:$0xff]
        %v2902 = vld [vmem:[#allocation2 + $0x76] sm:$0xff]
        %v2903 = vld [vmem:[#allocation2 + $0x7e] sm:$0xff]
        %v2904 = vld [vmem:[#allocation2 + $0x86] sm:$0xff]
        %v2905 = vld [vmem:[#allocation2 + $0x8e] sm:$0xff]
        %v2906 = vld [vmem:[#allocation2 + $0x96] sm:$0xff]
        %v2907 = vld [vmem:[#allocation2 + $0x9e] sm:$0xff]
        %v2908 = vld [vmem:[#allocation2 + $0xa6] sm:$0xff]
        %v2909 = vld [vmem:[#allocation2 + $0xae] sm:$0xff]
        %v2910 = vld [vmem:[#allocation2 + $0xb6] sm:$0xff]
        %v2911 = vld [vmem:[#allocation2 + $0xbe] sm:$0xff]
        %v2912 = vld [vmem:[#allocation2 + $0xc6] sm:$0xff]
        %v2913 = vld [vmem:[#allocation2 + $0xce] sm:$0xff]
        %v2914 = vld [vmem:[#allocation2 + $0xd6] sm:$0xff]
        %v2915 = vld [vmem:[#allocation2 + $0xde] sm:$0xff]
        %v2916 = vld [vmem:[#allocation2 + $0xe6] sm:$0xff]
        %v2917 = vld [vmem:[#allocation2 + $0xee] sm:$0xff]
        %v2918 = vld [vmem:[#allocation2 + $0xf6] sm:$0xff]
        %v2919 = vld [vmem:[#allocation2 + $0xfe] sm:$0xff]
        %v2920 = vld [vmem:[#allocation2 + $0x106] sm:$0xff]
        %v2921 = vld [vmem:[#allocation2 + $0x10e] sm:$0xff]
        %v2922 = vld [vmem:[#allocation2 + $0x116] sm:$0xff]
        %v2923 = vld [vmem:[#allocation2 + $0x11e] sm:$0xff]
        %v2924 = vld [vmem:[#allocation2 + $0x126] sm:$0xff]
        %v2925 = vld [vmem:[#allocation2 + $0x12e] sm:$0xff]
        %v2926 = vld [vmem:[#allocation2 + $0x136] sm:$0xff]
        %v2927 = vld [vmem:[#allocation2 + $0x13e] sm:$0xff]
        %v2928 = vpack.c.bf16 %v2893, %v2892
        %v2929 = vpack.c.bf16 %v2895, %v2894
        %v2930 = vpack.c.bf16 %v2897, %v2896
        %v2931 = vpack.c.bf16 %v2899, %v2898
        %v2932 = vpack.c.bf16 %v2901, %v2900
        %v2933 = vpack.c.bf16 %v2903, %v2902
        %v2934 = vpack.c.bf16 %v2905, %v2904
        %v2935 = vpack.c.bf16 %v2907, %v2906
        %v2936 = vpack.c.bf16 %v2909, %v2908
        %v2937 = vpack.c.bf16 %v2911, %v2910
        %v2938 = vpack.c.bf16 %v2913, %v2912
        %v2939 = vpack.c.bf16 %v2915, %v2914
        %v2940 = vpack.c.bf16 %v2917, %v2916
        %v2941 = vpack.c.bf16 %v2919, %v2918
        %v2942 = vpack.c.bf16 %v2921, %v2920
        %v2943 = vpack.c.bf16 %v2923, %v2922
        %v2944 = vpack.c.bf16 %v2925, %v2924
        %v2945 = vpack.c.bf16 %v2927, %v2926
        %s2946 = scalar_lea.vmem %s1, 64
        %v2947 = vld [vmem:[%s2946] sm:$0xf]
        %v2948 = vld [vmem:[%s2946 + $0x4] sm:$0xf]
        %v2951 = vunpack.c.l.b16 %v2947
        %v2952 = vunpack.c.l.b16 %v2948
        %v2953 = vpack.c.b16 %v2952, %v2951
        %v2956 = vsel %vm282, %v2928, 0
        %v2959 = vsel %vm282, %v2929, 0
        %v2962 = vsel %vm282, %v2930, 0
        %v2965 = vsel %vm282, %v2931, 0
        %v2968 = vsel %vm282, %v2932, 0
        %v2971 = vsel %vm282, %v2933, 0
        %v2974 = vsel %vm282, %v2934, 0
        %v2977 = vsel %vm282, %v2935, 0
        %v2980 = vsel %vm282, %v2936, 0
        %v2983 = vsel %vm282, %v2937, 0
        %v2986 = vsel %vm282, %v2938, 0
        %v2989 = vsel %vm282, %v2939, 0
        %v2992 = vsel %vm282, %v2940, 0
        %v2995 = vsel %vm282, %v2941, 0
        %v2998 = vsel %vm282, %v2942, 0
        %v3001 = vsel %vm282, %v2943, 0
        %v3004 = vsel %vm282, %v2944, 0
        %v3007 = vsel %vm282, %v2945, 0
        %3009 = vmatprep.subr.bf16.mxu0 0
        %3010 = vmatpush1.bf16.msra.mxu0 %v2953
        %3011 = vmatprep.subr.bf16.mxu0 0
        %3012 = vmatpush1.bf16.msra.mxu0 0
        %3013 = vmatprep.subr.bf16.mxu0 0
        %3014 = vmatpush1.bf16.msra.mxu0 0
        %3015 = vmatprep.subr.bf16.mxu0 0
        %3016 = vmatpush1.bf16.msra.mxu0 0
        %3017 = vmatprep.subr.bf16.mxu0 0
        %3018 = vmatpush1.bf16.msra.mxu0 0
        %3019 = vmatprep.subr.bf16.mxu0 0
        %3020 = vmatpush1.bf16.msra.mxu0 0
        %3021 = vmatprep.subr.bf16.mxu0 0
        %3022 = vmatpush1.bf16.msra.mxu0 0
        %3023 = vmatprep.subr.bf16.mxu0 0
        %3024 = vmatpush1.bf16.msra.mxu0 0
        %3025 = vmatprep.subr.bf16.mxu0 0
        %3026 = vmatpush1.bf16.msra.mxu0 0
        %3027 = vmatprep.subr.bf16.mxu0 0
        %3028 = vmatpush1.bf16.msra.mxu0 0
        %3029 = vmatprep.subr.bf16.mxu0 0
        %3030 = vmatpush1.bf16.msra.mxu0 0
        %3031 = vmatprep.subr.bf16.mxu0 0
        %3032 = vmatpush1.bf16.msra.mxu0 0
        %3033 = vmatprep.subr.bf16.mxu0 0
        %3034 = vmatpush1.bf16.msra.mxu0 0
        %3035 = vmatprep.subr.bf16.mxu0 0
        %3036 = vmatpush1.bf16.msra.mxu0 0
        %3037 = vmatprep.subr.bf16.mxu0 0
        %3038 = vmatpush1.bf16.msra.mxu0 0
        %3039 = vmatprep.subr.bf16.mxu0 0
        %3040 = vmatpush1.bf16.msra.mxu0 0
        %3041 = vmatprep.mubr.bf16.mxu0 0
        %3042 = vmatmul.mubr.bf16.gmra.mrb[0].mxu0 %v2956
        %v3043 = vpop.f32.mrb[0].mxu0
        %v3044 = vadd.f32 0.0, %v3043
        %v3045 = vpop.f32.mrb[0].mxu0
        %v3046 = vpop.f32.mrb[0].mxu0
        %v3047 = vadd.f32 0.0, %v3046
        %v3048 = vpop.f32.mrb[0].mxu0
        %3049 = vmatprep.mubr.bf16.mxu0 0
        %3050 = vmatmul.mubr.bf16.gmra.mrb[0].mxu0 %v2959
        %v3051 = vpop.f32.mrb[0].mxu0
        %v3052 = vadd.f32 0.0, %v3051
        %v3053 = vpop.f32.mrb[0].mxu0
        %v3054 = vpop.f32.mrb[0].mxu0
        %v3055 = vadd.f32 0.0, %v3054
        %v3056 = vpop.f32.mrb[0].mxu0
        %3057 = vmatprep.mubr.bf16.mxu0 0
        %3058 = vmatmul.mubr.bf16.gmra.mrb[0].mxu0 %v2962
        %v3059 = vpop.f32.mrb[0].mxu0
        %v3060 = vadd.f32 0.0, %v3059
        %v3061 = vpop.f32.mrb[0].mxu0
        %v3062 = vpop.f32.mrb[0].mxu0
        %v3063 = vadd.f32 0.0, %v3062
        %v3064 = vpop.f32.mrb[0].mxu0
        %3065 = vmatprep.mubr.bf16.mxu0 0
        %3066 = vmatmul.mubr.bf16.gmra.mrb[0].mxu0 %v2965
        %v3067 = vpop.f32.mrb[0].mxu0
        %v3068 = vadd.f32 0.0, %v3067
        %v3069 = vpop.f32.mrb[0].mxu0
        %v3070 = vpop.f32.mrb[0].mxu0
        %v3071 = vadd.f32 0.0, %v3070
        %v3072 = vpop.f32.mrb[0].mxu0
        %3073 = vmatprep.mubr.bf16.mxu0 0
        %3074 = vmatmul.mubr.bf16.gmra.mrb[0].mxu0 %v2968
        %v3075 = vpop.f32.mrb[0].mxu0
        %v3076 = vadd.f32 0.0, %v3075
        %v3077 = vpop.f32.mrb[0].mxu0
        %v3078 = vpop.f32.mrb[0].mxu0
        %v3079 = vadd.f32 0.0, %v3078
        %v3080 = vpop.f32.mrb[0].mxu0
        %3081 = vmatprep.mubr.bf16.mxu0 0
        %3082 = vmatmul.mubr.bf16.gmra.mrb[0].mxu0 %v2971
        %v3083 = vpop.f32.mrb[0].mxu0
        %v3084 = vadd.f32 0.0, %v3083
        %v3085 = vpop.f32.mrb[0].mxu0
        %v3086 = vpop.f32.mrb[0].mxu0
        %v3087 = vadd.f32 0.0, %v3086
        %v3088 = vpop.f32.mrb[0].mxu0
        %3089 = vmatprep.mubr.bf16.mxu0 0
        %3090 = vmatmul.mubr.bf16.gmra.mrb[0].mxu0 %v2974
        %v3091 = vpop.f32.mrb[0].mxu0
        %v3092 = vadd.f32 0.0, %v3091
        %v3093 = vpop.f32.mrb[0].mxu0
        %v3094 = vpop.f32.mrb[0].mxu0
        %v3095 = vadd.f32 0.0, %v3094
        %v3096 = vpop.f32.mrb[0].mxu0
        %3097 = vmatprep.mubr.bf16.mxu0 0
        %3098 = vmatmul.mubr.bf16.gmra.mrb[0].mxu0 %v2977
        %v3099 = vpop.f32.mrb[0].mxu0
        %v3100 = vadd.f32 0.0, %v3099
        %v3101 = vpop.f32.mrb[0].mxu0
        %v3102 = vpop.f32.mrb[0].mxu0
        %v3103 = vadd.f32 0.0, %v3102
        %v3104 = vpop.f32.mrb[0].mxu0
        %3105 = vmatprep.mubr.bf16.mxu0 0
        %3106 = vmatmul.mubr.bf16.gmra.mrb[0].mxu0 %v2980
        %v3107 = vpop.f32.mrb[0].mxu0
        %v3108 = vadd.f32 0.0, %v3107
        %v3109 = vpop.f32.mrb[0].mxu0
        %v3110 = vpop.f32.mrb[0].mxu0
        %v3111 = vadd.f32 0.0, %v3110
        %v3112 = vpop.f32.mrb[0].mxu0
        %3113 = vmatprep.mubr.bf16.mxu0 0
        %3114 = vmatmul.mubr.bf16.gmra.mrb[0].mxu0 %v2983
        %v3115 = vpop.f32.mrb[0].mxu0
        %v3116 = vadd.f32 0.0, %v3115
        %v3117 = vpop.f32.mrb[0].mxu0
        %v3118 = vpop.f32.mrb[0].mxu0
        %v3119 = vadd.f32 0.0, %v3118
        %v3120 = vpop.f32.mrb[0].mxu0
        %3121 = vmatprep.mubr.bf16.mxu0 0
        %3122 = vmatmul.mubr.bf16.gmra.mrb[0].mxu0 %v2986
        %v3123 = vpop.f32.mrb[0].mxu0
        %v3124 = vadd.f32 0.0, %v3123
        %v3125 = vpop.f32.mrb[0].mxu0
        %v3126 = vpop.f32.mrb[0].mxu0
        %v3127 = vadd.f32 0.0, %v3126
        %v3128 = vpop.f32.mrb[0].mxu0
        %3129 = vmatprep.mubr.bf16.mxu0 0
        %3130 = vmatmul.mubr.bf16.gmra.mrb[0].mxu0 %v2989
        %v3131 = vpop.f32.mrb[0].mxu0
        %v3132 = vadd.f32 0.0, %v3131
        %v3133 = vpop.f32.mrb[0].mxu0
        %v3134 = vpop.f32.mrb[0].mxu0
        %v3135 = vadd.f32 0.0, %v3134
        %v3136 = vpop.f32.mrb[0].mxu0
        %3137 = vmatprep.mubr.bf16.mxu0 0
        %3138 = vmatmul.mubr.bf16.gmra.mrb[0].mxu0 %v2992
        %v3139 = vpop.f32.mrb[0].mxu0
        %v3140 = vadd.f32 0.0, %v3139
        %v3141 = vpop.f32.mrb[0].mxu0
        %v3142 = vpop.f32.mrb[0].mxu0
        %v3143 = vadd.f32 0.0, %v3142
        %v3144 = vpop.f32.mrb[0].mxu0
        %3145 = vmatprep.mubr.bf16.mxu0 0
        %3146 = vmatmul.mubr.bf16.gmra.mrb[0].mxu0 %v2995
        %v3147 = vpop.f32.mrb[0].mxu0
        %v3148 = vadd.f32 0.0, %v3147
        %v3149 = vpop.f32.mrb[0].mxu0
        %v3150 = vpop.f32.mrb[0].mxu0
        %v3151 = vadd.f32 0.0, %v3150
        %v3152 = vpop.f32.mrb[0].mxu0
        %3153 = vmatprep.mubr.bf16.mxu0 0
        %3154 = vmatmul.mubr.bf16.gmra.mrb[0].mxu0 %v2998
        %v3155 = vpop.f32.mrb[0].mxu0
        %v3156 = vadd.f32 0.0, %v3155
        %v3157 = vpop.f32.mrb[0].mxu0
        %v3158 = vpop.f32.mrb[0].mxu0
        %v3159 = vadd.f32 0.0, %v3158
        %v3160 = vpop.f32.mrb[0].mxu0
        %3161 = vmatprep.mubr.bf16.mxu0 0
        %3162 = vmatmul.mubr.bf16.gmra.mrb[0].mxu0 %v3001
        %v3163 = vpop.f32.mrb[0].mxu0
        %v3164 = vadd.f32 0.0, %v3163
        %v3165 = vpop.f32.mrb[0].mxu0
        %v3166 = vpop.f32.mrb[0].mxu0
        %v3167 = vadd.f32 0.0, %v3166
        %v3168 = vpop.f32.mrb[0].mxu0
        %3169 = vmatprep.mubr.bf16.mxu0 0
        %3170 = vmatmul.mubr.bf16.gmra.mrb[0].mxu0 %v3004
        %v3171 = vpop.f32.mrb[0].mxu0
        %v3172 = vadd.f32 0.0, %v3171
        %v3173 = vpop.f32.mrb[0].mxu0
        %v3174 = vpop.f32.mrb[0].mxu0
        %v3175 = vadd.f32 0.0, %v3174
        %v3176 = vpop.f32.mrb[0].mxu0
        %3177 = vmatprep.mubr.bf16.mxu0 0
        %3178 = vmatmul.mubr.bf16.gmra.mrb[0].mxu0 %v3007
        %v3179 = vpop.f32.mrb[0].mxu0
        %v3180 = vadd.f32 0.0, %v3179
        %v3181 = vpop.f32.mrb[0].mxu0
        %v3182 = vpop.f32.mrb[0].mxu0
        %v3183 = vadd.f32 0.0, %v3182
        %v3184 = vpop.f32.mrb[0].mxu0
        %3185 = vdwg.mxu0
        %v3186 = vadd.f32 %v2856, %v3044
        %v3187 = vadd.f32 %v2857, %v3047
        %v3188 = vadd.f32 %v2858, %v3052
        %v3189 = vadd.f32 %v2859, %v3055
        %v3190 = vadd.f32 %v2860, %v3060
        %v3191 = vadd.f32 %v2861, %v3063
        %v3192 = vadd.f32 %v2862, %v3068
        %v3193 = vadd.f32 %v2863, %v3071
        %v3194 = vadd.f32 %v2864, %v3076
        %v3195 = vadd.f32 %v2865, %v3079
        %v3196 = vadd.f32 %v2866, %v3084
        %v3197 = vadd.f32 %v2867, %v3087
        %v3198 = vadd.f32 %v2868, %v3092
        %v3199 = vadd.f32 %v2869, %v3095
        %v3200 = vadd.f32 %v2870, %v3100
        %v3201 = vadd.f32 %v2871, %v3103
        %v3202 = vadd.f32 %v2872, %v3108
        %v3203 = vadd.f32 %v2873, %v3111
        %v3204 = vadd.f32 %v2874, %v3116
        %v3205 = vadd.f32 %v2875, %v3119
        %v3206 = vadd.f32 %v2876, %v3124
        %v3207 = vadd.f32 %v2877, %v3127
        %v3208 = vadd.f32 %v2878, %v3132
        %v3209 = vadd.f32 %v2879, %v3135
        %v3210 = vadd.f32 %v2880, %v3140
        %v3211 = vadd.f32 %v2881, %v3143
        %v3212 = vadd.f32 %v2882, %v3148
        %v3213 = vadd.f32 %v2883, %v3151
        %v3214 = vadd.f32 %v2884, %v3156
        %v3215 = vadd.f32 %v2885, %v3159
        %v3216 = vadd.f32 %v2886, %v3164
        %v3217 = vadd.f32 %v2887, %v3167
        %v3218 = vadd.f32 %v2888, %v3172
        %v3219 = vadd.f32 %v2889, %v3175
        %v3220 = vadd.f32 %v2890, %v3180
        %v3221 = vadd.f32 %v2891, %v3183
        %v3222 = vld [vmem:[%s2] sm:$0x1]
        %v3224 = vlaneseq
        %v3225 = vshrl.u32 %v3224, 7
        %v3226 = vsub.s32 0, %v3225
        %v3227 = vrot.slane %v3222, %v3226
        %v3229 = vadd.f32 %v3186, %v3227
        %v3230 = vadd.f32 %v3187, %v3227
        %v3231 = vadd.f32 %v3188, %v3227
        %v3232 = vadd.f32 %v3189, %v3227
        %v3233 = vadd.f32 %v3190, %v3227
        %v3234 = vadd.f32 %v3191, %v3227
        %v3235 = vadd.f32 %v3192, %v3227
        %v3236 = vadd.f32 %v3193, %v3227
        %v3237 = vadd.f32 %v3194, %v3227
        %v3238 = vadd.f32 %v3195, %v3227
        %v3239 = vadd.f32 %v3196, %v3227
        %v3240 = vadd.f32 %v3197, %v3227
        %v3241 = vadd.f32 %v3198, %v3227
        %v3242 = vadd.f32 %v3199, %v3227
        %v3243 = vadd.f32 %v3200, %v3227
        %v3244 = vadd.f32 %v3201, %v3227
        %v3245 = vadd.f32 %v3202, %v3227
        %v3246 = vadd.f32 %v3203, %v3227
        %v3247 = vadd.f32 %v3204, %v3227
        %v3248 = vadd.f32 %v3205, %v3227
        %v3249 = vadd.f32 %v3206, %v3227
        %v3250 = vadd.f32 %v3207, %v3227
        %v3251 = vadd.f32 %v3208, %v3227
        %v3252 = vadd.f32 %v3209, %v3227
        %v3253 = vadd.f32 %v3210, %v3227
        %v3254 = vadd.f32 %v3211, %v3227
        %v3255 = vadd.f32 %v3212, %v3227
        %v3256 = vadd.f32 %v3213, %v3227
        %v3257 = vadd.f32 %v3214, %v3227
        %v3258 = vadd.f32 %v3215, %v3227
        %v3259 = vadd.f32 %v3216, %v3227
        %v3260 = vadd.f32 %v3217, %v3227
        %v3261 = vadd.f32 %v3218, %v3227
        %v3262 = vadd.f32 %v3219, %v3227
        %v3263 = vadd.f32 %v3220, %v3227
        %v3264 = vadd.f32 %v3221, %v3227
        %s3265 = sld [smem:[#allocation3]]
        %vm3266 = vcmp.gt.f32.partialorder %v3229, 0.0
        %vm3267 = vcmp.gt.f32.partialorder %v3230, 0.0
        %vm3268 = vcmp.gt.f32.partialorder %v3231, 0.0
        %vm3269 = vcmp.gt.f32.partialorder %v3232, 0.0
        %vm3270 = vcmp.gt.f32.partialorder %v3233, 0.0
        %vm3271 = vcmp.gt.f32.partialorder %v3234, 0.0
        %vm3272 = vcmp.gt.f32.partialorder %v3235, 0.0
        %vm3273 = vcmp.gt.f32.partialorder %v3236, 0.0
        %vm3274 = vcmp.gt.f32.partialorder %v3237, 0.0
        %vm3275 = vcmp.gt.f32.partialorder %v3238, 0.0
        %vm3276 = vcmp.gt.f32.partialorder %v3239, 0.0
        %vm3277 = vcmp.gt.f32.partialorder %v3240, 0.0
        %vm3278 = vcmp.gt.f32.partialorder %v3241, 0.0
        %vm3279 = vcmp.gt.f32.partialorder %v3242, 0.0
        %vm3280 = vcmp.gt.f32.partialorder %v3243, 0.0
        %vm3281 = vcmp.gt.f32.partialorder %v3244, 0.0
        %vm3282 = vcmp.gt.f32.partialorder %v3245, 0.0
        %vm3283 = vcmp.gt.f32.partialorder %v3246, 0.0
        %vm3284 = vcmp.gt.f32.partialorder %v3247, 0.0
        %vm3285 = vcmp.gt.f32.partialorder %v3248, 0.0
        %vm3286 = vcmp.gt.f32.partialorder %v3249, 0.0
        %vm3287 = vcmp.gt.f32.partialorder %v3250, 0.0
        %vm3288 = vcmp.gt.f32.partialorder %v3251, 0.0
        %vm3289 = vcmp.gt.f32.partialorder %v3252, 0.0
        %vm3290 = vcmp.gt.f32.partialorder %v3253, 0.0
        %vm3291 = vcmp.gt.f32.partialorder %v3254, 0.0
        %vm3292 = vcmp.gt.f32.partialorder %v3255, 0.0
        %vm3293 = vcmp.gt.f32.partialorder %v3256, 0.0
        %vm3294 = vcmp.gt.f32.partialorder %v3257, 0.0
        %vm3295 = vcmp.gt.f32.partialorder %v3258, 0.0
        %vm3296 = vcmp.gt.f32.partialorder %v3259, 0.0
        %vm3297 = vcmp.gt.f32.partialorder %v3260, 0.0
        %vm3298 = vcmp.gt.f32.partialorder %v3261, 0.0
        %vm3299 = vcmp.gt.f32.partialorder %v3262, 0.0
        %vm3300 = vcmp.gt.f32.partialorder %v3263, 0.0
        %vm3301 = vcmp.gt.f32.partialorder %v3264, 0.0
        %v3302 = vstv %s3265
        %v3303 = vmul.f32 %v3302, %v3229
        %v3304 = vmul.f32 %v3302, %v3230
        %v3305 = vmul.f32 %v3302, %v3231
        %v3306 = vmul.f32 %v3302, %v3232
        %v3307 = vmul.f32 %v3302, %v3233
        %v3308 = vmul.f32 %v3302, %v3234
        %v3309 = vmul.f32 %v3302, %v3235
        %v3310 = vmul.f32 %v3302, %v3236
        %v3311 = vmul.f32 %v3302, %v3237
        %v3312 = vmul.f32 %v3302, %v3238
        %v3313 = vmul.f32 %v3302, %v3239
        %v3314 = vmul.f32 %v3302, %v3240
        %v3315 = vmul.f32 %v3302, %v3241
        %v3316 = vmul.f32 %v3302, %v3242
        %v3317 = vmul.f32 %v3302, %v3243
        %v3318 = vmul.f32 %v3302, %v3244
        %v3319 = vmul.f32 %v3302, %v3245
        %v3320 = vmul.f32 %v3302, %v3246
        %v3321 = vmul.f32 %v3302, %v3247
        %v3322 = vmul.f32 %v3302, %v3248
        %v3323 = vmul.f32 %v3302, %v3249
        %v3324 = vmul.f32 %v3302, %v3250
        %v3325 = vmul.f32 %v3302, %v3251
        %v3326 = vmul.f32 %v3302, %v3252
        %v3327 = vmul.f32 %v3302, %v3253
        %v3328 = vmul.f32 %v3302, %v3254
        %v3329 = vmul.f32 %v3302, %v3255
        %v3330 = vmul.f32 %v3302, %v3256
        %v3331 = vmul.f32 %v3302, %v3257
        %v3332 = vmul.f32 %v3302, %v3258
        %v3333 = vmul.f32 %v3302, %v3259
        %v3334 = vmul.f32 %v3302, %v3260
        %v3335 = vmul.f32 %v3302, %v3261
        %v3336 = vmul.f32 %v3302, %v3262
        %v3337 = vmul.f32 %v3302, %v3263
        %v3338 = vmul.f32 %v3302, %v3264
        %v3339 = vsel %vm3266, %v3229, %v3303
        %v3340 = vsel %vm3267, %v3230, %v3304
        %v3341 = vsel %vm3268, %v3231, %v3305
        %v3342 = vsel %vm3269, %v3232, %v3306
        %v3343 = vsel %vm3270, %v3233, %v3307
        %v3344 = vsel %vm3271, %v3234, %v3308
        %v3345 = vsel %vm3272, %v3235, %v3309
        %v3346 = vsel %vm3273, %v3236, %v3310
        %v3347 = vsel %vm3274, %v3237, %v3311
        %v3348 = vsel %vm3275, %v3238, %v3312
        %v3349 = vsel %vm3276, %v3239, %v3313
        %v3350 = vsel %vm3277, %v3240, %v3314
        %v3351 = vsel %vm3278, %v3241, %v3315
        %v3352 = vsel %vm3279, %v3242, %v3316
        %v3353 = vsel %vm3280, %v3243, %v3317
        %v3354 = vsel %vm3281, %v3244, %v3318
        %v3355 = vsel %vm3282, %v3245, %v3319
        %v3356 = vsel %vm3283, %v3246, %v3320
        %v3357 = vsel %vm3284, %v3247, %v3321
        %v3358 = vsel %vm3285, %v3248, %v3322
        %v3359 = vsel %vm3286, %v3249, %v3323
        %v3360 = vsel %vm3287, %v3250, %v3324
        %v3361 = vsel %vm3288, %v3251, %v3325
        %v3362 = vsel %vm3289, %v3252, %v3326
        %v3363 = vsel %vm3290, %v3253, %v3327
        %v3364 = vsel %vm3291, %v3254, %v3328
        %v3365 = vsel %vm3292, %v3255, %v3329
        %v3366 = vsel %vm3293, %v3256, %v3330
        %v3367 = vsel %vm3294, %v3257, %v3331
        %v3368 = vsel %vm3295, %v3258, %v3332
        %v3369 = vsel %vm3296, %v3259, %v3333
        %v3370 = vsel %vm3297, %v3260, %v3334
        %v3371 = vsel %vm3298, %v3261, %v3335
        %v3372 = vsel %vm3299, %v3262, %v3336
        %v3373 = vsel %vm3300, %v3263, %v3337
        %v3374 = vsel %vm3301, %v3264, %v3338
        %3375 = vst [vmem:[%s191] sm:$0xff] %v3339
        %3376 = vst [vmem:[%s191 + $0x8] sm:$0xff] %v3340
        %3377 = vst [vmem:[%s191 + $0x10] sm:$0xff] %v3341
        %3378 = vst [vmem:[%s191 + $0x18] sm:$0xff] %v3342
        %3379 = vst [vmem:[%s191 + $0x20] sm:$0xff] %v3343
        %3380 = vst [vmem:[%s191 + $0x28] sm:$0xff] %v3344
        %3381 = vst [vmem:[%s191 + $0x30] sm:$0xff] %v3345
        %3382 = vst [vmem:[%s191 + $0x38] sm:$0xff] %v3346
        %3383 = vst [vmem:[%s191 + $0x40] sm:$0xff] %v3347
        %3384 = vst [vmem:[%s191 + $0x48] sm:$0xff] %v3348
        %3385 = vst [vmem:[%s191 + $0x50] sm:$0xff] %v3349
        %3386 = vst [vmem:[%s191 + $0x58] sm:$0xff] %v3350
        %3387 = vst [vmem:[%s191 + $0x60] sm:$0xff] %v3351
        %3388 = vst [vmem:[%s191 + $0x68] sm:$0xff] %v3352
        %3389 = vst [vmem:[%s191 + $0x70] sm:$0xff] %v3353
        %3390 = vst [vmem:[%s191 + $0x78] sm:$0xff] %v3354
        %3391 = vst [vmem:[%s191 + $0x80] sm:$0xff] %v3355
        %3392 = vst [vmem:[%s191 + $0x88] sm:$0xff] %v3356
        %3393 = vst [vmem:[%s191 + $0x90] sm:$0xff] %v3357
        %3394 = vst [vmem:[%s191 + $0x98] sm:$0xff] %v3358
        %3395 = vst [vmem:[%s191 + $0xa0] sm:$0xff] %v3359
        %3396 = vst [vmem:[%s191 + $0xa8] sm:$0xff] %v3360
        %3397 = vst [vmem:[%s191 + $0xb0] sm:$0xff] %v3361
        %3398 = vst [vmem:[%s191 + $0xb8] sm:$0xff] %v3362
        %3399 = vst [vmem:[%s191 + $0xc0] sm:$0xff] %v3363
        %3400 = vst [vmem:[%s191 + $0xc8] sm:$0xff] %v3364
        %3401 = vst [vmem:[%s191 + $0xd0] sm:$0xff] %v3365
        %3402 = vst [vmem:[%s191 + $0xd8] sm:$0xff] %v3366
        %3403 = vst [vmem:[%s191 + $0xe0] sm:$0xff] %v3367
        %3404 = vst [vmem:[%s191 + $0xe8] sm:$0xff] %v3368
        %3405 = vst [vmem:[%s191 + $0xf0] sm:$0xff] %v3369
        %3406 = vst [vmem:[%s191 + $0xf8] sm:$0xff] %v3370
        %3407 = vst [vmem:[%s191 + $0x100] sm:$0xff] %v3371
        %3408 = vst [vmem:[%s191 + $0x108] sm:$0xff] %v3372
        %3409 = vst [vmem:[%s191 + $0x110] sm:$0xff] %v3373
        %3410 = vst [vmem:[%s191 + $0x118] sm:$0xff] %v3374
        %s3411 = sand.u32 %s116, 1
        %s3412 = scalar_lea.sflag [#allocation5], %s3411
        %s3413 = sand.u32 %s116, 1
        %s3414 = smul.addr %s3413, 288
        %s3415 = scalar_lea.vmem [#allocation4], %s3414
        // Predicated region
        $region37: #{tpu_custom_call.1} parent=35 // pred_check
          %p3416 = pneg %p126
        $region38: #{tpu_custom_call.1} parent=35 // pred_check_branch
          %3418 = sbr.rel (%p3416) target = $region40
        $region39: #{tpu_custom_call.1} parent=35 // pred_region
          %s3420 = ssub.s32 4608, 4608
          %3421 = vsyncadd %s3412, %s3420
          %s3422 = smul.addr %s19, 36
          %s3423 = smul.addr %s3422, 128
          %s3424 = scalar_lea.hbm %s4, %s3423
          %s3425 = sshll.u32 %s3415, 4
          %s3426 = int_to_ptr.vmem [resolvable:$true] %s3425
          %3431 = dma.vmem_to_hbm [thread:$0]  %s3426, 4608, %s3424, %s3412, 128, 128, 8
        $region40: #{tpu_custom_call.1} parent=35 // pred_fallthru
          _
      $region36: #{tpu_custom_call.1} parent=5 // pred_fallthru
        _
      %p3432 = scmp.le.s32.totalorder 2, %s14
      // Predicated region
      $region41: #{tpu_custom_call.1} parent=5 // pred_check
        %p3433 = pneg %p3432
      $region42: #{tpu_custom_call.1} parent=5 // pred_check_branch
        %3435 = sbr.rel (%p3433) target = $region44
      $region43: #{tpu_custom_call.1} parent=5 // pred_region
        %s3436 = ssub.s32 %s14, 2
        // Predicated region
        $region45: #{tpu_custom_call.1} parent=43 // pred_check
          %p3437 = pneg %p132
        $region46: #{tpu_custom_call.1} parent=43 // pred_check_branch
          %3439 = sbr.rel (%p3437) target = $region48
        $region47: #{tpu_custom_call.1} parent=43 // pred_region
          %s3440 = sand.u32 %s117, 1
          %s3441 = scalar_lea.sflag [#allocation5], %s3440
          %s3442 = sand.u32 %s117, 1
          %s3443 = smul.addr %s3442, 288
          %s3444 = scalar_lea.vmem [#allocation4], %s3443
          %3445 = dma.done %s3441, 4608
        $region48: #{tpu_custom_call.1} parent=43 // pred_fallthru
          _
      $region44: #{tpu_custom_call.1} parent=5 // pred_fallthru
        _
    $region6: #{tpu_custom_call.1} parent=1 // loop_footer
      %s18 = sadd.s32 1, %s14
    $region7: #{tpu_custom_call.1} parent=1 // loop_footer_branch
      %13 = sbr.rel target = $region3
    $region8: #{tpu_custom_call.1} parent=1 // loop_exit
      _
    %3446 = vsyncpa [#allocation5], 1
    %s3447 = scalar_lea.sflag [#allocation5], 1
    %3448 = vsyncpa %s3447, 1

</llo_original>
